<compile_context>
chip_gen: v7x
topology: tpu7x:2x2x1
jax: 0.10.0
libtpu: 0.0.40
codegen_flags: <defaults>
</compile_context>

<pallas_src>
import functools

import jax
import jax.numpy as jnp
from jax.experimental import pallas as pl
from jax.experimental.pallas import tpu as pltpu

INPUT_DIM = 768
HIDDEN_DIM = 512
LATENT_DIM = 128


def autoencoder_kernel(x_ref, w1, b1, w2, b2, w3, b3, w4, b4, o_ref):
    # x tile arrives in f32 (no extra wrapper-side HBM cast pass); the bf16
    # cast is cheap VPU work hidden under the MXU. Weights are bf16, biases
    # f32; all matmuls accumulate in f32, bias-add/ReLU run in f32 on the VPU.
    x = x_ref[...].astype(jnp.bfloat16)

    # encoder
    h = jnp.dot(x, w1[...], preferred_element_type=jnp.float32) + b1[...]
    h = jnp.maximum(h, 0.0).astype(jnp.bfloat16)
    z = jnp.dot(h, w2[...], preferred_element_type=jnp.float32) + b2[...]
    z = z.astype(jnp.bfloat16)

    # decoder
    d = jnp.dot(z, w3[...], preferred_element_type=jnp.float32) + b3[...]
    d = jnp.maximum(d, 0.0).astype(jnp.bfloat16)
    y = jnp.dot(d, w4[...], preferred_element_type=jnp.float32) + b4[...]

    o_ref[...] = y.astype(o_ref.dtype)


def _choose_block_b(B, *, max_block=1024, min_steps=4):
    """Pick a batch tile: multiple of 8, <= max_block, preferring an exact
    divisor of B (so the jnp.pad path is skipped) and giving at least
    `min_steps` grid steps (>= 2 pipelined steps per TensorCore on v7x)."""
    cap = B // min_steps if B >= 8 * min_steps else B
    cap = min(max_block, cap)
    cap = max(8, (cap // 8) * 8)
    for blk in range(cap, 7, -8):
        if B % blk == 0:
            return blk
    return cap  # ragged fallback: pad the last tile


@functools.partial(jax.jit, static_argnames=("block_b", "out_dtype"))
def _forward_impl(x, params, *, block_b, out_dtype):
    B, D = x.shape
    assert D == INPUT_DIM

    # Pad only in the ragged fallback case (block chooser prefers divisors).
    pad = (-B) % block_b
    if pad:
        x = jnp.pad(x, ((0, pad), (0, 0)))
    Bp = B + pad
    grid = (Bp // block_b,)

    w1, b1 = params["w1"], params["b1"]
    w2, b2 = params["w2"], params["b2"]
    w3, b3 = params["w3"], params["b3"]
    w4, b4 = params["w4"], params["b4"]

    # Full-extent (untiled) blocks for all parameters; tile only the batch dim.
    def full_spec(arr):
        nd = arr.ndim
        return pl.BlockSpec(arr.shape, lambda i, _nd=nd: (0,) * _nd)

    # Advisory cost estimate for the XLA scheduler (actual kernel traffic).
    flops = 2 * Bp * (INPUT_DIM * HIDDEN_DIM + HIDDEN_DIM * LATENT_DIM
                      + LATENT_DIM * HIDDEN_DIM + HIDDEN_DIM * INPUT_DIM)
    param_bytes = sum(int(a.size) * a.dtype.itemsize
                      for a in (w1, b1, w2, b2, w3, b3, w4, b4))
    bytes_accessed = (Bp * INPUT_DIM * x.dtype.itemsize
                      + Bp * INPUT_DIM * jnp.dtype(out_dtype).itemsize
                      + param_bytes)

    out = pl.pallas_call(
        autoencoder_kernel,
        out_shape=jax.ShapeDtypeStruct((Bp, INPUT_DIM), out_dtype),
        grid_spec=pltpu.PrefetchScalarGridSpec(
            num_scalar_prefetch=0,
            grid=grid,
            in_specs=[
                pl.BlockSpec((block_b, INPUT_DIM), lambda i: (i, 0)),  # x tile
                full_spec(w1), full_spec(b1),
                full_spec(w2), full_spec(b2),
                full_spec(w3), full_spec(b3),
                full_spec(w4), full_spec(b4),
            ],
            out_specs=pl.BlockSpec((block_b, INPUT_DIM), lambda i: (i, 0)),
        ),
        compiler_params=pltpu.CompilerParams(
            dimension_semantics=("parallel",),
            vmem_limit_bytes=32 * 1024 * 1024,
        ),
        cost_estimate=pl.CostEstimate(
            flops=flops, transcendentals=0, bytes_accessed=bytes_accessed),
    )(x, w1, b1, w2, b2, w3, b3, w4, b4)

    return out[:B]


def autoencoder_forward(x, params, block_b=None, out_dtype=None):
    """x: [B, INPUT_DIM] f32. params: output of `prepare_params` (bf16 weights
    stored [in, out], f32 biases [1, out]). Semantics match PyTorch nn.Linear
    (x @ W + b per layer)."""
    B, D = x.shape
    assert D == INPUT_DIM
    if block_b is None:
        block_b = _choose_block_b(B)
    if out_dtype is None:
        out_dtype = x.dtype  # use jnp.bfloat16 here for HBM-bound v6e
    return _forward_impl(x, params, block_b=int(block_b),
                         out_dtype=jnp.dtype(out_dtype))


def init_params(key):
    """PyTorch nn.Linear default init (U[-1/sqrt(fan_in), 1/sqrt(fan_in)]).
    Weights stored as [in, out]."""
    def linear(key, fan_in, fan_out):
        kw, kb = jax.random.split(key)
        bound = 1.0 / jnp.sqrt(fan_in)
        w = jax.random.uniform(kw, (fan_in, fan_out), jnp.float32, -bound, bound)
        b = jax.random.uniform(kb, (1, fan_out), jnp.float32, -bound, bound)
        return w, b

    k1, k2, k3, k4 = jax.random.split(key, 4)
    w1, b1 = linear(k1, INPUT_DIM, HIDDEN_DIM)
    w2, b2 = linear(k2, HIDDEN_DIM, LATENT_DIM)
    w3, b3 = linear(k3, LATENT_DIM, HIDDEN_DIM)
    w4, b4 = linear(k4, HIDDEN_DIM, INPUT_DIM)
    return dict(w1=w1, b1=b1, w2=w2, b2=b2, w3=w3, b3=b3, w4=w4, b4=b4)


def prepare_params(params_f32):
    """One-time device-side conversion: bf16 weights (MXU-native, half the
    parameter DMA), f32 biases. Do this once, not per forward call."""
    prepared = {}
    for name, arr in params_f32.items():
        if name.startswith("w"):
            prepared[name] = arr.astype(jnp.bfloat16)
        else:
            prepared[name] = arr.astype(jnp.float32)
    return jax.tree_util.tree_map(jax.block_until_ready, prepared)


def reference_forward_f32(x, p):
    """Pure f32 reference (matches the PyTorch module's math)."""
    h = jnp.maximum(x @ p["w1"] + p["b1"], 0.0)
    z = h @ p["w2"] + p["b2"]
    d = jnp.maximum(z @ p["w3"] + p["b3"], 0.0)
    return d @ p["w4"] + p["b4"]


def reference_forward_bf16(x, p):
    """Reference mirroring the kernel's mixed-precision numerics."""
    def mm(a, w):
        return jnp.dot(a.astype(jnp.bfloat16), w.astype(jnp.bfloat16),
                       preferred_element_type=jnp.float32)
    h = jnp.maximum(mm(x, p["w1"]) + p["b1"], 0.0)
    z = mm(h, p["w2"]) + p["b2"]
    d = jnp.maximum(mm(z, p["w3"]) + p["b3"], 0.0)
    return mm(d, p["w4"]) + p["b4"]


if __name__ == "__main__":
    key = jax.random.PRNGKey(0)
    kx, kp = jax.random.split(key)

    # Small demo batch; block chooser picks block_b=32 -> grid of 4 steps
    # (>= 2 pipelined steps per TensorCore on v7x), no padding.
    B = 128
    x = jax.random.normal(kx, (B, INPUT_DIM), jnp.float32)
    params_f32 = init_params(kp)
    params = prepare_params(params_f32)   # one-time bf16 weight cast

    out = autoencoder_forward(x, params)
    out = jax.block_until_ready(out)
    assert out.shape == (B, INPUT_DIM)
    assert out.dtype == x.dtype

    # Tight check vs a reference with the same bf16-in / f32-accumulate numerics.
    ref_mixed = reference_forward_bf16(x, params_f32)
    assert jnp.allclose(out, ref_mixed, atol=1e-2, rtol=1e-2), \
        "mismatch vs mixed-precision reference"

    # Loose check vs the pure-f32 (PyTorch-equivalent) reference.
    ref_f32 = reference_forward_f32(x, params_f32)
    assert jnp.allclose(out, ref_f32, atol=5e-2, rtol=5e-2), \
        "mismatch vs f32 reference"

    print("KERNEL_OK")
</pallas_src>

<mosaic_0001>
module attributes {stable_mosaic.version = 11 : i64} {
  func.func @autoencoder_kernel(%arg0: i32, %arg1: memref<32x768xf32, #tpu.memory_space<vmem>>, %arg2: memref<768x512xbf16, #tpu.memory_space<vmem>>, %arg3: memref<1x512xf32, #tpu.memory_space<vmem>>, %arg4: memref<512x128xbf16, #tpu.memory_space<vmem>>, %arg5: memref<1x128xf32, #tpu.memory_space<vmem>>, %arg6: memref<128x512xbf16, #tpu.memory_space<vmem>>, %arg7: memref<1x512xf32, #tpu.memory_space<vmem>>, %arg8: memref<512x768xbf16, #tpu.memory_space<vmem>>, %arg9: memref<1x768xf32, #tpu.memory_space<vmem>>, %arg10: memref<32x768xf32, #tpu.memory_space<vmem>>) attributes {dimension_semantics = [#tpu.dimension_semantics<parallel>], iteration_bounds = array<i64: 4>, scalar_prefetch = 0 : i64, scratch_operands = 0 : i64, tpu.core_type = #tpu.core_type<tc>, window_params = [{transform_indices = @transform_0, window_bounds = array<i64: 32, 768>}, {pipeline_mode = #tpu.pipeline_mode<synchronous>, transform_indices = @transform_1, window_bounds = array<i64: 768, 512>}, {pipeline_mode = #tpu.pipeline_mode<synchronous>, transform_indices = @transform_2, window_bounds = array<i64: 1, 512>}, {pipeline_mode = #tpu.pipeline_mode<synchronous>, transform_indices = @transform_3, window_bounds = array<i64: 512, 128>}, {pipeline_mode = #tpu.pipeline_mode<synchronous>, transform_indices = @transform_4, window_bounds = array<i64: 1, 128>}, {pipeline_mode = #tpu.pipeline_mode<synchronous>, transform_indices = @transform_5, window_bounds = array<i64: 128, 512>}, {pipeline_mode = #tpu.pipeline_mode<synchronous>, transform_indices = @transform_6, window_bounds = array<i64: 1, 512>}, {pipeline_mode = #tpu.pipeline_mode<synchronous>, transform_indices = @transform_7, window_bounds = array<i64: 512, 768>}, {pipeline_mode = #tpu.pipeline_mode<synchronous>, transform_indices = @transform_8, window_bounds = array<i64: 1, 768>}, {transform_indices = @transform_9, window_bounds = array<i64: 32, 768>}]} {
    %c0 = arith.constant 0 : index
    %c0_0 = arith.constant 0 : index
    %0 = vector.load %arg1[%c0, %c0_0] : memref<32x768xf32, #tpu.memory_space<vmem>>, vector<32x768xf32>
    %1 = arith.truncf %0 : vector<32x768xf32> to vector<32x768xbf16>
    %c0_1 = arith.constant 0 : index
    %c0_2 = arith.constant 0 : index
    %2 = vector.load %arg2[%c0_1, %c0_2] : memref<768x512xbf16, #tpu.memory_space<vmem>>, vector<768x512xbf16>
    %cst = arith.constant dense<0.000000e+00> : vector<32x512xf32>
    %3 = tpu.matmul %1, %2, %cst {dimension_numbers = #tpu.dot_dimension_numbers<[1], [0], [0], [1], [0, 0, 1, 1], [], []>} : vector<32x768xbf16>, vector<768x512xbf16>, vector<32x512xf32> -> vector<32x512xf32>
    %c0_3 = arith.constant 0 : index
    %c0_4 = arith.constant 0 : index
    %4 = vector.load %arg3[%c0_3, %c0_4] : memref<1x512xf32, #tpu.memory_space<vmem>>, vector<1x512xf32>
    %5 = vector.broadcast %4 : vector<1x512xf32> to vector<32x512xf32>
    %6 = arith.addf %3, %5 : vector<32x512xf32>
    %cst_5 = arith.constant 0.000000e+00 : f32
    %7 = vector.broadcast %cst_5 : f32 to vector<32x512xf32>
    %8 = arith.maximumf %6, %7 : vector<32x512xf32>
    %9 = arith.truncf %8 : vector<32x512xf32> to vector<32x512xbf16>
    %c0_6 = arith.constant 0 : index
    %c0_7 = arith.constant 0 : index
    %10 = vector.load %arg4[%c0_6, %c0_7] : memref<512x128xbf16, #tpu.memory_space<vmem>>, vector<512x128xbf16>
    %cst_8 = arith.constant dense<0.000000e+00> : vector<32x128xf32>
    %11 = tpu.matmul %9, %10, %cst_8 {dimension_numbers = #tpu.dot_dimension_numbers<[1], [0], [0], [1], [0, 0, 1, 1], [], []>} : vector<32x512xbf16>, vector<512x128xbf16>, vector<32x128xf32> -> vector<32x128xf32>
    %c0_9 = arith.constant 0 : index
    %c0_10 = arith.constant 0 : index
    %12 = vector.load %arg5[%c0_9, %c0_10] : memref<1x128xf32, #tpu.memory_space<vmem>>, vector<1x128xf32>
    %13 = vector.broadcast %12 : vector<1x128xf32> to vector<32x128xf32>
    %14 = arith.addf %11, %13 : vector<32x128xf32>
    %15 = arith.truncf %14 : vector<32x128xf32> to vector<32x128xbf16>
    %c0_11 = arith.constant 0 : index
    %c0_12 = arith.constant 0 : index
    %16 = vector.load %arg6[%c0_11, %c0_12] : memref<128x512xbf16, #tpu.memory_space<vmem>>, vector<128x512xbf16>
    %cst_13 = arith.constant dense<0.000000e+00> : vector<32x512xf32>
    %17 = tpu.matmul %15, %16, %cst_13 {dimension_numbers = #tpu.dot_dimension_numbers<[1], [0], [0], [1], [0, 0, 1, 1], [], []>} : vector<32x128xbf16>, vector<128x512xbf16>, vector<32x512xf32> -> vector<32x512xf32>
    %c0_14 = arith.constant 0 : index
    %c0_15 = arith.constant 0 : index
    %18 = vector.load %arg7[%c0_14, %c0_15] : memref<1x512xf32, #tpu.memory_space<vmem>>, vector<1x512xf32>
    %19 = vector.broadcast %18 : vector<1x512xf32> to vector<32x512xf32>
    %20 = arith.addf %17, %19 : vector<32x512xf32>
    %cst_16 = arith.constant 0.000000e+00 : f32
    %21 = vector.broadcast %cst_16 : f32 to vector<32x512xf32>
    %22 = arith.maximumf %20, %21 : vector<32x512xf32>
    %23 = arith.truncf %22 : vector<32x512xf32> to vector<32x512xbf16>
    %c0_17 = arith.constant 0 : index
    %c0_18 = arith.constant 0 : index
    %24 = vector.load %arg8[%c0_17, %c0_18] : memref<512x768xbf16, #tpu.memory_space<vmem>>, vector<512x768xbf16>
    %cst_19 = arith.constant dense<0.000000e+00> : vector<32x768xf32>
    %25 = tpu.matmul %23, %24, %cst_19 {dimension_numbers = #tpu.dot_dimension_numbers<[1], [0], [0], [1], [0, 0, 1, 1], [], []>} : vector<32x512xbf16>, vector<512x768xbf16>, vector<32x768xf32> -> vector<32x768xf32>
    %c0_20 = arith.constant 0 : index
    %c0_21 = arith.constant 0 : index
    %26 = vector.load %arg9[%c0_20, %c0_21] : memref<1x768xf32, #tpu.memory_space<vmem>>, vector<1x768xf32>
    %27 = vector.broadcast %26 : vector<1x768xf32> to vector<32x768xf32>
    %28 = arith.addf %25, %27 : vector<32x768xf32>
    %c0_22 = arith.constant 0 : index
    %c0_23 = arith.constant 0 : index
    %29 = vector.load %arg10[%c0_22, %c0_23] : memref<32x768xf32, #tpu.memory_space<vmem>>, vector<32x768xf32>
    tpu.vector_store %arg10[%c0_22, %c0_23], %28 {strides = array<i32>} : memref<32x768xf32, #tpu.memory_space<vmem>>, vector<32x768xf32>,
    return
  }
  func.func @transform_0(%arg0: i32) -> (i32, i32) {
    %c0_i32 = arith.constant 0 : i32
    %c0_i32_0 = arith.constant 0 : i32
    return %arg0, %c0_i32 : i32, i32
  }
  func.func @transform_1(%arg0: i32) -> (i32, i32) {
    %c0_i32 = arith.constant 0 : i32
    %c0_i32_0 = arith.constant 0 : i32
    %c0_i32_1 = arith.constant 0 : i32
    return %c0_i32, %c0_i32_0 : i32, i32
  }
  func.func @transform_2(%arg0: i32) -> (i32, i32) {
    %c0_i32 = arith.constant 0 : i32
    %c0_i32_0 = arith.constant 0 : i32
    %c0_i32_1 = arith.constant 0 : i32
    return %c0_i32, %c0_i32_0 : i32, i32
  }
  func.func @transform_3(%arg0: i32) -> (i32, i32) {
    %c0_i32 = arith.constant 0 : i32
    %c0_i32_0 = arith.constant 0 : i32
    %c0_i32_1 = arith.constant 0 : i32
    return %c0_i32, %c0_i32_0 : i32, i32
  }
  func.func @transform_4(%arg0: i32) -> (i32, i32) {
    %c0_i32 = arith.constant 0 : i32
    %c0_i32_0 = arith.constant 0 : i32
    %c0_i32_1 = arith.constant 0 : i32
    return %c0_i32, %c0_i32_0 : i32, i32
  }
  func.func @transform_5(%arg0: i32) -> (i32, i32) {
    %c0_i32 = arith.constant 0 : i32
    %c0_i32_0 = arith.constant 0 : i32
    %c0_i32_1 = arith.constant 0 : i32
    return %c0_i32, %c0_i32_0 : i32, i32
  }
  func.func @transform_6(%arg0: i32) -> (i32, i32) {
    %c0_i32 = arith.constant 0 : i32
    %c0_i32_0 = arith.constant 0 : i32
    %c0_i32_1 = arith.constant 0 : i32
    return %c0_i32, %c0_i32_0 : i32, i32
  }
  func.func @transform_7(%arg0: i32) -> (i32, i32) {
    %c0_i32 = arith.constant 0 : i32
    %c0_i32_0 = arith.constant 0 : i32
    %c0_i32_1 = arith.constant 0 : i32
    return %c0_i32, %c0_i32_0 : i32, i32
  }
  func.func @transform_8(%arg0: i32) -> (i32, i32) {
    %c0_i32 = arith.constant 0 : i32
    %c0_i32_0 = arith.constant 0 : i32
    %c0_i32_1 = arith.constant 0 : i32
    return %c0_i32, %c0_i32_0 : i32, i32
  }
  func.func @transform_9(%arg0: i32) -> (i32, i32) {
    %c0_i32 = arith.constant 0 : i32
    %c0_i32_0 = arith.constant 0 : i32
    return %arg0, %c0_i32 : i32, i32
  }
}

</mosaic_0001>

<llo_original>
// kernel: _forward_impl.1
$region0: #{_forward_impl.1}
  #allocation0 [shape = 'u32[]', space=smem, size = 0x4, offset = 0x4, fixed_abs, tag = 'smem constant byte address 0x4 - core index']
  #allocation1 [shape = 'u32[144,128]{1,0:T(1,128)}', space=vmem, size = 0x12000, scoped, tag = 'internal scratch']
  %s0 = inlined_call_operand.hbm [shape: f32[128,768], index: 0, kind: input, shape index: {}]
  %s1 = inlined_call_operand.hbm [shape: bf16[768,512], index: 1, kind: input, shape index: {}]
  %s2 = inlined_call_operand.hbm [shape: f32[1,512], index: 2, kind: input, shape index: {}]
  %s3 = inlined_call_operand.hbm [shape: bf16[512,128], index: 3, kind: input, shape index: {}]
  %s4 = inlined_call_operand.vmem [shape: f32[1,128], index: 4, kind: input, shape index: {}]
  %s5 = inlined_call_operand.hbm [shape: bf16[128,512], index: 5, kind: input, shape index: {}]
  %s6 = inlined_call_operand.vmem [shape: f32[1,512], index: 6, kind: input, shape index: {}]
  %s7 = inlined_call_operand.hbm [shape: bf16[512,768], index: 7, kind: input, shape index: {}]
  %s8 = inlined_call_operand.vmem [shape: f32[1,768], index: 8, kind: input, shape index: {}]
  %s9 = inlined_call_operand.hbm [shape: f32[128,768], index: 9, kind: output, shape index: {}]
  %s10 = sld [smem:[#allocation0]]
  $region93: #{_forward_impl.1} parent=0
    _
  %s12 = ssub.s32 1, %s10
  %s13 = scalar_select 0, %s12, %s10
  $region1: #{_forward_impl.1} parent=0
    #allocation2 [shape = 'u8[196608]{0}', space=vmem, size = 0x30000, scoped, tag = 'input window, operand 0']
    #allocation3 [shape = 's32[2]{0}', space=sflag, size = 0x8, scoped, tag = 'scoped memory for _forward_impl.1']
    #allocation4 [shape = 's32[2]{0}', space=sflag, size = 0x8, scoped, tag = 'scoped memory for _forward_impl.1']
    #allocation5 [shape = 'u8[786432]{0}', space=vmem, size = 0xc0000, scoped, tag = 'input window, operand 1, single buffered']
    #allocation6 [shape = 's32[1]{0}', space=sflag, size = 0x4, scoped, tag = 'scoped memory for _forward_impl.1']
    #allocation7 [shape = 'u8[2048]{0}', space=vmem, size = 0x800, scoped, tag = 'input window, operand 2, single buffered']
    #allocation8 [shape = 'u8[131072]{0}', space=vmem, size = 0x20000, scoped, tag = 'input window, operand 3, single buffered']
    #allocation9 [shape = 's32[1]{0}', space=sflag, size = 0x4, scoped, tag = 'scoped memory for _forward_impl.1']
    #allocation10 [shape = 'u8[131072]{0}', space=vmem, size = 0x20000, scoped, tag = 'input window, operand 5, single buffered']
    #allocation11 [shape = 'u8[786432]{0}', space=vmem, size = 0xc0000, scoped, tag = 'input window, operand 7, single buffered']
    #allocation12 [shape = 's32[1]{0}', space=sflag, size = 0x4, scoped, tag = 'scoped memory for _forward_impl.1']
    #allocation13 [shape = 'u8[196608]{0}', space=vmem, size = 0x30000, scoped, tag = 'output window, operand 0']
    %14 = vsyncpa [#allocation3], 0
    %s15 = scalar_lea.sflag [#allocation3], 1
    %16 = vsyncpa %s15, 0
    %17 = vsyncpa [#allocation6], 0
    %18 = vsyncpa [#allocation9], 0
    %19 = vsyncpa [#allocation12], 0
    %20 = vsyncpa [#allocation4], 0
    %s21 = scalar_lea.sflag [#allocation4], 1
    %22 = vsyncpa %s21, 0
    loop: start=0, step=1, limit=6
    $region2: #{_forward_impl.1} parent=1 // loop_pre_header
      _
    $region3: #{_forward_impl.1} parent=1 // loop_header
      %s24 = sphi 0, %s28
      %p25 = scmp.ge.s32.totalorder %s24, 6
      %s34 = sphi 0, %s36
      %s37 = sphi 0, %s34
      %s38 = sphi 0, %s37
      %s54 = sphi 0, %s38
      %s58 = sphi 0, %s58
      %s60 = sphi 0, %s58
      %s61 = sphi 0, %s60
      %s75 = sphi 0, %s61
      %s79 = sphi 0, %s79
      %s81 = sphi 0, %s79
      %s82 = sphi 0, %s81
      %s96 = sphi 0, %s82
      %s100 = sphi 0, %s100
      %s102 = sphi 0, %s100
      %s103 = sphi 0, %s102
      %s117 = sphi 0, %s103
      %s121 = sphi 0, %s121
      %s123 = sphi 0, %s121
      %s124 = sphi 0, %s123
      %s138 = sphi 0, %s124
      %s142 = sphi 0, %s142
      %s144 = sphi 0, %s142
      %s145 = sphi 0, %s144
      %s159 = sphi 0, %s145
      %s163 = sphi 0, %s163
      %s165 = sphi 0, %s163
      %s166 = sphi 0, %s165
      %s180 = sphi 0, %s166
      %s184 = sphi 0, %s184
      %s186 = sphi 0, %s184
      %s187 = sphi 0, %s186
      %s201 = sphi 0, %s187
      %s205 = sphi 0, %s205
      %s207 = sphi 0, %s205
      %s208 = sphi 0, %s207
      %s222 = sphi 0, %s208
      %s228 = sphi 0, %s230
      %s231 = sphi 0, %s228
      %s232 = sphi 0, %s231
      %s248 = sphi 0, %s232
    $region4: #{_forward_impl.1} parent=1 // loop_header_branch
      %27 = sbr.rel (%p25) target = $region8
    $region5: #{_forward_impl.1} parent=1 // loop_body
      %s29 = ssub.s32 %s24, 1
      %s30 = ssub.s32 %s24, 2
      %s31 = sadd.s32 %s24, 1
      %s32 = ssub.s32 %s24, %s31
      %p33 = scmp.eq.s32.totalorder %s32, 0
      %s35 = sadd.s32 %s34, 1
      %s36 = scalar_select %p33, %s34, %s35
      %p39 = pneg %p33
      %p40 = scmp.eq.s32.totalorder %s24, 3
      %p41 = por %p39, %p40
      %p42 = scmp.ne.s32.totalorder %s34, %s37
      %p43 = scmp.eq.s32.totalorder %s24, 0
      %p44 = por %p42, %p43
      %p45 = scmp.ne.s32.totalorder %s34, %s37
      %p46 = scmp.eq.s32.totalorder %s29, 3
      %p47 = por %p45, %p46
      %p48 = scmp.ne.s32.totalorder %s37, %s38
      %p49 = scmp.eq.s32.totalorder %s29, 0
      %p50 = por %p48, %p49
      %p51 = scmp.ne.s32.totalorder %s37, %s38
      %p52 = scmp.eq.s32.totalorder %s30, 3
      %p53 = por %p51, %p52
      %p55 = scmp.ne.s32.totalorder %s38, %s54
      %p56 = scmp.eq.s32.totalorder %s30, 0
      %p57 = por %p55, %p56
      %s59 = sadd.s32 %s58, 1
      %p62 = scmp.eq.s32.totalorder %s24, 3
      %p63 = scmp.ne.s32.totalorder %s58, %s60
      %p64 = scmp.eq.s32.totalorder %s24, 0
      %p65 = por %p63, %p64
      %p66 = scmp.ne.s32.totalorder %s58, %s60
      %p67 = scmp.eq.s32.totalorder %s29, 3
      %p68 = por %p66, %p67
      %p69 = scmp.ne.s32.totalorder %s60, %s61
      %p70 = scmp.eq.s32.totalorder %s29, 0
      %p71 = por %p69, %p70
      %p72 = scmp.ne.s32.totalorder %s60, %s61
      %p73 = scmp.eq.s32.totalorder %s30, 3
      %p74 = por %p72, %p73
      %p76 = scmp.ne.s32.totalorder %s61, %s75
      %p77 = scmp.eq.s32.totalorder %s30, 0
      %p78 = por %p76, %p77
      %s80 = sadd.s32 %s79, 1
      %p83 = scmp.eq.s32.totalorder %s24, 3
      %p84 = scmp.ne.s32.totalorder %s79, %s81
      %p85 = scmp.eq.s32.totalorder %s24, 0
      %p86 = por %p84, %p85
      %p87 = scmp.ne.s32.totalorder %s79, %s81
      %p88 = scmp.eq.s32.totalorder %s29, 3
      %p89 = por %p87, %p88
      %p90 = scmp.ne.s32.totalorder %s81, %s82
      %p91 = scmp.eq.s32.totalorder %s29, 0
      %p92 = por %p90, %p91
      %p93 = scmp.ne.s32.totalorder %s81, %s82
      %p94 = scmp.eq.s32.totalorder %s30, 3
      %p95 = por %p93, %p94
      %p97 = scmp.ne.s32.totalorder %s82, %s96
      %p98 = scmp.eq.s32.totalorder %s30, 0
      %p99 = por %p97, %p98
      %s101 = sadd.s32 %s100, 1
      %p104 = scmp.eq.s32.totalorder %s24, 3
      %p105 = scmp.ne.s32.totalorder %s100, %s102
      %p106 = scmp.eq.s32.totalorder %s24, 0
      %p107 = por %p105, %p106
      %p108 = scmp.ne.s32.totalorder %s100, %s102
      %p109 = scmp.eq.s32.totalorder %s29, 3
      %p110 = por %p108, %p109
      %p111 = scmp.ne.s32.totalorder %s102, %s103
      %p112 = scmp.eq.s32.totalorder %s29, 0
      %p113 = por %p111, %p112
      %p114 = scmp.ne.s32.totalorder %s102, %s103
      %p115 = scmp.eq.s32.totalorder %s30, 3
      %p116 = por %p114, %p115
      %p118 = scmp.ne.s32.totalorder %s103, %s117
      %p119 = scmp.eq.s32.totalorder %s30, 0
      %p120 = por %p118, %p119
      %s122 = sadd.s32 %s121, 1
      %p125 = scmp.eq.s32.totalorder %s24, 3
      %p126 = scmp.ne.s32.totalorder %s121, %s123
      %p127 = scmp.eq.s32.totalorder %s24, 0
      %p128 = por %p126, %p127
      %p129 = scmp.ne.s32.totalorder %s121, %s123
      %p130 = scmp.eq.s32.totalorder %s29, 3
      %p131 = por %p129, %p130
      %p132 = scmp.ne.s32.totalorder %s123, %s124
      %p133 = scmp.eq.s32.totalorder %s29, 0
      %p134 = por %p132, %p133
      %p135 = scmp.ne.s32.totalorder %s123, %s124
      %p136 = scmp.eq.s32.totalorder %s30, 3
      %p137 = por %p135, %p136
      %p139 = scmp.ne.s32.totalorder %s124, %s138
      %p140 = scmp.eq.s32.totalorder %s30, 0
      %p141 = por %p139, %p140
      %s143 = sadd.s32 %s142, 1
      %p146 = scmp.eq.s32.totalorder %s24, 3
      %p147 = scmp.ne.s32.totalorder %s142, %s144
      %p148 = scmp.eq.s32.totalorder %s24, 0
      %p149 = por %p147, %p148
      %p150 = scmp.ne.s32.totalorder %s142, %s144
      %p151 = scmp.eq.s32.totalorder %s29, 3
      %p152 = por %p150, %p151
      %p153 = scmp.ne.s32.totalorder %s144, %s145
      %p154 = scmp.eq.s32.totalorder %s29, 0
      %p155 = por %p153, %p154
      %p156 = scmp.ne.s32.totalorder %s144, %s145
      %p157 = scmp.eq.s32.totalorder %s30, 3
      %p158 = por %p156, %p157
      %p160 = scmp.ne.s32.totalorder %s145, %s159
      %p161 = scmp.eq.s32.totalorder %s30, 0
      %p162 = por %p160, %p161
      %s164 = sadd.s32 %s163, 1
      %p167 = scmp.eq.s32.totalorder %s24, 3
      %p168 = scmp.ne.s32.totalorder %s163, %s165
      %p169 = scmp.eq.s32.totalorder %s24, 0
      %p170 = por %p168, %p169
      %p171 = scmp.ne.s32.totalorder %s163, %s165
      %p172 = scmp.eq.s32.totalorder %s29, 3
      %p173 = por %p171, %p172
      %p174 = scmp.ne.s32.totalorder %s165, %s166
      %p175 = scmp.eq.s32.totalorder %s29, 0
      %p176 = por %p174, %p175
      %p177 = scmp.ne.s32.totalorder %s165, %s166
      %p178 = scmp.eq.s32.totalorder %s30, 3
      %p179 = por %p177, %p178
      %p181 = scmp.ne.s32.totalorder %s166, %s180
      %p182 = scmp.eq.s32.totalorder %s30, 0
      %p183 = por %p181, %p182
      %s185 = sadd.s32 %s184, 1
      %p188 = scmp.eq.s32.totalorder %s24, 3
      %p189 = scmp.ne.s32.totalorder %s184, %s186
      %p190 = scmp.eq.s32.totalorder %s24, 0
      %p191 = por %p189, %p190
      %p192 = scmp.ne.s32.totalorder %s184, %s186
      %p193 = scmp.eq.s32.totalorder %s29, 3
      %p194 = por %p192, %p193
      %p195 = scmp.ne.s32.totalorder %s186, %s187
      %p196 = scmp.eq.s32.totalorder %s29, 0
      %p197 = por %p195, %p196
      %p198 = scmp.ne.s32.totalorder %s186, %s187
      %p199 = scmp.eq.s32.totalorder %s30, 3
      %p200 = por %p198, %p199
      %p202 = scmp.ne.s32.totalorder %s187, %s201
      %p203 = scmp.eq.s32.totalorder %s30, 0
      %p204 = por %p202, %p203
      %s206 = sadd.s32 %s205, 1
      %p209 = scmp.eq.s32.totalorder %s24, 3
      %p210 = scmp.ne.s32.totalorder %s205, %s207
      %p211 = scmp.eq.s32.totalorder %s24, 0
      %p212 = por %p210, %p211
      %p213 = scmp.ne.s32.totalorder %s205, %s207
      %p214 = scmp.eq.s32.totalorder %s29, 3
      %p215 = por %p213, %p214
      %p216 = scmp.ne.s32.totalorder %s207, %s208
      %p217 = scmp.eq.s32.totalorder %s29, 0
      %p218 = por %p216, %p217
      %p219 = scmp.ne.s32.totalorder %s207, %s208
      %p220 = scmp.eq.s32.totalorder %s30, 3
      %p221 = por %p219, %p220
      %p223 = scmp.ne.s32.totalorder %s208, %s222
      %p224 = scmp.eq.s32.totalorder %s30, 0
      %p225 = por %p223, %p224
      %s226 = ssub.s32 %s24, %s31
      %p227 = scmp.eq.s32.totalorder %s226, 0
      %s229 = sadd.s32 %s228, 1
      %s230 = scalar_select %p227, %s228, %s229
      %p233 = pneg %p227
      %p234 = scmp.eq.s32.totalorder %s24, 3
      %p235 = por %p233, %p234
      %p236 = scmp.ne.s32.totalorder %s228, %s231
      %p237 = scmp.eq.s32.totalorder %s24, 0
      %p238 = por %p236, %p237
      %p239 = scmp.ne.s32.totalorder %s228, %s231
      %p240 = scmp.eq.s32.totalorder %s29, 3
      %p241 = por %p239, %p240
      %p242 = scmp.ne.s32.totalorder %s231, %s232
      %p243 = scmp.eq.s32.totalorder %s29, 0
      %p244 = por %p242, %p243
      %p245 = scmp.ne.s32.totalorder %s231, %s232
      %p246 = scmp.eq.s32.totalorder %s30, 3
      %p247 = por %p245, %p246
      %p249 = scmp.ne.s32.totalorder %s232, %s248
      %p250 = scmp.eq.s32.totalorder %s30, 0
      %p251 = por %p249, %p250
      %p252 = scmp.le.s32.totalorder 1, %s24
      %p253 = scmp.lt.s32.totalorder %s24, 5
      %p254 = pnand %p252, %p253
      %p255 = pneg %p254
      // Predicated region
      $region9: #{_forward_impl.1} parent=5 // pred_check
        _
      $region10: #{_forward_impl.1} parent=5 // pred_check_branch
        %257 = sbr.rel (%p254) target = $region12
      $region11: #{_forward_impl.1} parent=5 // pred_region
        %s258 = ssub.s32 %s24, 1
        // Predicated region
        $region13: #{_forward_impl.1} parent=11 // pred_check
          %p259 = pneg %p71
        $region14: #{_forward_impl.1} parent=11 // pred_check_branch
          %261 = sbr.rel (%p259) target = $region16
        $region15: #{_forward_impl.1} parent=11 // pred_region
          %s263 = ssub.s32 24576, 24576
          %264 = vsyncadd [#allocation6], %s263
          %s265 = sshll.u32 [#allocation5], 4
          %s266 = int_to_ptr.vmem [resolvable:$true] %s265
          %271 = dma.hbm_to_vmem [thread:$0]  %s1, 24576, %s266, [#allocation6], 256, 256, 16
        $region16: #{_forward_impl.1} parent=11 // pred_fallthru
          _
        // Predicated region
        $region17: #{_forward_impl.1} parent=11 // pred_check
          %p272 = pneg %p92
        $region18: #{_forward_impl.1} parent=11 // pred_check_branch
          %274 = sbr.rel (%p272) target = $region20
        $region19: #{_forward_impl.1} parent=11 // pred_region
          %s276 = ssub.s32 64, 64
          %277 = vsyncadd [#allocation6], %s276
          %s279 = sshll.u32 [#allocation7], 4
          %s280 = int_to_ptr.vmem [resolvable:$true] %s279
          %282 = dma.hbm_to_vmem [thread:$0]  %s2, 64, %s280, [#allocation6]
        $region20: #{_forward_impl.1} parent=11 // pred_fallthru
          _
        // Predicated region
        $region21: #{_forward_impl.1} parent=11 // pred_check
          %p283 = pneg %p113
        $region22: #{_forward_impl.1} parent=11 // pred_check_branch
          %285 = sbr.rel (%p283) target = $region24
        $region23: #{_forward_impl.1} parent=11 // pred_region
          %s287 = ssub.s32 4096, 4096
          %288 = vsyncadd [#allocation9], %s287
          %s289 = sshll.u32 [#allocation8], 4
          %s290 = int_to_ptr.vmem [resolvable:$true] %s289
          %295 = dma.hbm_to_vmem [thread:$0]  %s3, 4096, %s290, [#allocation9], 64, 64, 4
        $region24: #{_forward_impl.1} parent=11 // pred_fallthru
          _
        // Predicated region
        $region25: #{_forward_impl.1} parent=11 // pred_check
          %p296 = pneg %p134
        $region26: #{_forward_impl.1} parent=11 // pred_check_branch
          %298 = sbr.rel (%p296) target = $region28
        $region27: #{_forward_impl.1} parent=11 // pred_region
          _
        $region28: #{_forward_impl.1} parent=11 // pred_fallthru
          _
        // Predicated region
        $region29: #{_forward_impl.1} parent=11 // pred_check
          %p299 = pneg %p155
        $region30: #{_forward_impl.1} parent=11 // pred_check_branch
          %301 = sbr.rel (%p299) target = $region32
        $region31: #{_forward_impl.1} parent=11 // pred_region
          %s303 = ssub.s32 4096, 4096
          %304 = vsyncadd [#allocation9], %s303
          %s305 = sshll.u32 [#allocation10], 4
          %s306 = int_to_ptr.vmem [resolvable:$true] %s305
          %311 = dma.hbm_to_vmem [thread:$0]  %s5, 4096, %s306, [#allocation9], 256, 256, 16
        $region32: #{_forward_impl.1} parent=11 // pred_fallthru
          _
        // Predicated region
        $region33: #{_forward_impl.1} parent=11 // pred_check
          %p312 = pneg %p176
        $region34: #{_forward_impl.1} parent=11 // pred_check_branch
          %314 = sbr.rel (%p312) target = $region36
        $region35: #{_forward_impl.1} parent=11 // pred_region
          _
        $region36: #{_forward_impl.1} parent=11 // pred_fallthru
          _
        // Predicated region
        $region37: #{_forward_impl.1} parent=11 // pred_check
          %p315 = pneg %p197
        $region38: #{_forward_impl.1} parent=11 // pred_check_branch
          %317 = sbr.rel (%p315) target = $region40
        $region39: #{_forward_impl.1} parent=11 // pred_region
          %s319 = ssub.s32 24576, 24576
          %320 = vsyncadd [#allocation12], %s319
          %s321 = sshll.u32 [#allocation11], 4
          %s322 = int_to_ptr.vmem [resolvable:$true] %s321
          %327 = dma.hbm_to_vmem [thread:$0]  %s7, 24576, %s322, [#allocation12], 384, 384, 24
        $region40: #{_forward_impl.1} parent=11 // pred_fallthru
          _
        // Predicated region
        $region41: #{_forward_impl.1} parent=11 // pred_check
          %p328 = pneg %p218
        $region42: #{_forward_impl.1} parent=11 // pred_check_branch
          %330 = sbr.rel (%p328) target = $region44
        $region43: #{_forward_impl.1} parent=11 // pred_region
          _
        $region44: #{_forward_impl.1} parent=11 // pred_fallthru
          _
      $region12: #{_forward_impl.1} parent=5 // pred_fallthru
        _
      %p331 = scmp.lt.s32.totalorder %s24, 4
      // Predicated region
      $region45: #{_forward_impl.1} parent=5 // pred_check
        %p332 = pneg %p331
      $region46: #{_forward_impl.1} parent=5 // pred_check_branch
        %334 = sbr.rel (%p332) target = $region48
      $region47: #{_forward_impl.1} parent=5 // pred_region
        // Predicated region
        $region49: #{_forward_impl.1} parent=47 // pred_check
          %p335 = pneg %p44
        $region50: #{_forward_impl.1} parent=47 // pred_check_branch
          %337 = sbr.rel (%p335) target = $region52
        $region51: #{_forward_impl.1} parent=47 // pred_region
          %s338 = sand.u32 %s34, 1
          %s339 = scalar_lea.sflag [#allocation3], %s338
          %s340 = sand.u32 %s34, 1
          %s341 = smul.addr %s340, 192
          %s342 = scalar_lea.vmem [#allocation2], %s341
          %s343 = smul.u32 4, %s24
          %s345 = ssub.s32 3072, 3072
          %346 = vsyncadd %s339, %s345
          %s347 = smul.addr %s343, 6
          %s348 = smul.addr %s347, 128
          %s349 = scalar_lea.hbm %s0, %s348
          %s350 = sshll.u32 %s342, 4
          %s351 = int_to_ptr.vmem [resolvable:$true] %s350
          %356 = dma.hbm_to_vmem [thread:$0]  %s349, 3072, %s351, %s339, 768, 768, 48
        $region52: #{_forward_impl.1} parent=47 // pred_fallthru
          _
      $region48: #{_forward_impl.1} parent=5 // pred_fallthru
        _
      %p357 = scmp.le.s32.totalorder 1, %s24
      %p358 = scmp.lt.s32.totalorder %s24, 5
      %p359 = pnand %p357, %p358
      %p360 = pneg %p359
      // Predicated region
      $region53: #{_forward_impl.1} parent=5 // pred_check
        _
      $region54: #{_forward_impl.1} parent=5 // pred_check_branch
        %362 = sbr.rel (%p359) target = $region56
      $region55: #{_forward_impl.1} parent=5 // pred_region
        %s363 = ssub.s32 %s24, 1
        %s364 = sand.u32 %s37, 1
        %s365 = scalar_lea.sflag [#allocation3], %s364
        %s366 = sand.u32 %s37, 1
        %s367 = smul.addr %s366, 192
        %s368 = scalar_lea.vmem [#allocation2], %s367
        // Predicated region
        $region57: #{_forward_impl.1} parent=55 // pred_check
          %p369 = pneg %p50
        $region58: #{_forward_impl.1} parent=55 // pred_check_branch
          %371 = sbr.rel (%p369) target = $region60
        $region59: #{_forward_impl.1} parent=55 // pred_region
          %372 = dma.done %s365, 3072
        $region60: #{_forward_impl.1} parent=55 // pred_fallthru
          _
        // Predicated region
        $region61: #{_forward_impl.1} parent=55 // pred_check
          %p373 = pneg %p71
        $region62: #{_forward_impl.1} parent=55 // pred_check_branch
          %375 = sbr.rel (%p373) target = $region64
        $region63: #{_forward_impl.1} parent=55 // pred_region
          %376 = dma.done [#allocation6], 24576
        $region64: #{_forward_impl.1} parent=55 // pred_fallthru
          _
        // Predicated region
        $region65: #{_forward_impl.1} parent=55 // pred_check
          %p377 = pneg %p92
        $region66: #{_forward_impl.1} parent=55 // pred_check_branch
          %379 = sbr.rel (%p377) target = $region68
        $region67: #{_forward_impl.1} parent=55 // pred_region
          %380 = dma.done [#allocation6], 64
        $region68: #{_forward_impl.1} parent=55 // pred_fallthru
          _
        // Predicated region
        $region69: #{_forward_impl.1} parent=55 // pred_check
          %p381 = pneg %p113
        $region70: #{_forward_impl.1} parent=55 // pred_check_branch
          %383 = sbr.rel (%p381) target = $region72
        $region71: #{_forward_impl.1} parent=55 // pred_region
          %384 = dma.done [#allocation9], 4096
        $region72: #{_forward_impl.1} parent=55 // pred_fallthru
          _
        // Predicated region
        $region73: #{_forward_impl.1} parent=55 // pred_check
          %p385 = pneg %p155
        $region74: #{_forward_impl.1} parent=55 // pred_check_branch
          %387 = sbr.rel (%p385) target = $region76
        $region75: #{_forward_impl.1} parent=55 // pred_region
          %388 = dma.done [#allocation9], 4096
        $region76: #{_forward_impl.1} parent=55 // pred_fallthru
          _
        // Predicated region
        $region77: #{_forward_impl.1} parent=55 // pred_check
          %p389 = pneg %p197
        $region78: #{_forward_impl.1} parent=55 // pred_check_branch
          %391 = sbr.rel (%p389) target = $region80
        $region79: #{_forward_impl.1} parent=55 // pred_region
          %392 = dma.done [#allocation12], 24576
        $region80: #{_forward_impl.1} parent=55 // pred_fallthru
          _
        %s393 = sand.u32 %s37, 1
        %s394 = scalar_lea.sflag [#allocation3], %s393
        %s395 = sand.u32 %s37, 1
        %s396 = smul.addr %s395, 192
        %s397 = scalar_lea.vmem [#allocation2], %s396
        %p398 = pneg %p50
        %p399 = pneg %p47
        %p400 = pneg %p71
        %p401 = pneg %p68
        %p402 = pneg %p92
        %p403 = pneg %p89
        %p404 = pneg %p113
        %p405 = pneg %p110
        %p406 = pneg %p134
        %p407 = pneg %p131
        %p408 = pneg %p155
        %p409 = pneg %p152
        %p410 = pneg %p176
        %p411 = pneg %p173
        %p412 = pneg %p197
        %p413 = pneg %p194
        %p414 = pneg %p218
        %p415 = pneg %p215
        %p416 = pneg %p244
        %p417 = pneg %p241
        %s418 = sand.u32 %s231, 1
        %s419 = scalar_lea.sflag [#allocation4], %s418
        %s420 = sand.u32 %s231, 1
        %s421 = smul.addr %s420, 192
        %s422 = scalar_lea.vmem [#allocation13], %s421
        %s423 = smul.u32 4, %s29
        %s424 = smul.u32 4, %s29
        %v426 = vld [vmem:[%s368] sm:$0xff]
        %v427 = vld [vmem:[%s368 + $0x8] sm:$0xff]
        %v428 = vld [vmem:[%s368 + $0x10] sm:$0xff]
        %v429 = vld [vmem:[%s368 + $0x18] sm:$0xff]
        %v430 = vld [vmem:[%s368 + $0x20] sm:$0xff]
        %v431 = vld [vmem:[%s368 + $0x28] sm:$0xff]
        %v432 = vld [vmem:[%s368 + $0x30] sm:$0xff]
        %v433 = vld [vmem:[%s368 + $0x38] sm:$0xff]
        %v434 = vld [vmem:[%s368 + $0x40] sm:$0xff]
        %v435 = vld [vmem:[%s368 + $0x48] sm:$0xff]
        %v436 = vld [vmem:[%s368 + $0x50] sm:$0xff]
        %v437 = vld [vmem:[%s368 + $0x58] sm:$0xff]
        %v438 = vld [vmem:[%s368 + $0x60] sm:$0xff]
        %v439 = vld [vmem:[%s368 + $0x68] sm:$0xff]
        %v440 = vld [vmem:[%s368 + $0x70] sm:$0xff]
        %v441 = vld [vmem:[%s368 + $0x78] sm:$0xff]
        %v442 = vld [vmem:[%s368 + $0x80] sm:$0xff]
        %v443 = vld [vmem:[%s368 + $0x88] sm:$0xff]
        %v444 = vld [vmem:[%s368 + $0x90] sm:$0xff]
        %v445 = vld [vmem:[%s368 + $0x98] sm:$0xff]
        %v446 = vld [vmem:[%s368 + $0xa0] sm:$0xff]
        %v447 = vld [vmem:[%s368 + $0xa8] sm:$0xff]
        %v448 = vld [vmem:[%s368 + $0xb0] sm:$0xff]
        %v449 = vld [vmem:[%s368 + $0xb8] sm:$0xff]
        %v450 = vpack.c.bf16 %v432, %v426
        %v451 = vpack.c.bf16 %v433, %v427
        %v452 = vpack.c.bf16 %v434, %v428
        %v453 = vpack.c.bf16 %v435, %v429
        %v454 = vpack.c.bf16 %v436, %v430
        %v455 = vpack.c.bf16 %v437, %v431
        %v456 = vpack.c.bf16 %v444, %v438
        %v457 = vpack.c.bf16 %v445, %v439
        %v458 = vpack.c.bf16 %v446, %v440
        %v459 = vpack.c.bf16 %v447, %v441
        %v460 = vpack.c.bf16 %v448, %v442
        %v461 = vpack.c.bf16 %v449, %v443
        %v462 = vld [vmem:[#allocation5] sm:$0xff]
        %v463 = vld [vmem:[#allocation5 + $0x8] sm:$0xff]
        %v464 = vld [vmem:[#allocation5 + $0x10] sm:$0xff]
        %v465 = vld [vmem:[#allocation5 + $0x18] sm:$0xff]
        %v466 = vld [vmem:[#allocation5 + $0x20] sm:$0xff]
        %v467 = vld [vmem:[#allocation5 + $0x28] sm:$0xff]
        %v468 = vld [vmem:[#allocation5 + $0x30] sm:$0xff]
        %v469 = vld [vmem:[#allocation5 + $0x38] sm:$0xff]
        %v470 = vld [vmem:[#allocation5 + $0x40] sm:$0xff]
        %v471 = vld [vmem:[#allocation5 + $0x48] sm:$0xff]
        %v472 = vld [vmem:[#allocation5 + $0x50] sm:$0xff]
        %v473 = vld [vmem:[#allocation5 + $0x58] sm:$0xff]
        %v474 = vld [vmem:[#allocation5 + $0x60] sm:$0xff]
        %v475 = vld [vmem:[#allocation5 + $0x68] sm:$0xff]
        %v476 = vld [vmem:[#allocation5 + $0x70] sm:$0xff]
        %v477 = vld [vmem:[#allocation5 + $0x78] sm:$0xff]
        %v478 = vld [vmem:[#allocation5 + $0x80] sm:$0xff]
        %v479 = vld [vmem:[#allocation5 + $0x88] sm:$0xff]
        %v480 = vld [vmem:[#allocation5 + $0x90] sm:$0xff]
        %v481 = vld [vmem:[#allocation5 + $0x98] sm:$0xff]
        %v482 = vld [vmem:[#allocation5 + $0xa0] sm:$0xff]
        %v483 = vld [vmem:[#allocation5 + $0xa8] sm:$0xff]
        %v484 = vld [vmem:[#allocation5 + $0xb0] sm:$0xff]
        %v485 = vld [vmem:[#allocation5 + $0xb8] sm:$0xff]
        %v486 = vld [vmem:[#allocation5 + $0xc0] sm:$0xff]
        %v487 = vld [vmem:[#allocation5 + $0xc8] sm:$0xff]
        %v488 = vld [vmem:[#allocation5 + $0xd0] sm:$0xff]
        %v489 = vld [vmem:[#allocation5 + $0xd8] sm:$0xff]
        %v490 = vld [vmem:[#allocation5 + $0xe0] sm:$0xff]
        %v491 = vld [vmem:[#allocation5 + $0xe8] sm:$0xff]
        %v492 = vld [vmem:[#allocation5 + $0xf0] sm:$0xff]
        %v493 = vld [vmem:[#allocation5 + $0xf8] sm:$0xff]
        %v494 = vld [vmem:[#allocation5 + $0x100] sm:$0xff]
        %v495 = vld [vmem:[#allocation5 + $0x108] sm:$0xff]
        %v496 = vld [vmem:[#allocation5 + $0x110] sm:$0xff]
        %v497 = vld [vmem:[#allocation5 + $0x118] sm:$0xff]
        %v498 = vld [vmem:[#allocation5 + $0x120] sm:$0xff]
        %v499 = vld [vmem:[#allocation5 + $0x128] sm:$0xff]
        %v500 = vld [vmem:[#allocation5 + $0x130] sm:$0xff]
        %v501 = vld [vmem:[#allocation5 + $0x138] sm:$0xff]
        %v502 = vld [vmem:[#allocation5 + $0x140] sm:$0xff]
        %v503 = vld [vmem:[#allocation5 + $0x148] sm:$0xff]
        %v504 = vld [vmem:[#allocation5 + $0x150] sm:$0xff]
        %v505 = vld [vmem:[#allocation5 + $0x158] sm:$0xff]
        %v506 = vld [vmem:[#allocation5 + $0x160] sm:$0xff]
        %v507 = vld [vmem:[#allocation5 + $0x168] sm:$0xff]
        %v508 = vld [vmem:[#allocation5 + $0x170] sm:$0xff]
        %v509 = vld [vmem:[#allocation5 + $0x178] sm:$0xff]
        %v510 = vld [vmem:[#allocation5 + $0x180] sm:$0xff]
        %v511 = vld [vmem:[#allocation5 + $0x188] sm:$0xff]
        %v512 = vld [vmem:[#allocation5 + $0x190] sm:$0xff]
        %v513 = vld [vmem:[#allocation5 + $0x198] sm:$0xff]
        %v514 = vld [vmem:[#allocation5 + $0x1a0] sm:$0xff]
        %v515 = vld [vmem:[#allocation5 + $0x1a8] sm:$0xff]
        %v516 = vld [vmem:[#allocation5 + $0x1b0] sm:$0xff]
        %v517 = vld [vmem:[#allocation5 + $0x1b8] sm:$0xff]
        %v518 = vld [vmem:[#allocation5 + $0x1c0] sm:$0xff]
        %v519 = vld [vmem:[#allocation5 + $0x1c8] sm:$0xff]
        %v520 = vld [vmem:[#allocation5 + $0x1d0] sm:$0xff]
        %v521 = vld [vmem:[#allocation5 + $0x1d8] sm:$0xff]
        %v522 = vld [vmem:[#allocation5 + $0x1e0] sm:$0xff]
        %v523 = vld [vmem:[#allocation5 + $0x1e8] sm:$0xff]
        %v524 = vld [vmem:[#allocation5 + $0x1f0] sm:$0xff]
        %v525 = vld [vmem:[#allocation5 + $0x1f8] sm:$0xff]
        %v526 = vld [vmem:[#allocation5 + $0x200] sm:$0xff]
        %v527 = vld [vmem:[#allocation5 + $0x208] sm:$0xff]
        %v528 = vld [vmem:[#allocation5 + $0x210] sm:$0xff]
        %v529 = vld [vmem:[#allocation5 + $0x218] sm:$0xff]
        %v530 = vld [vmem:[#allocation5 + $0x220] sm:$0xff]
        %v531 = vld [vmem:[#allocation5 + $0x228] sm:$0xff]
        %v532 = vld [vmem:[#allocation5 + $0x230] sm:$0xff]
        %v533 = vld [vmem:[#allocation5 + $0x238] sm:$0xff]
        %v534 = vld [vmem:[#allocation5 + $0x240] sm:$0xff]
        %v535 = vld [vmem:[#allocation5 + $0x248] sm:$0xff]
        %v536 = vld [vmem:[#allocation5 + $0x250] sm:$0xff]
        %v537 = vld [vmem:[#allocation5 + $0x258] sm:$0xff]
        %v538 = vld [vmem:[#allocation5 + $0x260] sm:$0xff]
        %v539 = vld [vmem:[#allocation5 + $0x268] sm:$0xff]
        %v540 = vld [vmem:[#allocation5 + $0x270] sm:$0xff]
        %v541 = vld [vmem:[#allocation5 + $0x278] sm:$0xff]
        %v542 = vld [vmem:[#allocation5 + $0x280] sm:$0xff]
        %v543 = vld [vmem:[#allocation5 + $0x288] sm:$0xff]
        %v544 = vld [vmem:[#allocation5 + $0x290] sm:$0xff]
        %v545 = vld [vmem:[#allocation5 + $0x298] sm:$0xff]
        %v546 = vld [vmem:[#allocation5 + $0x2a0] sm:$0xff]
        %v547 = vld [vmem:[#allocation5 + $0x2a8] sm:$0xff]
        %v548 = vld [vmem:[#allocation5 + $0x2b0] sm:$0xff]
        %v549 = vld [vmem:[#allocation5 + $0x2b8] sm:$0xff]
        %v550 = vld [vmem:[#allocation5 + $0x2c0] sm:$0xff]
        %v551 = vld [vmem:[#allocation5 + $0x2c8] sm:$0xff]
        %v552 = vld [vmem:[#allocation5 + $0x2d0] sm:$0xff]
        %v553 = vld [vmem:[#allocation5 + $0x2d8] sm:$0xff]
        %v554 = vld [vmem:[#allocation5 + $0x2e0] sm:$0xff]
        %v555 = vld [vmem:[#allocation5 + $0x2e8] sm:$0xff]
        %v556 = vld [vmem:[#allocation5 + $0x2f0] sm:$0xff]
        %v557 = vld [vmem:[#allocation5 + $0x2f8] sm:$0xff]
        %v558 = vld [vmem:[#allocation5 + $0x300] sm:$0xff]
        %v559 = vld [vmem:[#allocation5 + $0x308] sm:$0xff]
        %v560 = vld [vmem:[#allocation5 + $0x310] sm:$0xff]
        %v561 = vld [vmem:[#allocation5 + $0x318] sm:$0xff]
        %v562 = vld [vmem:[#allocation5 + $0x320] sm:$0xff]
        %v563 = vld [vmem:[#allocation5 + $0x328] sm:$0xff]
        %v564 = vld [vmem:[#allocation5 + $0x330] sm:$0xff]
        %v565 = vld [vmem:[#allocation5 + $0x338] sm:$0xff]
        %v566 = vld [vmem:[#allocation5 + $0x340] sm:$0xff]
        %v567 = vld [vmem:[#allocation5 + $0x348] sm:$0xff]
        %v568 = vld [vmem:[#allocation5 + $0x350] sm:$0xff]
        %v569 = vld [vmem:[#allocation5 + $0x358] sm:$0xff]
        %v570 = vld [vmem:[#allocation5 + $0x360] sm:$0xff]
        %v571 = vld [vmem:[#allocation5 + $0x368] sm:$0xff]
        %v572 = vld [vmem:[#allocation5 + $0x370] sm:$0xff]
        %v573 = vld [vmem:[#allocation5 + $0x378] sm:$0xff]
        %v574 = vld [vmem:[#allocation5 + $0x380] sm:$0xff]
        %v575 = vld [vmem:[#allocation5 + $0x388] sm:$0xff]
        %v576 = vld [vmem:[#allocation5 + $0x390] sm:$0xff]
        %v577 = vld [vmem:[#allocation5 + $0x398] sm:$0xff]
        %v578 = vld [vmem:[#allocation5 + $0x3a0] sm:$0xff]
        %v579 = vld [vmem:[#allocation5 + $0x3a8] sm:$0xff]
        %v580 = vld [vmem:[#allocation5 + $0x3b0] sm:$0xff]
        %v581 = vld [vmem:[#allocation5 + $0x3b8] sm:$0xff]
        %v582 = vld [vmem:[#allocation5 + $0x3c0] sm:$0xff]
        %v583 = vld [vmem:[#allocation5 + $0x3c8] sm:$0xff]
        %v584 = vld [vmem:[#allocation5 + $0x3d0] sm:$0xff]
        %v585 = vld [vmem:[#allocation5 + $0x3d8] sm:$0xff]
        %v586 = vld [vmem:[#allocation5 + $0x3e0] sm:$0xff]
        %v587 = vld [vmem:[#allocation5 + $0x3e8] sm:$0xff]
        %v588 = vld [vmem:[#allocation5 + $0x3f0] sm:$0xff]
        %v589 = vld [vmem:[#allocation5 + $0x3f8] sm:$0xff]
        %v590 = vld [vmem:[#allocation5 + $0x400] sm:$0xff]
        %v591 = vld [vmem:[#allocation5 + $0x408] sm:$0xff]
        %v592 = vld [vmem:[#allocation5 + $0x410] sm:$0xff]
        %v593 = vld [vmem:[#allocation5 + $0x418] sm:$0xff]
        %v594 = vld [vmem:[#allocation5 + $0x420] sm:$0xff]
        %v595 = vld [vmem:[#allocation5 + $0x428] sm:$0xff]
        %v596 = vld [vmem:[#allocation5 + $0x430] sm:$0xff]
        %v597 = vld [vmem:[#allocation5 + $0x438] sm:$0xff]
        %v598 = vld [vmem:[#allocation5 + $0x440] sm:$0xff]
        %v599 = vld [vmem:[#allocation5 + $0x448] sm:$0xff]
        %v600 = vld [vmem:[#allocation5 + $0x450] sm:$0xff]
        %v601 = vld [vmem:[#allocation5 + $0x458] sm:$0xff]
        %v602 = vld [vmem:[#allocation5 + $0x460] sm:$0xff]
        %v603 = vld [vmem:[#allocation5 + $0x468] sm:$0xff]
        %v604 = vld [vmem:[#allocation5 + $0x470] sm:$0xff]
        %v605 = vld [vmem:[#allocation5 + $0x478] sm:$0xff]
        %v606 = vld [vmem:[#allocation5 + $0x480] sm:$0xff]
        %v607 = vld [vmem:[#allocation5 + $0x488] sm:$0xff]
        %v608 = vld [vmem:[#allocation5 + $0x490] sm:$0xff]
        %v609 = vld [vmem:[#allocation5 + $0x498] sm:$0xff]
        %v610 = vld [vmem:[#allocation5 + $0x4a0] sm:$0xff]
        %v611 = vld [vmem:[#allocation5 + $0x4a8] sm:$0xff]
        %v612 = vld [vmem:[#allocation5 + $0x4b0] sm:$0xff]
        %v613 = vld [vmem:[#allocation5 + $0x4b8] sm:$0xff]
        %v614 = vld [vmem:[#allocation5 + $0x4c0] sm:$0xff]
        %v615 = vld [vmem:[#allocation5 + $0x4c8] sm:$0xff]
        %v616 = vld [vmem:[#allocation5 + $0x4d0] sm:$0xff]
        %v617 = vld [vmem:[#allocation5 + $0x4d8] sm:$0xff]
        %v618 = vld [vmem:[#allocation5 + $0x4e0] sm:$0xff]
        %v619 = vld [vmem:[#allocation5 + $0x4e8] sm:$0xff]
        %v620 = vld [vmem:[#allocation5 + $0x4f0] sm:$0xff]
        %v621 = vld [vmem:[#allocation5 + $0x4f8] sm:$0xff]
        %v622 = vld [vmem:[#allocation5 + $0x500] sm:$0xff]
        %v623 = vld [vmem:[#allocation5 + $0x508] sm:$0xff]
        %v624 = vld [vmem:[#allocation5 + $0x510] sm:$0xff]
        %v625 = vld [vmem:[#allocation5 + $0x518] sm:$0xff]
        %v626 = vld [vmem:[#allocation5 + $0x520] sm:$0xff]
        %v627 = vld [vmem:[#allocation5 + $0x528] sm:$0xff]
        %v628 = vld [vmem:[#allocation5 + $0x530] sm:$0xff]
        %v629 = vld [vmem:[#allocation5 + $0x538] sm:$0xff]
        %v630 = vld [vmem:[#allocation5 + $0x540] sm:$0xff]
        %v631 = vld [vmem:[#allocation5 + $0x548] sm:$0xff]
        %v632 = vld [vmem:[#allocation5 + $0x550] sm:$0xff]
        %v633 = vld [vmem:[#allocation5 + $0x558] sm:$0xff]
        %v634 = vld [vmem:[#allocation5 + $0x560] sm:$0xff]
        %v635 = vld [vmem:[#allocation5 + $0x568] sm:$0xff]
        %v636 = vld [vmem:[#allocation5 + $0x570] sm:$0xff]
        %v637 = vld [vmem:[#allocation5 + $0x578] sm:$0xff]
        %v638 = vld [vmem:[#allocation5 + $0x580] sm:$0xff]
        %v639 = vld [vmem:[#allocation5 + $0x588] sm:$0xff]
        %v640 = vld [vmem:[#allocation5 + $0x590] sm:$0xff]
        %v641 = vld [vmem:[#allocation5 + $0x598] sm:$0xff]
        %v642 = vld [vmem:[#allocation5 + $0x5a0] sm:$0xff]
        %v643 = vld [vmem:[#allocation5 + $0x5a8] sm:$0xff]
        %v644 = vld [vmem:[#allocation5 + $0x5b0] sm:$0xff]
        %v645 = vld [vmem:[#allocation5 + $0x5b8] sm:$0xff]
        %v646 = vld [vmem:[#allocation5 + $0x5c0] sm:$0xff]
        %v647 = vld [vmem:[#allocation5 + $0x5c8] sm:$0xff]
        %v648 = vld [vmem:[#allocation5 + $0x5d0] sm:$0xff]
        %v649 = vld [vmem:[#allocation5 + $0x5d8] sm:$0xff]
        %v650 = vld [vmem:[#allocation5 + $0x5e0] sm:$0xff]
        %v651 = vld [vmem:[#allocation5 + $0x5e8] sm:$0xff]
        %v652 = vld [vmem:[#allocation5 + $0x5f0] sm:$0xff]
        %v653 = vld [vmem:[#allocation5 + $0x5f8] sm:$0xff]
        %v654 = vld [vmem:[#allocation7] sm:$0xf]
        %v656 = vlaneseq
        %v657 = vshrl.u32 %v656, 7
        %v658 = vsub.s32 0, %v657
        %v659 = vrot.slane %v654, %v658
        %v660 = vlaneseq
        %v661 = vshrl.u32 %v660, 7
        %v662 = vsub.s32 1, %v661
        %v663 = vrot.slane %v654, %v662
        %v664 = vlaneseq
        %v665 = vshrl.u32 %v664, 7
        %v666 = vsub.s32 2, %v665
        %v667 = vrot.slane %v654, %v666
        %v668 = vlaneseq
        %v669 = vshrl.u32 %v668, 7
        %v670 = vsub.s32 3, %v669
        %v671 = vrot.slane %v654, %v670
        %v868 = vunpack.c.l.b16 %v462
        %v869 = vunpack.c.h.b16 %v462
        %v870 = vunpack.c.l.b16 %v463
        %v871 = vunpack.c.h.b16 %v463
        %v872 = vunpack.c.l.b16 %v464
        %v873 = vunpack.c.h.b16 %v464
        %v874 = vunpack.c.l.b16 %v465
        %v875 = vunpack.c.h.b16 %v465
        %v876 = vunpack.c.l.b16 %v466
        %v877 = vunpack.c.h.b16 %v466
        %v878 = vunpack.c.l.b16 %v467
        %v879 = vunpack.c.h.b16 %v467
        %v880 = vunpack.c.l.b16 %v468
        %v881 = vunpack.c.h.b16 %v468
        %v882 = vunpack.c.l.b16 %v469
        %v883 = vunpack.c.h.b16 %v469
        %v884 = vunpack.c.l.b16 %v470
        %v885 = vunpack.c.h.b16 %v470
        %v886 = vunpack.c.l.b16 %v471
        %v887 = vunpack.c.h.b16 %v471
        %v888 = vunpack.c.l.b16 %v472
        %v889 = vunpack.c.h.b16 %v472
        %v890 = vunpack.c.l.b16 %v473
        %v891 = vunpack.c.h.b16 %v473
        %v892 = vunpack.c.l.b16 %v474
        %v893 = vunpack.c.h.b16 %v474
        %v894 = vunpack.c.l.b16 %v475
        %v895 = vunpack.c.h.b16 %v475
        %v896 = vunpack.c.l.b16 %v476
        %v897 = vunpack.c.h.b16 %v476
        %v898 = vunpack.c.l.b16 %v477
        %v899 = vunpack.c.h.b16 %v477
        %v900 = vunpack.c.l.b16 %v478
        %v901 = vunpack.c.h.b16 %v478
        %v902 = vunpack.c.l.b16 %v479
        %v903 = vunpack.c.h.b16 %v479
        %v904 = vunpack.c.l.b16 %v480
        %v905 = vunpack.c.h.b16 %v480
        %v906 = vunpack.c.l.b16 %v481
        %v907 = vunpack.c.h.b16 %v481
        %v908 = vunpack.c.l.b16 %v482
        %v909 = vunpack.c.h.b16 %v482
        %v910 = vunpack.c.l.b16 %v483
        %v911 = vunpack.c.h.b16 %v483
        %v912 = vunpack.c.l.b16 %v484
        %v913 = vunpack.c.h.b16 %v484
        %v914 = vunpack.c.l.b16 %v485
        %v915 = vunpack.c.h.b16 %v485
        %v916 = vunpack.c.l.b16 %v486
        %v917 = vunpack.c.h.b16 %v486
        %v918 = vunpack.c.l.b16 %v487
        %v919 = vunpack.c.h.b16 %v487
        %v920 = vunpack.c.l.b16 %v488
        %v921 = vunpack.c.h.b16 %v488
        %v922 = vunpack.c.l.b16 %v489
        %v923 = vunpack.c.h.b16 %v489
        %v924 = vunpack.c.l.b16 %v490
        %v925 = vunpack.c.h.b16 %v490
        %v926 = vunpack.c.l.b16 %v491
        %v927 = vunpack.c.h.b16 %v491
        %v928 = vunpack.c.l.b16 %v492
        %v929 = vunpack.c.h.b16 %v492
        %v930 = vunpack.c.l.b16 %v493
        %v931 = vunpack.c.h.b16 %v493
        %v932 = vunpack.c.l.b16 %v494
        %v933 = vunpack.c.h.b16 %v494
        %v934 = vunpack.c.l.b16 %v495
        %v935 = vunpack.c.h.b16 %v495
        %v936 = vunpack.c.l.b16 %v496
        %v937 = vunpack.c.h.b16 %v496
        %v938 = vunpack.c.l.b16 %v497
        %v939 = vunpack.c.h.b16 %v497
        %v940 = vunpack.c.l.b16 %v498
        %v941 = vunpack.c.h.b16 %v498
        %v942 = vunpack.c.l.b16 %v499
        %v943 = vunpack.c.h.b16 %v499
        %v944 = vunpack.c.l.b16 %v500
        %v945 = vunpack.c.h.b16 %v500
        %v946 = vunpack.c.l.b16 %v501
        %v947 = vunpack.c.h.b16 %v501
        %v948 = vunpack.c.l.b16 %v502
        %v949 = vunpack.c.h.b16 %v502
        %v950 = vunpack.c.l.b16 %v503
        %v951 = vunpack.c.h.b16 %v503
        %v952 = vunpack.c.l.b16 %v504
        %v953 = vunpack.c.h.b16 %v504
        %v954 = vunpack.c.l.b16 %v505
        %v955 = vunpack.c.h.b16 %v505
        %v956 = vunpack.c.l.b16 %v506
        %v957 = vunpack.c.h.b16 %v506
        %v958 = vunpack.c.l.b16 %v507
        %v959 = vunpack.c.h.b16 %v507
        %v960 = vunpack.c.l.b16 %v508
        %v961 = vunpack.c.h.b16 %v508
        %v962 = vunpack.c.l.b16 %v509
        %v963 = vunpack.c.h.b16 %v509
        %v964 = vunpack.c.l.b16 %v510
        %v965 = vunpack.c.h.b16 %v510
        %v966 = vunpack.c.l.b16 %v511
        %v967 = vunpack.c.h.b16 %v511
        %v968 = vunpack.c.l.b16 %v512
        %v969 = vunpack.c.h.b16 %v512
        %v970 = vunpack.c.l.b16 %v513
        %v971 = vunpack.c.h.b16 %v513
        %v972 = vunpack.c.l.b16 %v514
        %v973 = vunpack.c.h.b16 %v514
        %v974 = vunpack.c.l.b16 %v515
        %v975 = vunpack.c.h.b16 %v515
        %v976 = vunpack.c.l.b16 %v516
        %v977 = vunpack.c.h.b16 %v516
        %v978 = vunpack.c.l.b16 %v517
        %v979 = vunpack.c.h.b16 %v517
        %v980 = vunpack.c.l.b16 %v518
        %v981 = vunpack.c.h.b16 %v518
        %v982 = vunpack.c.l.b16 %v519
        %v983 = vunpack.c.h.b16 %v519
        %v984 = vunpack.c.l.b16 %v520
        %v985 = vunpack.c.h.b16 %v520
        %v986 = vunpack.c.l.b16 %v521
        %v987 = vunpack.c.h.b16 %v521
        %v988 = vunpack.c.l.b16 %v522
        %v989 = vunpack.c.h.b16 %v522
        %v990 = vunpack.c.l.b16 %v523
        %v991 = vunpack.c.h.b16 %v523
        %v992 = vunpack.c.l.b16 %v524
        %v993 = vunpack.c.h.b16 %v524
        %v994 = vunpack.c.l.b16 %v525
        %v995 = vunpack.c.h.b16 %v525
        %v996 = vunpack.c.l.b16 %v526
        %v997 = vunpack.c.h.b16 %v526
        %v998 = vunpack.c.l.b16 %v527
        %v999 = vunpack.c.h.b16 %v527
        %v1000 = vunpack.c.l.b16 %v528
        %v1001 = vunpack.c.h.b16 %v528
        %v1002 = vunpack.c.l.b16 %v529
        %v1003 = vunpack.c.h.b16 %v529
        %v1004 = vunpack.c.l.b16 %v530
        %v1005 = vunpack.c.h.b16 %v530
        %v1006 = vunpack.c.l.b16 %v531
        %v1007 = vunpack.c.h.b16 %v531
        %v1008 = vunpack.c.l.b16 %v532
        %v1009 = vunpack.c.h.b16 %v532
        %v1010 = vunpack.c.l.b16 %v533
        %v1011 = vunpack.c.h.b16 %v533
        %v1012 = vunpack.c.l.b16 %v534
        %v1013 = vunpack.c.h.b16 %v534
        %v1014 = vunpack.c.l.b16 %v535
        %v1015 = vunpack.c.h.b16 %v535
        %v1016 = vunpack.c.l.b16 %v536
        %v1017 = vunpack.c.h.b16 %v536
        %v1018 = vunpack.c.l.b16 %v537
        %v1019 = vunpack.c.h.b16 %v537
        %v1020 = vunpack.c.l.b16 %v538
        %v1021 = vunpack.c.h.b16 %v538
        %v1022 = vunpack.c.l.b16 %v539
        %v1023 = vunpack.c.h.b16 %v539
        %v1024 = vunpack.c.l.b16 %v540
        %v1025 = vunpack.c.h.b16 %v540
        %v1026 = vunpack.c.l.b16 %v541
        %v1027 = vunpack.c.h.b16 %v541
        %v1028 = vunpack.c.l.b16 %v542
        %v1029 = vunpack.c.h.b16 %v542
        %v1030 = vunpack.c.l.b16 %v543
        %v1031 = vunpack.c.h.b16 %v543
        %v1032 = vunpack.c.l.b16 %v544
        %v1033 = vunpack.c.h.b16 %v544
        %v1034 = vunpack.c.l.b16 %v545
        %v1035 = vunpack.c.h.b16 %v545
        %v1036 = vunpack.c.l.b16 %v546
        %v1037 = vunpack.c.h.b16 %v546
        %v1038 = vunpack.c.l.b16 %v547
        %v1039 = vunpack.c.h.b16 %v547
        %v1040 = vunpack.c.l.b16 %v548
        %v1041 = vunpack.c.h.b16 %v548
        %v1042 = vunpack.c.l.b16 %v549
        %v1043 = vunpack.c.h.b16 %v549
        %v1044 = vunpack.c.l.b16 %v550
        %v1045 = vunpack.c.h.b16 %v550
        %v1046 = vunpack.c.l.b16 %v551
        %v1047 = vunpack.c.h.b16 %v551
        %v1048 = vunpack.c.l.b16 %v552
        %v1049 = vunpack.c.h.b16 %v552
        %v1050 = vunpack.c.l.b16 %v553
        %v1051 = vunpack.c.h.b16 %v553
        %v1052 = vunpack.c.l.b16 %v554
        %v1053 = vunpack.c.h.b16 %v554
        %v1054 = vunpack.c.l.b16 %v555
        %v1055 = vunpack.c.h.b16 %v555
        %v1056 = vunpack.c.l.b16 %v556
        %v1057 = vunpack.c.h.b16 %v556
        %v1058 = vunpack.c.l.b16 %v557
        %v1059 = vunpack.c.h.b16 %v557
        %v1060 = vunpack.c.l.b16 %v558
        %v1061 = vunpack.c.h.b16 %v558
        %v1062 = vunpack.c.l.b16 %v559
        %v1063 = vunpack.c.h.b16 %v559
        %v1064 = vunpack.c.l.b16 %v560
        %v1065 = vunpack.c.h.b16 %v560
        %v1066 = vunpack.c.l.b16 %v561
        %v1067 = vunpack.c.h.b16 %v561
        %v1068 = vunpack.c.l.b16 %v562
        %v1069 = vunpack.c.h.b16 %v562
        %v1070 = vunpack.c.l.b16 %v563
        %v1071 = vunpack.c.h.b16 %v563
        %v1072 = vunpack.c.l.b16 %v564
        %v1073 = vunpack.c.h.b16 %v564
        %v1074 = vunpack.c.l.b16 %v565
        %v1075 = vunpack.c.h.b16 %v565
        %v1076 = vunpack.c.l.b16 %v566
        %v1077 = vunpack.c.h.b16 %v566
        %v1078 = vunpack.c.l.b16 %v567
        %v1079 = vunpack.c.h.b16 %v567
        %v1080 = vunpack.c.l.b16 %v568
        %v1081 = vunpack.c.h.b16 %v568
        %v1082 = vunpack.c.l.b16 %v569
        %v1083 = vunpack.c.h.b16 %v569
        %v1084 = vunpack.c.l.b16 %v570
        %v1085 = vunpack.c.h.b16 %v570
        %v1086 = vunpack.c.l.b16 %v571
        %v1087 = vunpack.c.h.b16 %v571
        %v1088 = vunpack.c.l.b16 %v572
        %v1089 = vunpack.c.h.b16 %v572
        %v1090 = vunpack.c.l.b16 %v573
        %v1091 = vunpack.c.h.b16 %v573
        %v1092 = vunpack.c.l.b16 %v574
        %v1093 = vunpack.c.h.b16 %v574
        %v1094 = vunpack.c.l.b16 %v575
        %v1095 = vunpack.c.h.b16 %v575
        %v1096 = vunpack.c.l.b16 %v576
        %v1097 = vunpack.c.h.b16 %v576
        %v1098 = vunpack.c.l.b16 %v577
        %v1099 = vunpack.c.h.b16 %v577
        %v1100 = vunpack.c.l.b16 %v578
        %v1101 = vunpack.c.h.b16 %v578
        %v1102 = vunpack.c.l.b16 %v579
        %v1103 = vunpack.c.h.b16 %v579
        %v1104 = vunpack.c.l.b16 %v580
        %v1105 = vunpack.c.h.b16 %v580
        %v1106 = vunpack.c.l.b16 %v581
        %v1107 = vunpack.c.h.b16 %v581
        %v1108 = vunpack.c.l.b16 %v582
        %v1109 = vunpack.c.h.b16 %v582
        %v1110 = vunpack.c.l.b16 %v583
        %v1111 = vunpack.c.h.b16 %v583
        %v1112 = vunpack.c.l.b16 %v584
        %v1113 = vunpack.c.h.b16 %v584
        %v1114 = vunpack.c.l.b16 %v585
        %v1115 = vunpack.c.h.b16 %v585
        %v1116 = vunpack.c.l.b16 %v586
        %v1117 = vunpack.c.h.b16 %v586
        %v1118 = vunpack.c.l.b16 %v587
        %v1119 = vunpack.c.h.b16 %v587
        %v1120 = vunpack.c.l.b16 %v588
        %v1121 = vunpack.c.h.b16 %v588
        %v1122 = vunpack.c.l.b16 %v589
        %v1123 = vunpack.c.h.b16 %v589
        %v1124 = vunpack.c.l.b16 %v590
        %v1125 = vunpack.c.h.b16 %v590
        %v1126 = vunpack.c.l.b16 %v591
        %v1127 = vunpack.c.h.b16 %v591
        %v1128 = vunpack.c.l.b16 %v592
        %v1129 = vunpack.c.h.b16 %v592
        %v1130 = vunpack.c.l.b16 %v593
        %v1131 = vunpack.c.h.b16 %v593
        %v1132 = vunpack.c.l.b16 %v594
        %v1133 = vunpack.c.h.b16 %v594
        %v1134 = vunpack.c.l.b16 %v595
        %v1135 = vunpack.c.h.b16 %v595
        %v1136 = vunpack.c.l.b16 %v596
        %v1137 = vunpack.c.h.b16 %v596
        %v1138 = vunpack.c.l.b16 %v597
        %v1139 = vunpack.c.h.b16 %v597
        %v1140 = vunpack.c.l.b16 %v598
        %v1141 = vunpack.c.h.b16 %v598
        %v1142 = vunpack.c.l.b16 %v599
        %v1143 = vunpack.c.h.b16 %v599
        %v1144 = vunpack.c.l.b16 %v600
        %v1145 = vunpack.c.h.b16 %v600
        %v1146 = vunpack.c.l.b16 %v601
        %v1147 = vunpack.c.h.b16 %v601
        %v1148 = vunpack.c.l.b16 %v602
        %v1149 = vunpack.c.h.b16 %v602
        %v1150 = vunpack.c.l.b16 %v603
        %v1151 = vunpack.c.h.b16 %v603
        %v1152 = vunpack.c.l.b16 %v604
        %v1153 = vunpack.c.h.b16 %v604
        %v1154 = vunpack.c.l.b16 %v605
        %v1155 = vunpack.c.h.b16 %v605
        %v1156 = vunpack.c.l.b16 %v606
        %v1157 = vunpack.c.h.b16 %v606
        %v1158 = vunpack.c.l.b16 %v607
        %v1159 = vunpack.c.h.b16 %v607
        %v1160 = vunpack.c.l.b16 %v608
        %v1161 = vunpack.c.h.b16 %v608
        %v1162 = vunpack.c.l.b16 %v609
        %v1163 = vunpack.c.h.b16 %v609
        %v1164 = vunpack.c.l.b16 %v610
        %v1165 = vunpack.c.h.b16 %v610
        %v1166 = vunpack.c.l.b16 %v611
        %v1167 = vunpack.c.h.b16 %v611
        %v1168 = vunpack.c.l.b16 %v612
        %v1169 = vunpack.c.h.b16 %v612
        %v1170 = vunpack.c.l.b16 %v613
        %v1171 = vunpack.c.h.b16 %v613
        %v1172 = vunpack.c.l.b16 %v614
        %v1173 = vunpack.c.h.b16 %v614
        %v1174 = vunpack.c.l.b16 %v615
        %v1175 = vunpack.c.h.b16 %v615
        %v1176 = vunpack.c.l.b16 %v616
        %v1177 = vunpack.c.h.b16 %v616
        %v1178 = vunpack.c.l.b16 %v617
        %v1179 = vunpack.c.h.b16 %v617
        %v1180 = vunpack.c.l.b16 %v618
        %v1181 = vunpack.c.h.b16 %v618
        %v1182 = vunpack.c.l.b16 %v619
        %v1183 = vunpack.c.h.b16 %v619
        %v1184 = vunpack.c.l.b16 %v620
        %v1185 = vunpack.c.h.b16 %v620
        %v1186 = vunpack.c.l.b16 %v621
        %v1187 = vunpack.c.h.b16 %v621
        %v1188 = vunpack.c.l.b16 %v622
        %v1189 = vunpack.c.h.b16 %v622
        %v1190 = vunpack.c.l.b16 %v623
        %v1191 = vunpack.c.h.b16 %v623
        %v1192 = vunpack.c.l.b16 %v624
        %v1193 = vunpack.c.h.b16 %v624
        %v1194 = vunpack.c.l.b16 %v625
        %v1195 = vunpack.c.h.b16 %v625
        %v1196 = vunpack.c.l.b16 %v626
        %v1197 = vunpack.c.h.b16 %v626
        %v1198 = vunpack.c.l.b16 %v627
        %v1199 = vunpack.c.h.b16 %v627
        %v1200 = vunpack.c.l.b16 %v628
        %v1201 = vunpack.c.h.b16 %v628
        %v1202 = vunpack.c.l.b16 %v629
        %v1203 = vunpack.c.h.b16 %v629
        %v1204 = vunpack.c.l.b16 %v630
        %v1205 = vunpack.c.h.b16 %v630
        %v1206 = vunpack.c.l.b16 %v631
        %v1207 = vunpack.c.h.b16 %v631
        %v1208 = vunpack.c.l.b16 %v632
        %v1209 = vunpack.c.h.b16 %v632
        %v1210 = vunpack.c.l.b16 %v633
        %v1211 = vunpack.c.h.b16 %v633
        %v1212 = vunpack.c.l.b16 %v634
        %v1213 = vunpack.c.h.b16 %v634
        %v1214 = vunpack.c.l.b16 %v635
        %v1215 = vunpack.c.h.b16 %v635
        %v1216 = vunpack.c.l.b16 %v636
        %v1217 = vunpack.c.h.b16 %v636
        %v1218 = vunpack.c.l.b16 %v637
        %v1219 = vunpack.c.h.b16 %v637
        %v1220 = vunpack.c.l.b16 %v638
        %v1221 = vunpack.c.h.b16 %v638
        %v1222 = vunpack.c.l.b16 %v639
        %v1223 = vunpack.c.h.b16 %v639
        %v1224 = vunpack.c.l.b16 %v640
        %v1225 = vunpack.c.h.b16 %v640
        %v1226 = vunpack.c.l.b16 %v641
        %v1227 = vunpack.c.h.b16 %v641
        %v1228 = vunpack.c.l.b16 %v642
        %v1229 = vunpack.c.h.b16 %v642
        %v1230 = vunpack.c.l.b16 %v643
        %v1231 = vunpack.c.h.b16 %v643
        %v1232 = vunpack.c.l.b16 %v644
        %v1233 = vunpack.c.h.b16 %v644
        %v1234 = vunpack.c.l.b16 %v645
        %v1235 = vunpack.c.h.b16 %v645
        %v1236 = vunpack.c.l.b16 %v646
        %v1237 = vunpack.c.h.b16 %v646
        %v1238 = vunpack.c.l.b16 %v647
        %v1239 = vunpack.c.h.b16 %v647
        %v1240 = vunpack.c.l.b16 %v648
        %v1241 = vunpack.c.h.b16 %v648
        %v1242 = vunpack.c.l.b16 %v649
        %v1243 = vunpack.c.h.b16 %v649
        %v1244 = vunpack.c.l.b16 %v650
        %v1245 = vunpack.c.h.b16 %v650
        %v1246 = vunpack.c.l.b16 %v651
        %v1247 = vunpack.c.h.b16 %v651
        %v1248 = vunpack.c.l.b16 %v652
        %v1249 = vunpack.c.h.b16 %v652
        %v1250 = vunpack.c.l.b16 %v653
        %v1251 = vunpack.c.h.b16 %v653
        %v1252 = vpack.c.b16 %v872, %v868
        %v1253 = vpack.c.b16 %v873, %v869
        %v1254 = vpack.c.b16 %v874, %v870
        %v1255 = vpack.c.b16 %v875, %v871
        %v1256 = vpack.c.b16 %v880, %v876
        %v1257 = vpack.c.b16 %v881, %v877
        %v1258 = vpack.c.b16 %v882, %v878
        %v1259 = vpack.c.b16 %v883, %v879
        %v1260 = vpack.c.b16 %v888, %v884
        %v1261 = vpack.c.b16 %v889, %v885
        %v1262 = vpack.c.b16 %v890, %v886
        %v1263 = vpack.c.b16 %v891, %v887
        %v1264 = vpack.c.b16 %v896, %v892
        %v1265 = vpack.c.b16 %v897, %v893
        %v1266 = vpack.c.b16 %v898, %v894
        %v1267 = vpack.c.b16 %v899, %v895
        %v1268 = vpack.c.b16 %v904, %v900
        %v1269 = vpack.c.b16 %v905, %v901
        %v1270 = vpack.c.b16 %v906, %v902
        %v1271 = vpack.c.b16 %v907, %v903
        %v1272 = vpack.c.b16 %v912, %v908
        %v1273 = vpack.c.b16 %v913, %v909
        %v1274 = vpack.c.b16 %v914, %v910
        %v1275 = vpack.c.b16 %v915, %v911
        %v1276 = vpack.c.b16 %v920, %v916
        %v1277 = vpack.c.b16 %v921, %v917
        %v1278 = vpack.c.b16 %v922, %v918
        %v1279 = vpack.c.b16 %v923, %v919
        %v1280 = vpack.c.b16 %v928, %v924
        %v1281 = vpack.c.b16 %v929, %v925
        %v1282 = vpack.c.b16 %v930, %v926
        %v1283 = vpack.c.b16 %v931, %v927
        %v1284 = vpack.c.b16 %v936, %v932
        %v1285 = vpack.c.b16 %v937, %v933
        %v1286 = vpack.c.b16 %v938, %v934
        %v1287 = vpack.c.b16 %v939, %v935
        %v1288 = vpack.c.b16 %v944, %v940
        %v1289 = vpack.c.b16 %v945, %v941
        %v1290 = vpack.c.b16 %v946, %v942
        %v1291 = vpack.c.b16 %v947, %v943
        %v1292 = vpack.c.b16 %v952, %v948
        %v1293 = vpack.c.b16 %v953, %v949
        %v1294 = vpack.c.b16 %v954, %v950
        %v1295 = vpack.c.b16 %v955, %v951
        %v1296 = vpack.c.b16 %v960, %v956
        %v1297 = vpack.c.b16 %v961, %v957
        %v1298 = vpack.c.b16 %v962, %v958
        %v1299 = vpack.c.b16 %v963, %v959
        %v1300 = vpack.c.b16 %v968, %v964
        %v1301 = vpack.c.b16 %v969, %v965
        %v1302 = vpack.c.b16 %v970, %v966
        %v1303 = vpack.c.b16 %v971, %v967
        %v1304 = vpack.c.b16 %v976, %v972
        %v1305 = vpack.c.b16 %v977, %v973
        %v1306 = vpack.c.b16 %v978, %v974
        %v1307 = vpack.c.b16 %v979, %v975
        %v1308 = vpack.c.b16 %v984, %v980
        %v1309 = vpack.c.b16 %v985, %v981
        %v1310 = vpack.c.b16 %v986, %v982
        %v1311 = vpack.c.b16 %v987, %v983
        %v1312 = vpack.c.b16 %v992, %v988
        %v1313 = vpack.c.b16 %v993, %v989
        %v1314 = vpack.c.b16 %v994, %v990
        %v1315 = vpack.c.b16 %v995, %v991
        %v1316 = vpack.c.b16 %v1000, %v996
        %v1317 = vpack.c.b16 %v1001, %v997
        %v1318 = vpack.c.b16 %v1002, %v998
        %v1319 = vpack.c.b16 %v1003, %v999
        %v1320 = vpack.c.b16 %v1008, %v1004
        %v1321 = vpack.c.b16 %v1009, %v1005
        %v1322 = vpack.c.b16 %v1010, %v1006
        %v1323 = vpack.c.b16 %v1011, %v1007
        %v1324 = vpack.c.b16 %v1016, %v1012
        %v1325 = vpack.c.b16 %v1017, %v1013
        %v1326 = vpack.c.b16 %v1018, %v1014
        %v1327 = vpack.c.b16 %v1019, %v1015
        %v1328 = vpack.c.b16 %v1024, %v1020
        %v1329 = vpack.c.b16 %v1025, %v1021
        %v1330 = vpack.c.b16 %v1026, %v1022
        %v1331 = vpack.c.b16 %v1027, %v1023
        %v1332 = vpack.c.b16 %v1032, %v1028
        %v1333 = vpack.c.b16 %v1033, %v1029
        %v1334 = vpack.c.b16 %v1034, %v1030
        %v1335 = vpack.c.b16 %v1035, %v1031
        %v1336 = vpack.c.b16 %v1040, %v1036
        %v1337 = vpack.c.b16 %v1041, %v1037
        %v1338 = vpack.c.b16 %v1042, %v1038
        %v1339 = vpack.c.b16 %v1043, %v1039
        %v1340 = vpack.c.b16 %v1048, %v1044
        %v1341 = vpack.c.b16 %v1049, %v1045
        %v1342 = vpack.c.b16 %v1050, %v1046
        %v1343 = vpack.c.b16 %v1051, %v1047
        %v1344 = vpack.c.b16 %v1056, %v1052
        %v1345 = vpack.c.b16 %v1057, %v1053
        %v1346 = vpack.c.b16 %v1058, %v1054
        %v1347 = vpack.c.b16 %v1059, %v1055
        %v1348 = vpack.c.b16 %v1064, %v1060
        %v1349 = vpack.c.b16 %v1065, %v1061
        %v1350 = vpack.c.b16 %v1066, %v1062
        %v1351 = vpack.c.b16 %v1067, %v1063
        %v1352 = vpack.c.b16 %v1072, %v1068
        %v1353 = vpack.c.b16 %v1073, %v1069
        %v1354 = vpack.c.b16 %v1074, %v1070
        %v1355 = vpack.c.b16 %v1075, %v1071
        %v1356 = vpack.c.b16 %v1080, %v1076
        %v1357 = vpack.c.b16 %v1081, %v1077
        %v1358 = vpack.c.b16 %v1082, %v1078
        %v1359 = vpack.c.b16 %v1083, %v1079
        %v1360 = vpack.c.b16 %v1088, %v1084
        %v1361 = vpack.c.b16 %v1089, %v1085
        %v1362 = vpack.c.b16 %v1090, %v1086
        %v1363 = vpack.c.b16 %v1091, %v1087
        %v1364 = vpack.c.b16 %v1096, %v1092
        %v1365 = vpack.c.b16 %v1097, %v1093
        %v1366 = vpack.c.b16 %v1098, %v1094
        %v1367 = vpack.c.b16 %v1099, %v1095
        %v1368 = vpack.c.b16 %v1104, %v1100
        %v1369 = vpack.c.b16 %v1105, %v1101
        %v1370 = vpack.c.b16 %v1106, %v1102
        %v1371 = vpack.c.b16 %v1107, %v1103
        %v1372 = vpack.c.b16 %v1112, %v1108
        %v1373 = vpack.c.b16 %v1113, %v1109
        %v1374 = vpack.c.b16 %v1114, %v1110
        %v1375 = vpack.c.b16 %v1115, %v1111
        %v1376 = vpack.c.b16 %v1120, %v1116
        %v1377 = vpack.c.b16 %v1121, %v1117
        %v1378 = vpack.c.b16 %v1122, %v1118
        %v1379 = vpack.c.b16 %v1123, %v1119
        %v1380 = vpack.c.b16 %v1128, %v1124
        %v1381 = vpack.c.b16 %v1129, %v1125
        %v1382 = vpack.c.b16 %v1130, %v1126
        %v1383 = vpack.c.b16 %v1131, %v1127
        %v1384 = vpack.c.b16 %v1136, %v1132
        %v1385 = vpack.c.b16 %v1137, %v1133
        %v1386 = vpack.c.b16 %v1138, %v1134
        %v1387 = vpack.c.b16 %v1139, %v1135
        %v1388 = vpack.c.b16 %v1144, %v1140
        %v1389 = vpack.c.b16 %v1145, %v1141
        %v1390 = vpack.c.b16 %v1146, %v1142
        %v1391 = vpack.c.b16 %v1147, %v1143
        %v1392 = vpack.c.b16 %v1152, %v1148
        %v1393 = vpack.c.b16 %v1153, %v1149
        %v1394 = vpack.c.b16 %v1154, %v1150
        %v1395 = vpack.c.b16 %v1155, %v1151
        %v1396 = vpack.c.b16 %v1160, %v1156
        %v1397 = vpack.c.b16 %v1161, %v1157
        %v1398 = vpack.c.b16 %v1162, %v1158
        %v1399 = vpack.c.b16 %v1163, %v1159
        %v1400 = vpack.c.b16 %v1168, %v1164
        %v1401 = vpack.c.b16 %v1169, %v1165
        %v1402 = vpack.c.b16 %v1170, %v1166
        %v1403 = vpack.c.b16 %v1171, %v1167
        %v1404 = vpack.c.b16 %v1176, %v1172
        %v1405 = vpack.c.b16 %v1177, %v1173
        %v1406 = vpack.c.b16 %v1178, %v1174
        %v1407 = vpack.c.b16 %v1179, %v1175
        %v1408 = vpack.c.b16 %v1184, %v1180
        %v1409 = vpack.c.b16 %v1185, %v1181
        %v1410 = vpack.c.b16 %v1186, %v1182
        %v1411 = vpack.c.b16 %v1187, %v1183
        %v1412 = vpack.c.b16 %v1192, %v1188
        %v1413 = vpack.c.b16 %v1193, %v1189
        %v1414 = vpack.c.b16 %v1194, %v1190
        %v1415 = vpack.c.b16 %v1195, %v1191
        %v1416 = vpack.c.b16 %v1200, %v1196
        %v1417 = vpack.c.b16 %v1201, %v1197
        %v1418 = vpack.c.b16 %v1202, %v1198
        %v1419 = vpack.c.b16 %v1203, %v1199
        %v1420 = vpack.c.b16 %v1208, %v1204
        %v1421 = vpack.c.b16 %v1209, %v1205
        %v1422 = vpack.c.b16 %v1210, %v1206
        %v1423 = vpack.c.b16 %v1211, %v1207
        %v1424 = vpack.c.b16 %v1216, %v1212
        %v1425 = vpack.c.b16 %v1217, %v1213
        %v1426 = vpack.c.b16 %v1218, %v1214
        %v1427 = vpack.c.b16 %v1219, %v1215
        %v1428 = vpack.c.b16 %v1224, %v1220
        %v1429 = vpack.c.b16 %v1225, %v1221
        %v1430 = vpack.c.b16 %v1226, %v1222
        %v1431 = vpack.c.b16 %v1227, %v1223
        %v1432 = vpack.c.b16 %v1232, %v1228
        %v1433 = vpack.c.b16 %v1233, %v1229
        %v1434 = vpack.c.b16 %v1234, %v1230
        %v1435 = vpack.c.b16 %v1235, %v1231
        %v1436 = vpack.c.b16 %v1240, %v1236
        %v1437 = vpack.c.b16 %v1241, %v1237
        %v1438 = vpack.c.b16 %v1242, %v1238
        %v1439 = vpack.c.b16 %v1243, %v1239
        %v1440 = vpack.c.b16 %v1248, %v1244
        %v1441 = vpack.c.b16 %v1249, %v1245
        %v1442 = vpack.c.b16 %v1250, %v1246
        %v1443 = vpack.c.b16 %v1251, %v1247
        %1636 = vmatprep.subr.bf16.mxu0 %v1253
        %1637 = vmatpush1.bf16.msra.mxu0 %v1252
        %1638 = vmatprep.subr.bf16.mxu0 %v1257
        %1639 = vmatpush1.bf16.msra.mxu0 %v1256
        %1640 = vmatprep.subr.bf16.mxu0 %v1261
        %1641 = vmatpush1.bf16.msra.mxu0 %v1260
        %1642 = vmatprep.subr.bf16.mxu0 %v1265
        %1643 = vmatpush1.bf16.msra.mxu0 %v1264
        %1644 = vmatprep.subr.bf16.mxu0 %v1269
        %1645 = vmatpush1.bf16.msra.mxu0 %v1268
        %1646 = vmatprep.subr.bf16.mxu0 %v1273
        %1647 = vmatpush1.bf16.msra.mxu0 %v1272
        %1648 = vmatprep.subr.bf16.mxu0 %v1277
        %1649 = vmatpush1.bf16.msra.mxu0 %v1276
        %1650 = vmatprep.subr.bf16.mxu0 %v1281
        %1651 = vmatpush1.bf16.msra.mxu0 %v1280
        %1652 = vmatprep.subr.bf16.mxu0 %v1285
        %1653 = vmatpush1.bf16.msra.mxu0 %v1284
        %1654 = vmatprep.subr.bf16.mxu0 %v1289
        %1655 = vmatpush1.bf16.msra.mxu0 %v1288
        %1656 = vmatprep.subr.bf16.mxu0 %v1293
        %1657 = vmatpush1.bf16.msra.mxu0 %v1292
        %1658 = vmatprep.subr.bf16.mxu0 %v1297
        %1659 = vmatpush1.bf16.msra.mxu0 %v1296
        %1660 = vmatprep.subr.bf16.mxu0 %v1301
        %1661 = vmatpush1.bf16.msra.mxu0 %v1300
        %1662 = vmatprep.subr.bf16.mxu0 %v1305
        %1663 = vmatpush1.bf16.msra.mxu0 %v1304
        %1664 = vmatprep.subr.bf16.mxu0 %v1309
        %1665 = vmatpush1.bf16.msra.mxu0 %v1308
        %1666 = vmatprep.subr.bf16.mxu0 %v1313
        %1667 = vmatpush1.bf16.msra.mxu0 %v1312
        %1668 = vmatprep.mubr.bf16.mxu0 %v451
        %1669 = vmatmul.mubr.bf16.gmra.mrb[0].mxu0 %v450
        %v1670 = vpop.f32.mrb[0].mxu0
        %v1671 = vadd.f32 %v659, %v1670
        %v1672 = vpop.f32.mrb[0].mxu0
        %v1673 = vadd.f32 %v663, %v1672
        %v1674 = vpop.f32.mrb[0].mxu0
        %v1675 = vadd.f32 %v659, %v1674
        %v1676 = vpop.f32.mrb[0].mxu0
        %v1677 = vadd.f32 %v663, %v1676
        %1678 = vmatprep.mubr.bf16.mxu0 %v457
        %1679 = vmatmul.mubr.bf16.gmra.mrb[0].mxu0 %v456
        %v1680 = vpop.f32.mrb[0].mxu0
        %v1681 = vadd.f32 %v659, %v1680
        %v1682 = vpop.f32.mrb[0].mxu0
        %v1683 = vadd.f32 %v663, %v1682
        %v1684 = vpop.f32.mrb[0].mxu0
        %v1685 = vadd.f32 %v659, %v1684
        %v1686 = vpop.f32.mrb[0].mxu0
        %v1687 = vadd.f32 %v663, %v1686
        %1688 = vdwg.mxu0
        %1689 = vmatprep.subr.bf16.mxu0 %v1317
        %1690 = vmatpush1.bf16.msra.mxu0 %v1316
        %1691 = vmatprep.subr.bf16.mxu0 %v1321
        %1692 = vmatpush1.bf16.msra.mxu0 %v1320
        %1693 = vmatprep.subr.bf16.mxu0 %v1325
        %1694 = vmatpush1.bf16.msra.mxu0 %v1324
        %1695 = vmatprep.subr.bf16.mxu0 %v1329
        %1696 = vmatpush1.bf16.msra.mxu0 %v1328
        %1697 = vmatprep.subr.bf16.mxu0 %v1333
        %1698 = vmatpush1.bf16.msra.mxu0 %v1332
        %1699 = vmatprep.subr.bf16.mxu0 %v1337
        %1700 = vmatpush1.bf16.msra.mxu0 %v1336
        %1701 = vmatprep.subr.bf16.mxu0 %v1341
        %1702 = vmatpush1.bf16.msra.mxu0 %v1340
        %1703 = vmatprep.subr.bf16.mxu0 %v1345
        %1704 = vmatpush1.bf16.msra.mxu0 %v1344
        %1705 = vmatprep.subr.bf16.mxu0 %v1349
        %1706 = vmatpush1.bf16.msra.mxu0 %v1348
        %1707 = vmatprep.subr.bf16.mxu0 %v1353
        %1708 = vmatpush1.bf16.msra.mxu0 %v1352
        %1709 = vmatprep.subr.bf16.mxu0 %v1357
        %1710 = vmatpush1.bf16.msra.mxu0 %v1356
        %1711 = vmatprep.subr.bf16.mxu0 %v1361
        %1712 = vmatpush1.bf16.msra.mxu0 %v1360
        %1713 = vmatprep.subr.bf16.mxu0 %v1365
        %1714 = vmatpush1.bf16.msra.mxu0 %v1364
        %1715 = vmatprep.subr.bf16.mxu0 %v1369
        %1716 = vmatpush1.bf16.msra.mxu0 %v1368
        %1717 = vmatprep.subr.bf16.mxu0 %v1373
        %1718 = vmatpush1.bf16.msra.mxu0 %v1372
        %1719 = vmatprep.subr.bf16.mxu0 %v1377
        %1720 = vmatpush1.bf16.msra.mxu0 %v1376
        %1721 = vmatprep.mubr.bf16.mxu0 %v453
        %1722 = vmatmul.mubr.bf16.gmra.mrb[0].mxu0 %v452
        %v1723 = vpop.f32.mrb[0].mxu0
        %v1724 = vadd.f32 %v1671, %v1723
        %v1725 = vpop.f32.mrb[0].mxu0
        %v1726 = vadd.f32 %v1673, %v1725
        %v1727 = vpop.f32.mrb[0].mxu0
        %v1728 = vadd.f32 %v1675, %v1727
        %v1729 = vpop.f32.mrb[0].mxu0
        %v1730 = vadd.f32 %v1677, %v1729
        %1731 = vmatprep.mubr.bf16.mxu0 %v459
        %1732 = vmatmul.mubr.bf16.gmra.mrb[0].mxu0 %v458
        %v1733 = vpop.f32.mrb[0].mxu0
        %v1734 = vadd.f32 %v1681, %v1733
        %v1735 = vpop.f32.mrb[0].mxu0
        %v1736 = vadd.f32 %v1683, %v1735
        %v1737 = vpop.f32.mrb[0].mxu0
        %v1738 = vadd.f32 %v1685, %v1737
        %v1739 = vpop.f32.mrb[0].mxu0
        %v1740 = vadd.f32 %v1687, %v1739
        %1741 = vdwg.mxu0
        %1742 = vmatprep.subr.bf16.mxu0 %v1381
        %1743 = vmatpush1.bf16.msra.mxu0 %v1380
        %1744 = vmatprep.subr.bf16.mxu0 %v1385
        %1745 = vmatpush1.bf16.msra.mxu0 %v1384
        %1746 = vmatprep.subr.bf16.mxu0 %v1389
        %1747 = vmatpush1.bf16.msra.mxu0 %v1388
        %1748 = vmatprep.subr.bf16.mxu0 %v1393
        %1749 = vmatpush1.bf16.msra.mxu0 %v1392
        %1750 = vmatprep.subr.bf16.mxu0 %v1397
        %1751 = vmatpush1.bf16.msra.mxu0 %v1396
        %1752 = vmatprep.subr.bf16.mxu0 %v1401
        %1753 = vmatpush1.bf16.msra.mxu0 %v1400
        %1754 = vmatprep.subr.bf16.mxu0 %v1405
        %1755 = vmatpush1.bf16.msra.mxu0 %v1404
        %1756 = vmatprep.subr.bf16.mxu0 %v1409
        %1757 = vmatpush1.bf16.msra.mxu0 %v1408
        %1758 = vmatprep.subr.bf16.mxu0 %v1413
        %1759 = vmatpush1.bf16.msra.mxu0 %v1412
        %1760 = vmatprep.subr.bf16.mxu0 %v1417
        %1761 = vmatpush1.bf16.msra.mxu0 %v1416
        %1762 = vmatprep.subr.bf16.mxu0 %v1421
        %1763 = vmatpush1.bf16.msra.mxu0 %v1420
        %1764 = vmatprep.subr.bf16.mxu0 %v1425
        %1765 = vmatpush1.bf16.msra.mxu0 %v1424
        %1766 = vmatprep.subr.bf16.mxu0 %v1429
        %1767 = vmatpush1.bf16.msra.mxu0 %v1428
        %1768 = vmatprep.subr.bf16.mxu0 %v1433
        %1769 = vmatpush1.bf16.msra.mxu0 %v1432
        %1770 = vmatprep.subr.bf16.mxu0 %v1437
        %1771 = vmatpush1.bf16.msra.mxu0 %v1436
        %1772 = vmatprep.subr.bf16.mxu0 %v1441
        %1773 = vmatpush1.bf16.msra.mxu0 %v1440
        %1774 = vmatprep.mubr.bf16.mxu0 %v455
        %1775 = vmatmul.mubr.bf16.gmra.mrb[0].mxu0 %v454
        %v1776 = vpop.f32.mrb[0].mxu0
        %v1777 = vadd.f32 %v1724, %v1776
        %v1778 = vpop.f32.mrb[0].mxu0
        %v1779 = vadd.f32 %v1726, %v1778
        %v1780 = vpop.f32.mrb[0].mxu0
        %v1781 = vadd.f32 %v1728, %v1780
        %v1782 = vpop.f32.mrb[0].mxu0
        %v1783 = vadd.f32 %v1730, %v1782
        %1784 = vmatprep.mubr.bf16.mxu0 %v461
        %1785 = vmatmul.mubr.bf16.gmra.mrb[0].mxu0 %v460
        %v1786 = vpop.f32.mrb[0].mxu0
        %v1787 = vadd.f32 %v1734, %v1786
        %v1788 = vpop.f32.mrb[0].mxu0
        %v1789 = vadd.f32 %v1736, %v1788
        %v1790 = vpop.f32.mrb[0].mxu0
        %v1791 = vadd.f32 %v1738, %v1790
        %v1792 = vpop.f32.mrb[0].mxu0
        %v1793 = vadd.f32 %v1740, %v1792
        %1794 = vdwg.mxu0
        %1795 = vmatprep.subr.bf16.mxu0 %v1255
        %1796 = vmatpush1.bf16.msra.mxu0 %v1254
        %1797 = vmatprep.subr.bf16.mxu0 %v1259
        %1798 = vmatpush1.bf16.msra.mxu0 %v1258
        %1799 = vmatprep.subr.bf16.mxu0 %v1263
        %1800 = vmatpush1.bf16.msra.mxu0 %v1262
        %1801 = vmatprep.subr.bf16.mxu0 %v1267
        %1802 = vmatpush1.bf16.msra.mxu0 %v1266
        %1803 = vmatprep.subr.bf16.mxu0 %v1271
        %1804 = vmatpush1.bf16.msra.mxu0 %v1270
        %1805 = vmatprep.subr.bf16.mxu0 %v1275
        %1806 = vmatpush1.bf16.msra.mxu0 %v1274
        %1807 = vmatprep.subr.bf16.mxu0 %v1279
        %1808 = vmatpush1.bf16.msra.mxu0 %v1278
        %1809 = vmatprep.subr.bf16.mxu0 %v1283
        %1810 = vmatpush1.bf16.msra.mxu0 %v1282
        %1811 = vmatprep.subr.bf16.mxu0 %v1287
        %1812 = vmatpush1.bf16.msra.mxu0 %v1286
        %1813 = vmatprep.subr.bf16.mxu0 %v1291
        %1814 = vmatpush1.bf16.msra.mxu0 %v1290
        %1815 = vmatprep.subr.bf16.mxu0 %v1295
        %1816 = vmatpush1.bf16.msra.mxu0 %v1294
        %1817 = vmatprep.subr.bf16.mxu0 %v1299
        %1818 = vmatpush1.bf16.msra.mxu0 %v1298
        %1819 = vmatprep.subr.bf16.mxu0 %v1303
        %1820 = vmatpush1.bf16.msra.mxu0 %v1302
        %1821 = vmatprep.subr.bf16.mxu0 %v1307
        %1822 = vmatpush1.bf16.msra.mxu0 %v1306
        %1823 = vmatprep.subr.bf16.mxu0 %v1311
        %1824 = vmatpush1.bf16.msra.mxu0 %v1310
        %1825 = vmatprep.subr.bf16.mxu0 %v1315
        %1826 = vmatpush1.bf16.msra.mxu0 %v1314
        %1827 = vmatprep.mubr.bf16.mxu0 %v451
        %1828 = vmatmul.mubr.bf16.gmra.mrb[0].mxu0 %v450
        %v1829 = vpop.f32.mrb[0].mxu0
        %v1830 = vadd.f32 %v667, %v1829
        %v1831 = vpop.f32.mrb[0].mxu0
        %v1832 = vadd.f32 %v671, %v1831
        %v1833 = vpop.f32.mrb[0].mxu0
        %v1834 = vadd.f32 %v667, %v1833
        %v1835 = vpop.f32.mrb[0].mxu0
        %v1836 = vadd.f32 %v671, %v1835
        %1837 = vmatprep.mubr.bf16.mxu0 %v457
        %1838 = vmatmul.mubr.bf16.gmra.mrb[0].mxu0 %v456
        %v1839 = vpop.f32.mrb[0].mxu0
        %v1840 = vadd.f32 %v667, %v1839
        %v1841 = vpop.f32.mrb[0].mxu0
        %v1842 = vadd.f32 %v671, %v1841
        %v1843 = vpop.f32.mrb[0].mxu0
        %v1844 = vadd.f32 %v667, %v1843
        %v1845 = vpop.f32.mrb[0].mxu0
        %v1846 = vadd.f32 %v671, %v1845
        %1847 = vdwg.mxu0
        %1848 = vmatprep.subr.bf16.mxu0 %v1319
        %1849 = vmatpush1.bf16.msra.mxu0 %v1318
        %1850 = vmatprep.subr.bf16.mxu0 %v1323
        %1851 = vmatpush1.bf16.msra.mxu0 %v1322
        %1852 = vmatprep.subr.bf16.mxu0 %v1327
        %1853 = vmatpush1.bf16.msra.mxu0 %v1326
        %1854 = vmatprep.subr.bf16.mxu0 %v1331
        %1855 = vmatpush1.bf16.msra.mxu0 %v1330
        %1856 = vmatprep.subr.bf16.mxu0 %v1335
        %1857 = vmatpush1.bf16.msra.mxu0 %v1334
        %1858 = vmatprep.subr.bf16.mxu0 %v1339
        %1859 = vmatpush1.bf16.msra.mxu0 %v1338
        %1860 = vmatprep.subr.bf16.mxu0 %v1343
        %1861 = vmatpush1.bf16.msra.mxu0 %v1342
        %1862 = vmatprep.subr.bf16.mxu0 %v1347
        %1863 = vmatpush1.bf16.msra.mxu0 %v1346
        %1864 = vmatprep.subr.bf16.mxu0 %v1351
        %1865 = vmatpush1.bf16.msra.mxu0 %v1350
        %1866 = vmatprep.subr.bf16.mxu0 %v1355
        %1867 = vmatpush1.bf16.msra.mxu0 %v1354
        %1868 = vmatprep.subr.bf16.mxu0 %v1359
        %1869 = vmatpush1.bf16.msra.mxu0 %v1358
        %1870 = vmatprep.subr.bf16.mxu0 %v1363
        %1871 = vmatpush1.bf16.msra.mxu0 %v1362
        %1872 = vmatprep.subr.bf16.mxu0 %v1367
        %1873 = vmatpush1.bf16.msra.mxu0 %v1366
        %1874 = vmatprep.subr.bf16.mxu0 %v1371
        %1875 = vmatpush1.bf16.msra.mxu0 %v1370
        %1876 = vmatprep.subr.bf16.mxu0 %v1375
        %1877 = vmatpush1.bf16.msra.mxu0 %v1374
        %1878 = vmatprep.subr.bf16.mxu0 %v1379
        %1879 = vmatpush1.bf16.msra.mxu0 %v1378
        %1880 = vmatprep.mubr.bf16.mxu0 %v453
        %1881 = vmatmul.mubr.bf16.gmra.mrb[0].mxu0 %v452
        %v1882 = vpop.f32.mrb[0].mxu0
        %v1883 = vadd.f32 %v1830, %v1882
        %v1884 = vpop.f32.mrb[0].mxu0
        %v1885 = vadd.f32 %v1832, %v1884
        %v1886 = vpop.f32.mrb[0].mxu0
        %v1887 = vadd.f32 %v1834, %v1886
        %v1888 = vpop.f32.mrb[0].mxu0
        %v1889 = vadd.f32 %v1836, %v1888
        %1890 = vmatprep.mubr.bf16.mxu0 %v459
        %1891 = vmatmul.mubr.bf16.gmra.mrb[0].mxu0 %v458
        %v1892 = vpop.f32.mrb[0].mxu0
        %v1893 = vadd.f32 %v1840, %v1892
        %v1894 = vpop.f32.mrb[0].mxu0
        %v1895 = vadd.f32 %v1842, %v1894
        %v1896 = vpop.f32.mrb[0].mxu0
        %v1897 = vadd.f32 %v1844, %v1896
        %v1898 = vpop.f32.mrb[0].mxu0
        %v1899 = vadd.f32 %v1846, %v1898
        %1900 = vdwg.mxu0
        %1901 = vmatprep.subr.bf16.mxu0 %v1383
        %1902 = vmatpush1.bf16.msra.mxu0 %v1382
        %1903 = vmatprep.subr.bf16.mxu0 %v1387
        %1904 = vmatpush1.bf16.msra.mxu0 %v1386
        %1905 = vmatprep.subr.bf16.mxu0 %v1391
        %1906 = vmatpush1.bf16.msra.mxu0 %v1390
        %1907 = vmatprep.subr.bf16.mxu0 %v1395
        %1908 = vmatpush1.bf16.msra.mxu0 %v1394
        %1909 = vmatprep.subr.bf16.mxu0 %v1399
        %1910 = vmatpush1.bf16.msra.mxu0 %v1398
        %1911 = vmatprep.subr.bf16.mxu0 %v1403
        %1912 = vmatpush1.bf16.msra.mxu0 %v1402
        %1913 = vmatprep.subr.bf16.mxu0 %v1407
        %1914 = vmatpush1.bf16.msra.mxu0 %v1406
        %1915 = vmatprep.subr.bf16.mxu0 %v1411
        %1916 = vmatpush1.bf16.msra.mxu0 %v1410
        %1917 = vmatprep.subr.bf16.mxu0 %v1415
        %1918 = vmatpush1.bf16.msra.mxu0 %v1414
        %1919 = vmatprep.subr.bf16.mxu0 %v1419
        %1920 = vmatpush1.bf16.msra.mxu0 %v1418
        %1921 = vmatprep.subr.bf16.mxu0 %v1423
        %1922 = vmatpush1.bf16.msra.mxu0 %v1422
        %1923 = vmatprep.subr.bf16.mxu0 %v1427
        %1924 = vmatpush1.bf16.msra.mxu0 %v1426
        %1925 = vmatprep.subr.bf16.mxu0 %v1431
        %1926 = vmatpush1.bf16.msra.mxu0 %v1430
        %1927 = vmatprep.subr.bf16.mxu0 %v1435
        %1928 = vmatpush1.bf16.msra.mxu0 %v1434
        %1929 = vmatprep.subr.bf16.mxu0 %v1439
        %1930 = vmatpush1.bf16.msra.mxu0 %v1438
        %1931 = vmatprep.subr.bf16.mxu0 %v1443
        %1932 = vmatpush1.bf16.msra.mxu0 %v1442
        %1933 = vmatprep.mubr.bf16.mxu0 %v455
        %1934 = vmatmul.mubr.bf16.gmra.mrb[0].mxu0 %v454
        %v1935 = vpop.f32.mrb[0].mxu0
        %v1936 = vadd.f32 %v1883, %v1935
        %v1937 = vpop.f32.mrb[0].mxu0
        %v1938 = vadd.f32 %v1885, %v1937
        %v1939 = vpop.f32.mrb[0].mxu0
        %v1940 = vadd.f32 %v1887, %v1939
        %v1941 = vpop.f32.mrb[0].mxu0
        %v1942 = vadd.f32 %v1889, %v1941
        %1943 = vmatprep.mubr.bf16.mxu0 %v461
        %1944 = vmatmul.mubr.bf16.gmra.mrb[0].mxu0 %v460
        %v1945 = vpop.f32.mrb[0].mxu0
        %v1946 = vadd.f32 %v1893, %v1945
        %v1947 = vpop.f32.mrb[0].mxu0
        %v1948 = vadd.f32 %v1895, %v1947
        %v1949 = vpop.f32.mrb[0].mxu0
        %v1950 = vadd.f32 %v1897, %v1949
        %v1951 = vpop.f32.mrb[0].mxu0
        %v1952 = vadd.f32 %v1899, %v1951
        %1953 = vdwg.mxu0
        %v1954 = vmax.f32 %v1777, 0.0
        %v1955 = vmax.f32 %v1779, 0.0
        %v1956 = vmax.f32 %v1936, 0.0
        %v1957 = vmax.f32 %v1938, 0.0
        %v1958 = vmax.f32 %v1781, 0.0
        %v1959 = vmax.f32 %v1783, 0.0
        %v1960 = vmax.f32 %v1940, 0.0
        %v1961 = vmax.f32 %v1942, 0.0
        %v1962 = vmax.f32 %v1787, 0.0
        %v1963 = vmax.f32 %v1789, 0.0
        %v1964 = vmax.f32 %v1946, 0.0
        %v1965 = vmax.f32 %v1948, 0.0
        %v1966 = vmax.f32 %v1791, 0.0
        %v1967 = vmax.f32 %v1793, 0.0
        %v1968 = vmax.f32 %v1950, 0.0
        %v1969 = vmax.f32 %v1952, 0.0
        %v1970 = vpack.c.bf16 %v1958, %v1954
        %v1971 = vpack.c.bf16 %v1959, %v1955
        %v1972 = vpack.c.bf16 %v1960, %v1956
        %v1973 = vpack.c.bf16 %v1961, %v1957
        %v1974 = vpack.c.bf16 %v1966, %v1962
        %v1975 = vpack.c.bf16 %v1967, %v1963
        %v1976 = vpack.c.bf16 %v1968, %v1964
        %v1977 = vpack.c.bf16 %v1969, %v1965
        %v1978 = vld [vmem:[#allocation8] sm:$0xf]
        %v1979 = vld [vmem:[#allocation8 + $0x4] sm:$0xf]
        %v1980 = vld [vmem:[#allocation8 + $0x8] sm:$0xf]
        %v1981 = vld [vmem:[#allocation8 + $0xc] sm:$0xf]
        %v1982 = vld [vmem:[#allocation8 + $0x10] sm:$0xf]
        %v1983 = vld [vmem:[#allocation8 + $0x14] sm:$0xf]
        %v1984 = vld [vmem:[#allocation8 + $0x18] sm:$0xf]
        %v1985 = vld [vmem:[#allocation8 + $0x1c] sm:$0xf]
        %v1986 = vld [vmem:[#allocation8 + $0x20] sm:$0xf]
        %v1987 = vld [vmem:[#allocation8 + $0x24] sm:$0xf]
        %v1988 = vld [vmem:[#allocation8 + $0x28] sm:$0xf]
        %v1989 = vld [vmem:[#allocation8 + $0x2c] sm:$0xf]
        %v1990 = vld [vmem:[#allocation8 + $0x30] sm:$0xf]
        %v1991 = vld [vmem:[#allocation8 + $0x34] sm:$0xf]
        %v1992 = vld [vmem:[#allocation8 + $0x38] sm:$0xf]
        %v1993 = vld [vmem:[#allocation8 + $0x3c] sm:$0xf]
        %v1994 = vld [vmem:[#allocation8 + $0x40] sm:$0xf]
        %v1995 = vld [vmem:[#allocation8 + $0x44] sm:$0xf]
        %v1996 = vld [vmem:[#allocation8 + $0x48] sm:$0xf]
        %v1997 = vld [vmem:[#allocation8 + $0x4c] sm:$0xf]
        %v1998 = vld [vmem:[#allocation8 + $0x50] sm:$0xf]
        %v1999 = vld [vmem:[#allocation8 + $0x54] sm:$0xf]
        %v2000 = vld [vmem:[#allocation8 + $0x58] sm:$0xf]
        %v2001 = vld [vmem:[#allocation8 + $0x5c] sm:$0xf]
        %v2002 = vld [vmem:[#allocation8 + $0x60] sm:$0xf]
        %v2003 = vld [vmem:[#allocation8 + $0x64] sm:$0xf]
        %v2004 = vld [vmem:[#allocation8 + $0x68] sm:$0xf]
        %v2005 = vld [vmem:[#allocation8 + $0x6c] sm:$0xf]
        %v2006 = vld [vmem:[#allocation8 + $0x70] sm:$0xf]
        %v2007 = vld [vmem:[#allocation8 + $0x74] sm:$0xf]
        %v2008 = vld [vmem:[#allocation8 + $0x78] sm:$0xf]
        %v2009 = vld [vmem:[#allocation8 + $0x7c] sm:$0xf]
        %v2010 = vld [vmem:[#allocation8 + $0x80] sm:$0xf]
        %v2011 = vld [vmem:[#allocation8 + $0x84] sm:$0xf]
        %v2012 = vld [vmem:[#allocation8 + $0x88] sm:$0xf]
        %v2013 = vld [vmem:[#allocation8 + $0x8c] sm:$0xf]
        %v2014 = vld [vmem:[#allocation8 + $0x90] sm:$0xf]
        %v2015 = vld [vmem:[#allocation8 + $0x94] sm:$0xf]
        %v2016 = vld [vmem:[#allocation8 + $0x98] sm:$0xf]
        %v2017 = vld [vmem:[#allocation8 + $0x9c] sm:$0xf]
        %v2018 = vld [vmem:[#allocation8 + $0xa0] sm:$0xf]
        %v2019 = vld [vmem:[#allocation8 + $0xa4] sm:$0xf]
        %v2020 = vld [vmem:[#allocation8 + $0xa8] sm:$0xf]
        %v2021 = vld [vmem:[#allocation8 + $0xac] sm:$0xf]
        %v2022 = vld [vmem:[#allocation8 + $0xb0] sm:$0xf]
        %v2023 = vld [vmem:[#allocation8 + $0xb4] sm:$0xf]
        %v2024 = vld [vmem:[#allocation8 + $0xb8] sm:$0xf]
        %v2025 = vld [vmem:[#allocation8 + $0xbc] sm:$0xf]
        %v2026 = vld [vmem:[#allocation8 + $0xc0] sm:$0xf]
        %v2027 = vld [vmem:[#allocation8 + $0xc4] sm:$0xf]
        %v2028 = vld [vmem:[#allocation8 + $0xc8] sm:$0xf]
        %v2029 = vld [vmem:[#allocation8 + $0xcc] sm:$0xf]
        %v2030 = vld [vmem:[#allocation8 + $0xd0] sm:$0xf]
        %v2031 = vld [vmem:[#allocation8 + $0xd4] sm:$0xf]
        %v2032 = vld [vmem:[#allocation8 + $0xd8] sm:$0xf]
        %v2033 = vld [vmem:[#allocation8 + $0xdc] sm:$0xf]
        %v2034 = vld [vmem:[#allocation8 + $0xe0] sm:$0xf]
        %v2035 = vld [vmem:[#allocation8 + $0xe4] sm:$0xf]
        %v2036 = vld [vmem:[#allocation8 + $0xe8] sm:$0xf]
        %v2037 = vld [vmem:[#allocation8 + $0xec] sm:$0xf]
        %v2038 = vld [vmem:[#allocation8 + $0xf0] sm:$0xf]
        %v2039 = vld [vmem:[#allocation8 + $0xf4] sm:$0xf]
        %v2040 = vld [vmem:[#allocation8 + $0xf8] sm:$0xf]
        %v2041 = vld [vmem:[#allocation8 + $0xfc] sm:$0xf]
        %v2042 = vld [vmem:[%s4] sm:$0x1]
        %v2044 = vlaneseq
        %v2045 = vshrl.u32 %v2044, 7
        %v2046 = vsub.s32 0, %v2045
        %v2047 = vrot.slane %v2042, %v2046
        %v2113 = vunpack.c.l.b16 %v1978
        %v2114 = vunpack.c.l.b16 %v1979
        %v2115 = vunpack.c.l.b16 %v1980
        %v2116 = vunpack.c.l.b16 %v1981
        %v2117 = vunpack.c.l.b16 %v1982
        %v2118 = vunpack.c.l.b16 %v1983
        %v2119 = vunpack.c.l.b16 %v1984
        %v2120 = vunpack.c.l.b16 %v1985
        %v2121 = vunpack.c.l.b16 %v1986
        %v2122 = vunpack.c.l.b16 %v1987
        %v2123 = vunpack.c.l.b16 %v1988
        %v2124 = vunpack.c.l.b16 %v1989
        %v2125 = vunpack.c.l.b16 %v1990
        %v2126 = vunpack.c.l.b16 %v1991
        %v2127 = vunpack.c.l.b16 %v1992
        %v2128 = vunpack.c.l.b16 %v1993
        %v2129 = vunpack.c.l.b16 %v1994
        %v2130 = vunpack.c.l.b16 %v1995
        %v2131 = vunpack.c.l.b16 %v1996
        %v2132 = vunpack.c.l.b16 %v1997
        %v2133 = vunpack.c.l.b16 %v1998
        %v2134 = vunpack.c.l.b16 %v1999
        %v2135 = vunpack.c.l.b16 %v2000
        %v2136 = vunpack.c.l.b16 %v2001
        %v2137 = vunpack.c.l.b16 %v2002
        %v2138 = vunpack.c.l.b16 %v2003
        %v2139 = vunpack.c.l.b16 %v2004
        %v2140 = vunpack.c.l.b16 %v2005
        %v2141 = vunpack.c.l.b16 %v2006
        %v2142 = vunpack.c.l.b16 %v2007
        %v2143 = vunpack.c.l.b16 %v2008
        %v2144 = vunpack.c.l.b16 %v2009
        %v2145 = vunpack.c.l.b16 %v2010
        %v2146 = vunpack.c.l.b16 %v2011
        %v2147 = vunpack.c.l.b16 %v2012
        %v2148 = vunpack.c.l.b16 %v2013
        %v2149 = vunpack.c.l.b16 %v2014
        %v2150 = vunpack.c.l.b16 %v2015
        %v2151 = vunpack.c.l.b16 %v2016
        %v2152 = vunpack.c.l.b16 %v2017
        %v2153 = vunpack.c.l.b16 %v2018
        %v2154 = vunpack.c.l.b16 %v2019
        %v2155 = vunpack.c.l.b16 %v2020
        %v2156 = vunpack.c.l.b16 %v2021
        %v2157 = vunpack.c.l.b16 %v2022
        %v2158 = vunpack.c.l.b16 %v2023
        %v2159 = vunpack.c.l.b16 %v2024
        %v2160 = vunpack.c.l.b16 %v2025
        %v2161 = vunpack.c.l.b16 %v2026
        %v2162 = vunpack.c.l.b16 %v2027
        %v2163 = vunpack.c.l.b16 %v2028
        %v2164 = vunpack.c.l.b16 %v2029
        %v2165 = vunpack.c.l.b16 %v2030
        %v2166 = vunpack.c.l.b16 %v2031
        %v2167 = vunpack.c.l.b16 %v2032
        %v2168 = vunpack.c.l.b16 %v2033
        %v2169 = vunpack.c.l.b16 %v2034
        %v2170 = vunpack.c.l.b16 %v2035
        %v2171 = vunpack.c.l.b16 %v2036
        %v2172 = vunpack.c.l.b16 %v2037
        %v2173 = vunpack.c.l.b16 %v2038
        %v2174 = vunpack.c.l.b16 %v2039
        %v2175 = vunpack.c.l.b16 %v2040
        %v2176 = vunpack.c.l.b16 %v2041
        %v2177 = vpack.c.b16 %v2114, %v2113
        %v2178 = vpack.c.b16 %v2116, %v2115
        %v2179 = vpack.c.b16 %v2118, %v2117
        %v2180 = vpack.c.b16 %v2120, %v2119
        %v2181 = vpack.c.b16 %v2122, %v2121
        %v2182 = vpack.c.b16 %v2124, %v2123
        %v2183 = vpack.c.b16 %v2126, %v2125
        %v2184 = vpack.c.b16 %v2128, %v2127
        %v2185 = vpack.c.b16 %v2130, %v2129
        %v2186 = vpack.c.b16 %v2132, %v2131
        %v2187 = vpack.c.b16 %v2134, %v2133
        %v2188 = vpack.c.b16 %v2136, %v2135
        %v2189 = vpack.c.b16 %v2138, %v2137
        %v2190 = vpack.c.b16 %v2140, %v2139
        %v2191 = vpack.c.b16 %v2142, %v2141
        %v2192 = vpack.c.b16 %v2144, %v2143
        %v2193 = vpack.c.b16 %v2146, %v2145
        %v2194 = vpack.c.b16 %v2148, %v2147
        %v2195 = vpack.c.b16 %v2150, %v2149
        %v2196 = vpack.c.b16 %v2152, %v2151
        %v2197 = vpack.c.b16 %v2154, %v2153
        %v2198 = vpack.c.b16 %v2156, %v2155
        %v2199 = vpack.c.b16 %v2158, %v2157
        %v2200 = vpack.c.b16 %v2160, %v2159
        %v2201 = vpack.c.b16 %v2162, %v2161
        %v2202 = vpack.c.b16 %v2164, %v2163
        %v2203 = vpack.c.b16 %v2166, %v2165
        %v2204 = vpack.c.b16 %v2168, %v2167
        %v2205 = vpack.c.b16 %v2170, %v2169
        %v2206 = vpack.c.b16 %v2172, %v2171
        %v2207 = vpack.c.b16 %v2174, %v2173
        %v2208 = vpack.c.b16 %v2176, %v2175
        %2241 = vmatprep.subr.bf16.mxu0 0
        %2242 = vmatpush1.bf16.msra.mxu0 %v2177
        %2243 = vmatprep.subr.bf16.mxu0 0
        %2244 = vmatpush1.bf16.msra.mxu0 %v2178
        %2245 = vmatprep.subr.bf16.mxu0 0
        %2246 = vmatpush1.bf16.msra.mxu0 %v2179
        %2247 = vmatprep.subr.bf16.mxu0 0
        %2248 = vmatpush1.bf16.msra.mxu0 %v2180
        %2249 = vmatprep.subr.bf16.mxu0 0
        %2250 = vmatpush1.bf16.msra.mxu0 %v2181
        %2251 = vmatprep.subr.bf16.mxu0 0
        %2252 = vmatpush1.bf16.msra.mxu0 %v2182
        %2253 = vmatprep.subr.bf16.mxu0 0
        %2254 = vmatpush1.bf16.msra.mxu0 %v2183
        %2255 = vmatprep.subr.bf16.mxu0 0
        %2256 = vmatpush1.bf16.msra.mxu0 %v2184
        %2257 = vmatprep.subr.bf16.mxu0 0
        %2258 = vmatpush1.bf16.msra.mxu0 %v2185
        %2259 = vmatprep.subr.bf16.mxu0 0
        %2260 = vmatpush1.bf16.msra.mxu0 %v2186
        %2261 = vmatprep.subr.bf16.mxu0 0
        %2262 = vmatpush1.bf16.msra.mxu0 %v2187
        %2263 = vmatprep.subr.bf16.mxu0 0
        %2264 = vmatpush1.bf16.msra.mxu0 %v2188
        %2265 = vmatprep.subr.bf16.mxu0 0
        %2266 = vmatpush1.bf16.msra.mxu0 %v2189
        %2267 = vmatprep.subr.bf16.mxu0 0
        %2268 = vmatpush1.bf16.msra.mxu0 %v2190
        %2269 = vmatprep.subr.bf16.mxu0 0
        %2270 = vmatpush1.bf16.msra.mxu0 %v2191
        %2271 = vmatprep.subr.bf16.mxu0 0
        %2272 = vmatpush1.bf16.msra.mxu0 %v2192
        %2273 = vmatprep.mubr.bf16.mxu0 %v1971
        %2274 = vmatmul.mubr.bf16.gmra.mrb[0].mxu0 %v1970
        %v2275 = vpop.f32.mrb[0].mxu0
        %v2276 = vadd.f32 %v2047, %v2275
        %v2277 = vpop.f32.mrb[0].mxu0
        %v2278 = vpop.f32.mrb[0].mxu0
        %v2279 = vadd.f32 %v2047, %v2278
        %v2280 = vpop.f32.mrb[0].mxu0
        %2281 = vmatprep.mubr.bf16.mxu0 %v1975
        %2282 = vmatmul.mubr.bf16.gmra.mrb[0].mxu0 %v1974
        %v2283 = vpop.f32.mrb[0].mxu0
        %v2284 = vadd.f32 %v2047, %v2283
        %v2285 = vpop.f32.mrb[0].mxu0
        %v2286 = vpop.f32.mrb[0].mxu0
        %v2287 = vadd.f32 %v2047, %v2286
        %v2288 = vpop.f32.mrb[0].mxu0
        %2289 = vdwg.mxu0
        %2290 = vmatprep.subr.bf16.mxu0 0
        %2291 = vmatpush1.bf16.msra.mxu0 %v2193
        %2292 = vmatprep.subr.bf16.mxu0 0
        %2293 = vmatpush1.bf16.msra.mxu0 %v2194
        %2294 = vmatprep.subr.bf16.mxu0 0
        %2295 = vmatpush1.bf16.msra.mxu0 %v2195
        %2296 = vmatprep.subr.bf16.mxu0 0
        %2297 = vmatpush1.bf16.msra.mxu0 %v2196
        %2298 = vmatprep.subr.bf16.mxu0 0
        %2299 = vmatpush1.bf16.msra.mxu0 %v2197
        %2300 = vmatprep.subr.bf16.mxu0 0
        %2301 = vmatpush1.bf16.msra.mxu0 %v2198
        %2302 = vmatprep.subr.bf16.mxu0 0
        %2303 = vmatpush1.bf16.msra.mxu0 %v2199
        %2304 = vmatprep.subr.bf16.mxu0 0
        %2305 = vmatpush1.bf16.msra.mxu0 %v2200
        %2306 = vmatprep.subr.bf16.mxu0 0
        %2307 = vmatpush1.bf16.msra.mxu0 %v2201
        %2308 = vmatprep.subr.bf16.mxu0 0
        %2309 = vmatpush1.bf16.msra.mxu0 %v2202
        %2310 = vmatprep.subr.bf16.mxu0 0
        %2311 = vmatpush1.bf16.msra.mxu0 %v2203
        %2312 = vmatprep.subr.bf16.mxu0 0
        %2313 = vmatpush1.bf16.msra.mxu0 %v2204
        %2314 = vmatprep.subr.bf16.mxu0 0
        %2315 = vmatpush1.bf16.msra.mxu0 %v2205
        %2316 = vmatprep.subr.bf16.mxu0 0
        %2317 = vmatpush1.bf16.msra.mxu0 %v2206
        %2318 = vmatprep.subr.bf16.mxu0 0
        %2319 = vmatpush1.bf16.msra.mxu0 %v2207
        %2320 = vmatprep.subr.bf16.mxu0 0
        %2321 = vmatpush1.bf16.msra.mxu0 %v2208
        %2322 = vmatprep.mubr.bf16.mxu0 %v1973
        %2323 = vmatmul.mubr.bf16.gmra.mrb[0].mxu0 %v1972
        %v2324 = vpop.f32.mrb[0].mxu0
        %v2325 = vadd.f32 %v2276, %v2324
        %v2326 = vpop.f32.mrb[0].mxu0
        %v2327 = vpop.f32.mrb[0].mxu0
        %v2328 = vadd.f32 %v2279, %v2327
        %v2329 = vpop.f32.mrb[0].mxu0
        %2330 = vmatprep.mubr.bf16.mxu0 %v1977
        %2331 = vmatmul.mubr.bf16.gmra.mrb[0].mxu0 %v1976
        %v2332 = vpop.f32.mrb[0].mxu0
        %v2333 = vadd.f32 %v2284, %v2332
        %v2334 = vpop.f32.mrb[0].mxu0
        %v2335 = vpop.f32.mrb[0].mxu0
        %v2336 = vadd.f32 %v2287, %v2335
        %v2337 = vpop.f32.mrb[0].mxu0
        %2338 = vdwg.mxu0
        %v2339 = vpack.c.bf16 %v2328, %v2325
        %v2340 = vpack.c.bf16 %v2336, %v2333
        %v2341 = vld [vmem:[#allocation10] sm:$0xff]
        %v2342 = vld [vmem:[#allocation10 + $0x8] sm:$0xff]
        %v2343 = vld [vmem:[#allocation10 + $0x10] sm:$0xff]
        %v2344 = vld [vmem:[#allocation10 + $0x18] sm:$0xff]
        %v2345 = vld [vmem:[#allocation10 + $0x20] sm:$0xff]
        %v2346 = vld [vmem:[#allocation10 + $0x28] sm:$0xff]
        %v2347 = vld [vmem:[#allocation10 + $0x30] sm:$0xff]
        %v2348 = vld [vmem:[#allocation10 + $0x38] sm:$0xff]
        %v2349 = vld [vmem:[#allocation10 + $0x40] sm:$0xff]
        %v2350 = vld [vmem:[#allocation10 + $0x48] sm:$0xff]
        %v2351 = vld [vmem:[#allocation10 + $0x50] sm:$0xff]
        %v2352 = vld [vmem:[#allocation10 + $0x58] sm:$0xff]
        %v2353 = vld [vmem:[#allocation10 + $0x60] sm:$0xff]
        %v2354 = vld [vmem:[#allocation10 + $0x68] sm:$0xff]
        %v2355 = vld [vmem:[#allocation10 + $0x70] sm:$0xff]
        %v2356 = vld [vmem:[#allocation10 + $0x78] sm:$0xff]
        %v2357 = vld [vmem:[#allocation10 + $0x80] sm:$0xff]
        %v2358 = vld [vmem:[#allocation10 + $0x88] sm:$0xff]
        %v2359 = vld [vmem:[#allocation10 + $0x90] sm:$0xff]
        %v2360 = vld [vmem:[#allocation10 + $0x98] sm:$0xff]
        %v2361 = vld [vmem:[#allocation10 + $0xa0] sm:$0xff]
        %v2362 = vld [vmem:[#allocation10 + $0xa8] sm:$0xff]
        %v2363 = vld [vmem:[#allocation10 + $0xb0] sm:$0xff]
        %v2364 = vld [vmem:[#allocation10 + $0xb8] sm:$0xff]
        %v2365 = vld [vmem:[#allocation10 + $0xc0] sm:$0xff]
        %v2366 = vld [vmem:[#allocation10 + $0xc8] sm:$0xff]
        %v2367 = vld [vmem:[#allocation10 + $0xd0] sm:$0xff]
        %v2368 = vld [vmem:[#allocation10 + $0xd8] sm:$0xff]
        %v2369 = vld [vmem:[#allocation10 + $0xe0] sm:$0xff]
        %v2370 = vld [vmem:[#allocation10 + $0xe8] sm:$0xff]
        %v2371 = vld [vmem:[#allocation10 + $0xf0] sm:$0xff]
        %v2372 = vld [vmem:[#allocation10 + $0xf8] sm:$0xff]
        %v2373 = vld [vmem:[%s6] sm:$0xf]
        %v2375 = vlaneseq
        %v2376 = vshrl.u32 %v2375, 7
        %v2377 = vsub.s32 0, %v2376
        %v2378 = vrot.slane %v2373, %v2377
        %v2379 = vlaneseq
        %v2380 = vshrl.u32 %v2379, 7
        %v2381 = vsub.s32 1, %v2380
        %v2382 = vrot.slane %v2373, %v2381
        %v2383 = vlaneseq
        %v2384 = vshrl.u32 %v2383, 7
        %v2385 = vsub.s32 2, %v2384
        %v2386 = vrot.slane %v2373, %v2385
        %v2387 = vlaneseq
        %v2388 = vshrl.u32 %v2387, 7
        %v2389 = vsub.s32 3, %v2388
        %v2390 = vrot.slane %v2373, %v2389
        %v2427 = vunpack.c.l.b16 %v2341
        %v2428 = vunpack.c.h.b16 %v2341
        %v2429 = vunpack.c.l.b16 %v2342
        %v2430 = vunpack.c.h.b16 %v2342
        %v2431 = vunpack.c.l.b16 %v2343
        %v2432 = vunpack.c.h.b16 %v2343
        %v2433 = vunpack.c.l.b16 %v2344
        %v2434 = vunpack.c.h.b16 %v2344
        %v2435 = vunpack.c.l.b16 %v2345
        %v2436 = vunpack.c.h.b16 %v2345
        %v2437 = vunpack.c.l.b16 %v2346
        %v2438 = vunpack.c.h.b16 %v2346
        %v2439 = vunpack.c.l.b16 %v2347
        %v2440 = vunpack.c.h.b16 %v2347
        %v2441 = vunpack.c.l.b16 %v2348
        %v2442 = vunpack.c.h.b16 %v2348
        %v2443 = vunpack.c.l.b16 %v2349
        %v2444 = vunpack.c.h.b16 %v2349
        %v2445 = vunpack.c.l.b16 %v2350
        %v2446 = vunpack.c.h.b16 %v2350
        %v2447 = vunpack.c.l.b16 %v2351
        %v2448 = vunpack.c.h.b16 %v2351
        %v2449 = vunpack.c.l.b16 %v2352
        %v2450 = vunpack.c.h.b16 %v2352
        %v2451 = vunpack.c.l.b16 %v2353
        %v2452 = vunpack.c.h.b16 %v2353
        %v2453 = vunpack.c.l.b16 %v2354
        %v2454 = vunpack.c.h.b16 %v2354
        %v2455 = vunpack.c.l.b16 %v2355
        %v2456 = vunpack.c.h.b16 %v2355
        %v2457 = vunpack.c.l.b16 %v2356
        %v2458 = vunpack.c.h.b16 %v2356
        %v2459 = vunpack.c.l.b16 %v2357
        %v2460 = vunpack.c.h.b16 %v2357
        %v2461 = vunpack.c.l.b16 %v2358
        %v2462 = vunpack.c.h.b16 %v2358
        %v2463 = vunpack.c.l.b16 %v2359
        %v2464 = vunpack.c.h.b16 %v2359
        %v2465 = vunpack.c.l.b16 %v2360
        %v2466 = vunpack.c.h.b16 %v2360
        %v2467 = vunpack.c.l.b16 %v2361
        %v2468 = vunpack.c.h.b16 %v2361
        %v2469 = vunpack.c.l.b16 %v2362
        %v2470 = vunpack.c.h.b16 %v2362
        %v2471 = vunpack.c.l.b16 %v2363
        %v2472 = vunpack.c.h.b16 %v2363
        %v2473 = vunpack.c.l.b16 %v2364
        %v2474 = vunpack.c.h.b16 %v2364
        %v2475 = vunpack.c.l.b16 %v2365
        %v2476 = vunpack.c.h.b16 %v2365
        %v2477 = vunpack.c.l.b16 %v2366
        %v2478 = vunpack.c.h.b16 %v2366
        %v2479 = vunpack.c.l.b16 %v2367
        %v2480 = vunpack.c.h.b16 %v2367
        %v2481 = vunpack.c.l.b16 %v2368
        %v2482 = vunpack.c.h.b16 %v2368
        %v2483 = vunpack.c.l.b16 %v2369
        %v2484 = vunpack.c.h.b16 %v2369
        %v2485 = vunpack.c.l.b16 %v2370
        %v2486 = vunpack.c.h.b16 %v2370
        %v2487 = vunpack.c.l.b16 %v2371
        %v2488 = vunpack.c.h.b16 %v2371
        %v2489 = vunpack.c.l.b16 %v2372
        %v2490 = vunpack.c.h.b16 %v2372
        %v2491 = vpack.c.b16 %v2431, %v2427
        %v2492 = vpack.c.b16 %v2432, %v2428
        %v2493 = vpack.c.b16 %v2433, %v2429
        %v2494 = vpack.c.b16 %v2434, %v2430
        %v2495 = vpack.c.b16 %v2439, %v2435
        %v2496 = vpack.c.b16 %v2440, %v2436
        %v2497 = vpack.c.b16 %v2441, %v2437
        %v2498 = vpack.c.b16 %v2442, %v2438
        %v2499 = vpack.c.b16 %v2447, %v2443
        %v2500 = vpack.c.b16 %v2448, %v2444
        %v2501 = vpack.c.b16 %v2449, %v2445
        %v2502 = vpack.c.b16 %v2450, %v2446
        %v2503 = vpack.c.b16 %v2455, %v2451
        %v2504 = vpack.c.b16 %v2456, %v2452
        %v2505 = vpack.c.b16 %v2457, %v2453
        %v2506 = vpack.c.b16 %v2458, %v2454
        %v2507 = vpack.c.b16 %v2463, %v2459
        %v2508 = vpack.c.b16 %v2464, %v2460
        %v2509 = vpack.c.b16 %v2465, %v2461
        %v2510 = vpack.c.b16 %v2466, %v2462
        %v2511 = vpack.c.b16 %v2471, %v2467
        %v2512 = vpack.c.b16 %v2472, %v2468
        %v2513 = vpack.c.b16 %v2473, %v2469
        %v2514 = vpack.c.b16 %v2474, %v2470
        %v2515 = vpack.c.b16 %v2479, %v2475
        %v2516 = vpack.c.b16 %v2480, %v2476
        %v2517 = vpack.c.b16 %v2481, %v2477
        %v2518 = vpack.c.b16 %v2482, %v2478
        %v2519 = vpack.c.b16 %v2487, %v2483
        %v2520 = vpack.c.b16 %v2488, %v2484
        %v2521 = vpack.c.b16 %v2489, %v2485
        %v2522 = vpack.c.b16 %v2490, %v2486
        %2555 = vmatprep.subr.bf16.mxu0 %v2492
        %2556 = vmatpush1.bf16.msra.mxu0 %v2491
        %2557 = vmatprep.subr.bf16.mxu0 %v2496
        %2558 = vmatpush1.bf16.msra.mxu0 %v2495
        %2559 = vmatprep.subr.bf16.mxu0 %v2500
        %2560 = vmatpush1.bf16.msra.mxu0 %v2499
        %2561 = vmatprep.subr.bf16.mxu0 %v2504
        %2562 = vmatpush1.bf16.msra.mxu0 %v2503
        %2563 = vmatprep.subr.bf16.mxu0 %v2508
        %2564 = vmatpush1.bf16.msra.mxu0 %v2507
        %2565 = vmatprep.subr.bf16.mxu0 %v2512
        %2566 = vmatpush1.bf16.msra.mxu0 %v2511
        %2567 = vmatprep.subr.bf16.mxu0 %v2516
        %2568 = vmatpush1.bf16.msra.mxu0 %v2515
        %2569 = vmatprep.subr.bf16.mxu0 %v2520
        %2570 = vmatpush1.bf16.msra.mxu0 %v2519
        %2571 = vmatprep.subr.bf16.mxu0 0
        %2572 = vmatpush1.bf16.msra.mxu0 0
        %2573 = vmatprep.subr.bf16.mxu0 0
        %2574 = vmatpush1.bf16.msra.mxu0 0
        %2575 = vmatprep.subr.bf16.mxu0 0
        %2576 = vmatpush1.bf16.msra.mxu0 0
        %2577 = vmatprep.subr.bf16.mxu0 0
        %2578 = vmatpush1.bf16.msra.mxu0 0
        %2579 = vmatprep.subr.bf16.mxu0 0
        %2580 = vmatpush1.bf16.msra.mxu0 0
        %2581 = vmatprep.subr.bf16.mxu0 0
        %2582 = vmatpush1.bf16.msra.mxu0 0
        %2583 = vmatprep.subr.bf16.mxu0 0
        %2584 = vmatpush1.bf16.msra.mxu0 0
        %2585 = vmatprep.subr.bf16.mxu0 0
        %2586 = vmatpush1.bf16.msra.mxu0 0
        %2587 = vmatprep.mubr.bf16.mxu0 0
        %2588 = vmatmul.mubr.bf16.gmra.mrb[0].mxu0 %v2339
        %v2589 = vpop.f32.mrb[0].mxu0
        %v2590 = vadd.f32 %v2378, %v2589
        %v2591 = vpop.f32.mrb[0].mxu0
        %v2592 = vadd.f32 %v2382, %v2591
        %v2593 = vpop.f32.mrb[0].mxu0
        %v2594 = vadd.f32 %v2378, %v2593
        %v2595 = vpop.f32.mrb[0].mxu0
        %v2596 = vadd.f32 %v2382, %v2595
        %2597 = vmatprep.mubr.bf16.mxu0 0
        %2598 = vmatmul.mubr.bf16.gmra.mrb[0].mxu0 %v2340
        %v2599 = vpop.f32.mrb[0].mxu0
        %v2600 = vadd.f32 %v2378, %v2599
        %v2601 = vpop.f32.mrb[0].mxu0
        %v2602 = vadd.f32 %v2382, %v2601
        %v2603 = vpop.f32.mrb[0].mxu0
        %v2604 = vadd.f32 %v2378, %v2603
        %v2605 = vpop.f32.mrb[0].mxu0
        %v2606 = vadd.f32 %v2382, %v2605
        %2607 = vdwg.mxu0
        %2608 = vmatprep.subr.bf16.mxu0 %v2494
        %2609 = vmatpush1.bf16.msra.mxu0 %v2493
        %2610 = vmatprep.subr.bf16.mxu0 %v2498
        %2611 = vmatpush1.bf16.msra.mxu0 %v2497
        %2612 = vmatprep.subr.bf16.mxu0 %v2502
        %2613 = vmatpush1.bf16.msra.mxu0 %v2501
        %2614 = vmatprep.subr.bf16.mxu0 %v2506
        %2615 = vmatpush1.bf16.msra.mxu0 %v2505
        %2616 = vmatprep.subr.bf16.mxu0 %v2510
        %2617 = vmatpush1.bf16.msra.mxu0 %v2509
        %2618 = vmatprep.subr.bf16.mxu0 %v2514
        %2619 = vmatpush1.bf16.msra.mxu0 %v2513
        %2620 = vmatprep.subr.bf16.mxu0 %v2518
        %2621 = vmatpush1.bf16.msra.mxu0 %v2517
        %2622 = vmatprep.subr.bf16.mxu0 %v2522
        %2623 = vmatpush1.bf16.msra.mxu0 %v2521
        %2624 = vmatprep.subr.bf16.mxu0 0
        %2625 = vmatpush1.bf16.msra.mxu0 0
        %2626 = vmatprep.subr.bf16.mxu0 0
        %2627 = vmatpush1.bf16.msra.mxu0 0
        %2628 = vmatprep.subr.bf16.mxu0 0
        %2629 = vmatpush1.bf16.msra.mxu0 0
        %2630 = vmatprep.subr.bf16.mxu0 0
        %2631 = vmatpush1.bf16.msra.mxu0 0
        %2632 = vmatprep.subr.bf16.mxu0 0
        %2633 = vmatpush1.bf16.msra.mxu0 0
        %2634 = vmatprep.subr.bf16.mxu0 0
        %2635 = vmatpush1.bf16.msra.mxu0 0
        %2636 = vmatprep.subr.bf16.mxu0 0
        %2637 = vmatpush1.bf16.msra.mxu0 0
        %2638 = vmatprep.subr.bf16.mxu0 0
        %2639 = vmatpush1.bf16.msra.mxu0 0
        %2640 = vmatprep.mubr.bf16.mxu0 0
        %2641 = vmatmul.mubr.bf16.gmra.mrb[0].mxu0 %v2339
        %v2642 = vpop.f32.mrb[0].mxu0
        %v2643 = vadd.f32 %v2386, %v2642
        %v2644 = vpop.f32.mrb[0].mxu0
        %v2645 = vadd.f32 %v2390, %v2644
        %v2646 = vpop.f32.mrb[0].mxu0
        %v2647 = vadd.f32 %v2386, %v2646
        %v2648 = vpop.f32.mrb[0].mxu0
        %v2649 = vadd.f32 %v2390, %v2648
        %2650 = vmatprep.mubr.bf16.mxu0 0
        %2651 = vmatmul.mubr.bf16.gmra.mrb[0].mxu0 %v2340
        %v2652 = vpop.f32.mrb[0].mxu0
        %v2653 = vadd.f32 %v2386, %v2652
        %v2654 = vpop.f32.mrb[0].mxu0
        %v2655 = vadd.f32 %v2390, %v2654
        %v2656 = vpop.f32.mrb[0].mxu0
        %v2657 = vadd.f32 %v2386, %v2656
        %v2658 = vpop.f32.mrb[0].mxu0
        %v2659 = vadd.f32 %v2390, %v2658
        %2660 = vdwg.mxu0
        %v2661 = vmax.f32 %v2590, 0.0
        %v2662 = vmax.f32 %v2592, 0.0
        %v2663 = vmax.f32 %v2643, 0.0
        %v2664 = vmax.f32 %v2645, 0.0
        %v2665 = vmax.f32 %v2594, 0.0
        %v2666 = vmax.f32 %v2596, 0.0
        %v2667 = vmax.f32 %v2647, 0.0
        %v2668 = vmax.f32 %v2649, 0.0
        %v2669 = vmax.f32 %v2600, 0.0
        %v2670 = vmax.f32 %v2602, 0.0
        %v2671 = vmax.f32 %v2653, 0.0
        %v2672 = vmax.f32 %v2655, 0.0
        %v2673 = vmax.f32 %v2604, 0.0
        %v2674 = vmax.f32 %v2606, 0.0
        %v2675 = vmax.f32 %v2657, 0.0
        %v2676 = vmax.f32 %v2659, 0.0
        %v2677 = vpack.c.bf16 %v2665, %v2661
        %v2678 = vpack.c.bf16 %v2666, %v2662
        %v2679 = vpack.c.bf16 %v2667, %v2663
        %v2680 = vpack.c.bf16 %v2668, %v2664
        %v2681 = vpack.c.bf16 %v2673, %v2669
        %v2682 = vpack.c.bf16 %v2674, %v2670
        %v2683 = vpack.c.bf16 %v2675, %v2671
        %v2684 = vpack.c.bf16 %v2676, %v2672
        %v2685 = vld [vmem:[#allocation11] sm:$0xff]
        %v2686 = vld [vmem:[#allocation11 + $0x8] sm:$0xff]
        %v2687 = vld [vmem:[#allocation11 + $0x10] sm:$0xff]
        %v2688 = vld [vmem:[#allocation11 + $0x18] sm:$0xff]
        %v2689 = vld [vmem:[#allocation11 + $0x20] sm:$0xff]
        %v2690 = vld [vmem:[#allocation11 + $0x28] sm:$0xff]
        %v2691 = vld [vmem:[#allocation11 + $0x30] sm:$0xff]
        %v2692 = vld [vmem:[#allocation11 + $0x38] sm:$0xff]
        %v2693 = vld [vmem:[#allocation11 + $0x40] sm:$0xff]
        %v2694 = vld [vmem:[#allocation11 + $0x48] sm:$0xff]
        %v2695 = vld [vmem:[#allocation11 + $0x50] sm:$0xff]
        %v2696 = vld [vmem:[#allocation11 + $0x58] sm:$0xff]
        %v2697 = vld [vmem:[#allocation11 + $0x60] sm:$0xff]
        %v2698 = vld [vmem:[#allocation11 + $0x68] sm:$0xff]
        %v2699 = vld [vmem:[#allocation11 + $0x70] sm:$0xff]
        %v2700 = vld [vmem:[#allocation11 + $0x78] sm:$0xff]
        %v2701 = vld [vmem:[#allocation11 + $0x80] sm:$0xff]
        %v2702 = vld [vmem:[#allocation11 + $0x88] sm:$0xff]
        %v2703 = vld [vmem:[#allocation11 + $0x90] sm:$0xff]
        %v2704 = vld [vmem:[#allocation11 + $0x98] sm:$0xff]
        %v2705 = vld [vmem:[#allocation11 + $0xa0] sm:$0xff]
        %v2706 = vld [vmem:[#allocation11 + $0xa8] sm:$0xff]
        %v2707 = vld [vmem:[#allocation11 + $0xb0] sm:$0xff]
        %v2708 = vld [vmem:[#allocation11 + $0xb8] sm:$0xff]
        %v2709 = vld [vmem:[#allocation11 + $0xc0] sm:$0xff]
        %v2710 = vld [vmem:[#allocation11 + $0xc8] sm:$0xff]
        %v2711 = vld [vmem:[#allocation11 + $0xd0] sm:$0xff]
        %v2712 = vld [vmem:[#allocation11 + $0xd8] sm:$0xff]
        %v2713 = vld [vmem:[#allocation11 + $0xe0] sm:$0xff]
        %v2714 = vld [vmem:[#allocation11 + $0xe8] sm:$0xff]
        %v2715 = vld [vmem:[#allocation11 + $0xf0] sm:$0xff]
        %v2716 = vld [vmem:[#allocation11 + $0xf8] sm:$0xff]
        %v2717 = vld [vmem:[#allocation11 + $0x100] sm:$0xff]
        %v2718 = vld [vmem:[#allocation11 + $0x108] sm:$0xff]
        %v2719 = vld [vmem:[#allocation11 + $0x110] sm:$0xff]
        %v2720 = vld [vmem:[#allocation11 + $0x118] sm:$0xff]
        %v2721 = vld [vmem:[#allocation11 + $0x120] sm:$0xff]
        %v2722 = vld [vmem:[#allocation11 + $0x128] sm:$0xff]
        %v2723 = vld [vmem:[#allocation11 + $0x130] sm:$0xff]
        %v2724 = vld [vmem:[#allocation11 + $0x138] sm:$0xff]
        %v2725 = vld [vmem:[#allocation11 + $0x140] sm:$0xff]
        %v2726 = vld [vmem:[#allocation11 + $0x148] sm:$0xff]
        %v2727 = vld [vmem:[#allocation11 + $0x150] sm:$0xff]
        %v2728 = vld [vmem:[#allocation11 + $0x158] sm:$0xff]
        %v2729 = vld [vmem:[#allocation11 + $0x160] sm:$0xff]
        %v2730 = vld [vmem:[#allocation11 + $0x168] sm:$0xff]
        %v2731 = vld [vmem:[#allocation11 + $0x170] sm:$0xff]
        %v2732 = vld [vmem:[#allocation11 + $0x178] sm:$0xff]
        %v2733 = vld [vmem:[#allocation11 + $0x180] sm:$0xff]
        %v2734 = vld [vmem:[#allocation11 + $0x188] sm:$0xff]
        %v2735 = vld [vmem:[#allocation11 + $0x190] sm:$0xff]
        %v2736 = vld [vmem:[#allocation11 + $0x198] sm:$0xff]
        %v2737 = vld [vmem:[#allocation11 + $0x1a0] sm:$0xff]
        %v2738 = vld [vmem:[#allocation11 + $0x1a8] sm:$0xff]
        %v2739 = vld [vmem:[#allocation11 + $0x1b0] sm:$0xff]
        %v2740 = vld [vmem:[#allocation11 + $0x1b8] sm:$0xff]
        %v2741 = vld [vmem:[#allocation11 + $0x1c0] sm:$0xff]
        %v2742 = vld [vmem:[#allocation11 + $0x1c8] sm:$0xff]
        %v2743 = vld [vmem:[#allocation11 + $0x1d0] sm:$0xff]
        %v2744 = vld [vmem:[#allocation11 + $0x1d8] sm:$0xff]
        %v2745 = vld [vmem:[#allocation11 + $0x1e0] sm:$0xff]
        %v2746 = vld [vmem:[#allocation11 + $0x1e8] sm:$0xff]
        %v2747 = vld [vmem:[#allocation11 + $0x1f0] sm:$0xff]
        %v2748 = vld [vmem:[#allocation11 + $0x1f8] sm:$0xff]
        %v2749 = vld [vmem:[#allocation11 + $0x200] sm:$0xff]
        %v2750 = vld [vmem:[#allocation11 + $0x208] sm:$0xff]
        %v2751 = vld [vmem:[#allocation11 + $0x210] sm:$0xff]
        %v2752 = vld [vmem:[#allocation11 + $0x218] sm:$0xff]
        %v2753 = vld [vmem:[#allocation11 + $0x220] sm:$0xff]
        %v2754 = vld [vmem:[#allocation11 + $0x228] sm:$0xff]
        %v2755 = vld [vmem:[#allocation11 + $0x230] sm:$0xff]
        %v2756 = vld [vmem:[#allocation11 + $0x238] sm:$0xff]
        %v2757 = vld [vmem:[#allocation11 + $0x240] sm:$0xff]
        %v2758 = vld [vmem:[#allocation11 + $0x248] sm:$0xff]
        %v2759 = vld [vmem:[#allocation11 + $0x250] sm:$0xff]
        %v2760 = vld [vmem:[#allocation11 + $0x258] sm:$0xff]
        %v2761 = vld [vmem:[#allocation11 + $0x260] sm:$0xff]
        %v2762 = vld [vmem:[#allocation11 + $0x268] sm:$0xff]
        %v2763 = vld [vmem:[#allocation11 + $0x270] sm:$0xff]
        %v2764 = vld [vmem:[#allocation11 + $0x278] sm:$0xff]
        %v2765 = vld [vmem:[#allocation11 + $0x280] sm:$0xff]
        %v2766 = vld [vmem:[#allocation11 + $0x288] sm:$0xff]
        %v2767 = vld [vmem:[#allocation11 + $0x290] sm:$0xff]
        %v2768 = vld [vmem:[#allocation11 + $0x298] sm:$0xff]
        %v2769 = vld [vmem:[#allocation11 + $0x2a0] sm:$0xff]
        %v2770 = vld [vmem:[#allocation11 + $0x2a8] sm:$0xff]
        %v2771 = vld [vmem:[#allocation11 + $0x2b0] sm:$0xff]
        %v2772 = vld [vmem:[#allocation11 + $0x2b8] sm:$0xff]
        %v2773 = vld [vmem:[#allocation11 + $0x2c0] sm:$0xff]
        %v2774 = vld [vmem:[#allocation11 + $0x2c8] sm:$0xff]
        %v2775 = vld [vmem:[#allocation11 + $0x2d0] sm:$0xff]
        %v2776 = vld [vmem:[#allocation11 + $0x2d8] sm:$0xff]
        %v2777 = vld [vmem:[#allocation11 + $0x2e0] sm:$0xff]
        %v2778 = vld [vmem:[#allocation11 + $0x2e8] sm:$0xff]
        %v2779 = vld [vmem:[#allocation11 + $0x2f0] sm:$0xff]
        %v2780 = vld [vmem:[#allocation11 + $0x2f8] sm:$0xff]
        %v2781 = vld [vmem:[#allocation11 + $0x300] sm:$0xff]
        %v2782 = vld [vmem:[#allocation11 + $0x308] sm:$0xff]
        %v2783 = vld [vmem:[#allocation11 + $0x310] sm:$0xff]
        %v2784 = vld [vmem:[#allocation11 + $0x318] sm:$0xff]
        %v2785 = vld [vmem:[#allocation11 + $0x320] sm:$0xff]
        %v2786 = vld [vmem:[#allocation11 + $0x328] sm:$0xff]
        %v2787 = vld [vmem:[#allocation11 + $0x330] sm:$0xff]
        %v2788 = vld [vmem:[#allocation11 + $0x338] sm:$0xff]
        %v2789 = vld [vmem:[#allocation11 + $0x340] sm:$0xff]
        %v2790 = vld [vmem:[#allocation11 + $0x348] sm:$0xff]
        %v2791 = vld [vmem:[#allocation11 + $0x350] sm:$0xff]
        %v2792 = vld [vmem:[#allocation11 + $0x358] sm:$0xff]
        %v2793 = vld [vmem:[#allocation11 + $0x360] sm:$0xff]
        %v2794 = vld [vmem:[#allocation11 + $0x368] sm:$0xff]
        %v2795 = vld [vmem:[#allocation11 + $0x370] sm:$0xff]
        %v2796 = vld [vmem:[#allocation11 + $0x378] sm:$0xff]
        %v2797 = vld [vmem:[#allocation11 + $0x380] sm:$0xff]
        %v2798 = vld [vmem:[#allocation11 + $0x388] sm:$0xff]
        %v2799 = vld [vmem:[#allocation11 + $0x390] sm:$0xff]
        %v2800 = vld [vmem:[#allocation11 + $0x398] sm:$0xff]
        %v2801 = vld [vmem:[#allocation11 + $0x3a0] sm:$0xff]
        %v2802 = vld [vmem:[#allocation11 + $0x3a8] sm:$0xff]
        %v2803 = vld [vmem:[#allocation11 + $0x3b0] sm:$0xff]
        %v2804 = vld [vmem:[#allocation11 + $0x3b8] sm:$0xff]
        %v2805 = vld [vmem:[#allocation11 + $0x3c0] sm:$0xff]
        %v2806 = vld [vmem:[#allocation11 + $0x3c8] sm:$0xff]
        %v2807 = vld [vmem:[#allocation11 + $0x3d0] sm:$0xff]
        %v2808 = vld [vmem:[#allocation11 + $0x3d8] sm:$0xff]
        %v2809 = vld [vmem:[#allocation11 + $0x3e0] sm:$0xff]
        %v2810 = vld [vmem:[#allocation11 + $0x3e8] sm:$0xff]
        %v2811 = vld [vmem:[#allocation11 + $0x3f0] sm:$0xff]
        %v2812 = vld [vmem:[#allocation11 + $0x3f8] sm:$0xff]
        %v2813 = vld [vmem:[#allocation11 + $0x400] sm:$0xff]
        %v2814 = vld [vmem:[#allocation11 + $0x408] sm:$0xff]
        %v2815 = vld [vmem:[#allocation11 + $0x410] sm:$0xff]
        %v2816 = vld [vmem:[#allocation11 + $0x418] sm:$0xff]
        %v2817 = vld [vmem:[#allocation11 + $0x420] sm:$0xff]
        %v2818 = vld [vmem:[#allocation11 + $0x428] sm:$0xff]
        %v2819 = vld [vmem:[#allocation11 + $0x430] sm:$0xff]
        %v2820 = vld [vmem:[#allocation11 + $0x438] sm:$0xff]
        %v2821 = vld [vmem:[#allocation11 + $0x440] sm:$0xff]
        %v2822 = vld [vmem:[#allocation11 + $0x448] sm:$0xff]
        %v2823 = vld [vmem:[#allocation11 + $0x450] sm:$0xff]
        %v2824 = vld [vmem:[#allocation11 + $0x458] sm:$0xff]
        %v2825 = vld [vmem:[#allocation11 + $0x460] sm:$0xff]
        %v2826 = vld [vmem:[#allocation11 + $0x468] sm:$0xff]
        %v2827 = vld [vmem:[#allocation11 + $0x470] sm:$0xff]
        %v2828 = vld [vmem:[#allocation11 + $0x478] sm:$0xff]
        %v2829 = vld [vmem:[#allocation11 + $0x480] sm:$0xff]
        %v2830 = vld [vmem:[#allocation11 + $0x488] sm:$0xff]
        %v2831 = vld [vmem:[#allocation11 + $0x490] sm:$0xff]
        %v2832 = vld [vmem:[#allocation11 + $0x498] sm:$0xff]
        %v2833 = vld [vmem:[#allocation11 + $0x4a0] sm:$0xff]
        %v2834 = vld [vmem:[#allocation11 + $0x4a8] sm:$0xff]
        %v2835 = vld [vmem:[#allocation11 + $0x4b0] sm:$0xff]
        %v2836 = vld [vmem:[#allocation11 + $0x4b8] sm:$0xff]
        %v2837 = vld [vmem:[#allocation11 + $0x4c0] sm:$0xff]
        %v2838 = vld [vmem:[#allocation11 + $0x4c8] sm:$0xff]
        %v2839 = vld [vmem:[#allocation11 + $0x4d0] sm:$0xff]
        %v2840 = vld [vmem:[#allocation11 + $0x4d8] sm:$0xff]
        %v2841 = vld [vmem:[#allocation11 + $0x4e0] sm:$0xff]
        %v2842 = vld [vmem:[#allocation11 + $0x4e8] sm:$0xff]
        %v2843 = vld [vmem:[#allocation11 + $0x4f0] sm:$0xff]
        %v2844 = vld [vmem:[#allocation11 + $0x4f8] sm:$0xff]
        %v2845 = vld [vmem:[#allocation11 + $0x500] sm:$0xff]
        %v2846 = vld [vmem:[#allocation11 + $0x508] sm:$0xff]
        %v2847 = vld [vmem:[#allocation11 + $0x510] sm:$0xff]
        %v2848 = vld [vmem:[#allocation11 + $0x518] sm:$0xff]
        %v2849 = vld [vmem:[#allocation11 + $0x520] sm:$0xff]
        %v2850 = vld [vmem:[#allocation11 + $0x528] sm:$0xff]
        %v2851 = vld [vmem:[#allocation11 + $0x530] sm:$0xff]
        %v2852 = vld [vmem:[#allocation11 + $0x538] sm:$0xff]
        %v2853 = vld [vmem:[#allocation11 + $0x540] sm:$0xff]
        %v2854 = vld [vmem:[#allocation11 + $0x548] sm:$0xff]
        %v2855 = vld [vmem:[#allocation11 + $0x550] sm:$0xff]
        %v2856 = vld [vmem:[#allocation11 + $0x558] sm:$0xff]
        %v2857 = vld [vmem:[#allocation11 + $0x560] sm:$0xff]
        %v2858 = vld [vmem:[#allocation11 + $0x568] sm:$0xff]
        %v2859 = vld [vmem:[#allocation11 + $0x570] sm:$0xff]
        %v2860 = vld [vmem:[#allocation11 + $0x578] sm:$0xff]
        %v2861 = vld [vmem:[#allocation11 + $0x580] sm:$0xff]
        %v2862 = vld [vmem:[#allocation11 + $0x588] sm:$0xff]
        %v2863 = vld [vmem:[#allocation11 + $0x590] sm:$0xff]
        %v2864 = vld [vmem:[#allocation11 + $0x598] sm:$0xff]
        %v2865 = vld [vmem:[#allocation11 + $0x5a0] sm:$0xff]
        %v2866 = vld [vmem:[#allocation11 + $0x5a8] sm:$0xff]
        %v2867 = vld [vmem:[#allocation11 + $0x5b0] sm:$0xff]
        %v2868 = vld [vmem:[#allocation11 + $0x5b8] sm:$0xff]
        %v2869 = vld [vmem:[#allocation11 + $0x5c0] sm:$0xff]
        %v2870 = vld [vmem:[#allocation11 + $0x5c8] sm:$0xff]
        %v2871 = vld [vmem:[#allocation11 + $0x5d0] sm:$0xff]
        %v2872 = vld [vmem:[#allocation11 + $0x5d8] sm:$0xff]
        %v2873 = vld [vmem:[#allocation11 + $0x5e0] sm:$0xff]
        %v2874 = vld [vmem:[#allocation11 + $0x5e8] sm:$0xff]
        %v2875 = vld [vmem:[#allocation11 + $0x5f0] sm:$0xff]
        %v2876 = vld [vmem:[#allocation11 + $0x5f8] sm:$0xff]
        %v2877 = vld [vmem:[%s8] sm:$0x3f]
        %v2879 = vlaneseq
        %v2880 = vshrl.u32 %v2879, 7
        %v2881 = vsub.s32 0, %v2880
        %v2882 = vrot.slane %v2877, %v2881
        %v2883 = vlaneseq
        %v2884 = vshrl.u32 %v2883, 7
        %v2885 = vsub.s32 1, %v2884
        %v2886 = vrot.slane %v2877, %v2885
        %v2887 = vlaneseq
        %v2888 = vshrl.u32 %v2887, 7
        %v2889 = vsub.s32 2, %v2888
        %v2890 = vrot.slane %v2877, %v2889
        %v2891 = vlaneseq
        %v2892 = vshrl.u32 %v2891, 7
        %v2893 = vsub.s32 3, %v2892
        %v2894 = vrot.slane %v2877, %v2893
        %v2895 = vlaneseq
        %v2896 = vshrl.u32 %v2895, 7
        %v2897 = vsub.s32 4, %v2896
        %v2898 = vrot.slane %v2877, %v2897
        %v2899 = vlaneseq
        %v2900 = vshrl.u32 %v2899, 7
        %v2901 = vsub.s32 5, %v2900
        %v2902 = vrot.slane %v2877, %v2901
        %v3101 = vunpack.c.l.b16 %v2685
        %v3102 = vunpack.c.h.b16 %v2685
        %v3103 = vunpack.c.l.b16 %v2686
        %v3104 = vunpack.c.h.b16 %v2686
        %v3105 = vunpack.c.l.b16 %v2687
        %v3106 = vunpack.c.h.b16 %v2687
        %v3107 = vunpack.c.l.b16 %v2688
        %v3108 = vunpack.c.h.b16 %v2688
        %v3109 = vunpack.c.l.b16 %v2689
        %v3110 = vunpack.c.h.b16 %v2689
        %v3111 = vunpack.c.l.b16 %v2690
        %v3112 = vunpack.c.h.b16 %v2690
        %v3113 = vunpack.c.l.b16 %v2691
        %v3114 = vunpack.c.h.b16 %v2691
        %v3115 = vunpack.c.l.b16 %v2692
        %v3116 = vunpack.c.h.b16 %v2692
        %v3117 = vunpack.c.l.b16 %v2693
        %v3118 = vunpack.c.h.b16 %v2693
        %v3119 = vunpack.c.l.b16 %v2694
        %v3120 = vunpack.c.h.b16 %v2694
        %v3121 = vunpack.c.l.b16 %v2695
        %v3122 = vunpack.c.h.b16 %v2695
        %v3123 = vunpack.c.l.b16 %v2696
        %v3124 = vunpack.c.h.b16 %v2696
        %v3125 = vunpack.c.l.b16 %v2697
        %v3126 = vunpack.c.h.b16 %v2697
        %v3127 = vunpack.c.l.b16 %v2698
        %v3128 = vunpack.c.h.b16 %v2698
        %v3129 = vunpack.c.l.b16 %v2699
        %v3130 = vunpack.c.h.b16 %v2699
        %v3131 = vunpack.c.l.b16 %v2700
        %v3132 = vunpack.c.h.b16 %v2700
        %v3133 = vunpack.c.l.b16 %v2701
        %v3134 = vunpack.c.h.b16 %v2701
        %v3135 = vunpack.c.l.b16 %v2702
        %v3136 = vunpack.c.h.b16 %v2702
        %v3137 = vunpack.c.l.b16 %v2703
        %v3138 = vunpack.c.h.b16 %v2703
        %v3139 = vunpack.c.l.b16 %v2704
        %v3140 = vunpack.c.h.b16 %v2704
        %v3141 = vunpack.c.l.b16 %v2705
        %v3142 = vunpack.c.h.b16 %v2705
        %v3143 = vunpack.c.l.b16 %v2706
        %v3144 = vunpack.c.h.b16 %v2706
        %v3145 = vunpack.c.l.b16 %v2707
        %v3146 = vunpack.c.h.b16 %v2707
        %v3147 = vunpack.c.l.b16 %v2708
        %v3148 = vunpack.c.h.b16 %v2708
        %v3149 = vunpack.c.l.b16 %v2709
        %v3150 = vunpack.c.h.b16 %v2709
        %v3151 = vunpack.c.l.b16 %v2710
        %v3152 = vunpack.c.h.b16 %v2710
        %v3153 = vunpack.c.l.b16 %v2711
        %v3154 = vunpack.c.h.b16 %v2711
        %v3155 = vunpack.c.l.b16 %v2712
        %v3156 = vunpack.c.h.b16 %v2712
        %v3157 = vunpack.c.l.b16 %v2713
        %v3158 = vunpack.c.h.b16 %v2713
        %v3159 = vunpack.c.l.b16 %v2714
        %v3160 = vunpack.c.h.b16 %v2714
        %v3161 = vunpack.c.l.b16 %v2715
        %v3162 = vunpack.c.h.b16 %v2715
        %v3163 = vunpack.c.l.b16 %v2716
        %v3164 = vunpack.c.h.b16 %v2716
        %v3165 = vunpack.c.l.b16 %v2717
        %v3166 = vunpack.c.h.b16 %v2717
        %v3167 = vunpack.c.l.b16 %v2718
        %v3168 = vunpack.c.h.b16 %v2718
        %v3169 = vunpack.c.l.b16 %v2719
        %v3170 = vunpack.c.h.b16 %v2719
        %v3171 = vunpack.c.l.b16 %v2720
        %v3172 = vunpack.c.h.b16 %v2720
        %v3173 = vunpack.c.l.b16 %v2721
        %v3174 = vunpack.c.h.b16 %v2721
        %v3175 = vunpack.c.l.b16 %v2722
        %v3176 = vunpack.c.h.b16 %v2722
        %v3177 = vunpack.c.l.b16 %v2723
        %v3178 = vunpack.c.h.b16 %v2723
        %v3179 = vunpack.c.l.b16 %v2724
        %v3180 = vunpack.c.h.b16 %v2724
        %v3181 = vunpack.c.l.b16 %v2725
        %v3182 = vunpack.c.h.b16 %v2725
        %v3183 = vunpack.c.l.b16 %v2726
        %v3184 = vunpack.c.h.b16 %v2726
        %v3185 = vunpack.c.l.b16 %v2727
        %v3186 = vunpack.c.h.b16 %v2727
        %v3187 = vunpack.c.l.b16 %v2728
        %v3188 = vunpack.c.h.b16 %v2728
        %v3189 = vunpack.c.l.b16 %v2729
        %v3190 = vunpack.c.h.b16 %v2729
        %v3191 = vunpack.c.l.b16 %v2730
        %v3192 = vunpack.c.h.b16 %v2730
        %v3193 = vunpack.c.l.b16 %v2731
        %v3194 = vunpack.c.h.b16 %v2731
        %v3195 = vunpack.c.l.b16 %v2732
        %v3196 = vunpack.c.h.b16 %v2732
        %v3197 = vunpack.c.l.b16 %v2733
        %v3198 = vunpack.c.h.b16 %v2733
        %v3199 = vunpack.c.l.b16 %v2734
        %v3200 = vunpack.c.h.b16 %v2734
        %v3201 = vunpack.c.l.b16 %v2735
        %v3202 = vunpack.c.h.b16 %v2735
        %v3203 = vunpack.c.l.b16 %v2736
        %v3204 = vunpack.c.h.b16 %v2736
        %v3205 = vunpack.c.l.b16 %v2737
        %v3206 = vunpack.c.h.b16 %v2737
        %v3207 = vunpack.c.l.b16 %v2738
        %v3208 = vunpack.c.h.b16 %v2738
        %v3209 = vunpack.c.l.b16 %v2739
        %v3210 = vunpack.c.h.b16 %v2739
        %v3211 = vunpack.c.l.b16 %v2740
        %v3212 = vunpack.c.h.b16 %v2740
        %v3213 = vunpack.c.l.b16 %v2741
        %v3214 = vunpack.c.h.b16 %v2741
        %v3215 = vunpack.c.l.b16 %v2742
        %v3216 = vunpack.c.h.b16 %v2742
        %v3217 = vunpack.c.l.b16 %v2743
        %v3218 = vunpack.c.h.b16 %v2743
        %v3219 = vunpack.c.l.b16 %v2744
        %v3220 = vunpack.c.h.b16 %v2744
        %v3221 = vunpack.c.l.b16 %v2745
        %v3222 = vunpack.c.h.b16 %v2745
        %v3223 = vunpack.c.l.b16 %v2746
        %v3224 = vunpack.c.h.b16 %v2746
        %v3225 = vunpack.c.l.b16 %v2747
        %v3226 = vunpack.c.h.b16 %v2747
        %v3227 = vunpack.c.l.b16 %v2748
        %v3228 = vunpack.c.h.b16 %v2748
        %v3229 = vunpack.c.l.b16 %v2749
        %v3230 = vunpack.c.h.b16 %v2749
        %v3231 = vunpack.c.l.b16 %v2750
        %v3232 = vunpack.c.h.b16 %v2750
        %v3233 = vunpack.c.l.b16 %v2751
        %v3234 = vunpack.c.h.b16 %v2751
        %v3235 = vunpack.c.l.b16 %v2752
        %v3236 = vunpack.c.h.b16 %v2752
        %v3237 = vunpack.c.l.b16 %v2753
        %v3238 = vunpack.c.h.b16 %v2753
        %v3239 = vunpack.c.l.b16 %v2754
        %v3240 = vunpack.c.h.b16 %v2754
        %v3241 = vunpack.c.l.b16 %v2755
        %v3242 = vunpack.c.h.b16 %v2755
        %v3243 = vunpack.c.l.b16 %v2756
        %v3244 = vunpack.c.h.b16 %v2756
        %v3245 = vunpack.c.l.b16 %v2757
        %v3246 = vunpack.c.h.b16 %v2757
        %v3247 = vunpack.c.l.b16 %v2758
        %v3248 = vunpack.c.h.b16 %v2758
        %v3249 = vunpack.c.l.b16 %v2759
        %v3250 = vunpack.c.h.b16 %v2759
        %v3251 = vunpack.c.l.b16 %v2760
        %v3252 = vunpack.c.h.b16 %v2760
        %v3253 = vunpack.c.l.b16 %v2761
        %v3254 = vunpack.c.h.b16 %v2761
        %v3255 = vunpack.c.l.b16 %v2762
        %v3256 = vunpack.c.h.b16 %v2762
        %v3257 = vunpack.c.l.b16 %v2763
        %v3258 = vunpack.c.h.b16 %v2763
        %v3259 = vunpack.c.l.b16 %v2764
        %v3260 = vunpack.c.h.b16 %v2764
        %v3261 = vunpack.c.l.b16 %v2765
        %v3262 = vunpack.c.h.b16 %v2765
        %v3263 = vunpack.c.l.b16 %v2766
        %v3264 = vunpack.c.h.b16 %v2766
        %v3265 = vunpack.c.l.b16 %v2767
        %v3266 = vunpack.c.h.b16 %v2767
        %v3267 = vunpack.c.l.b16 %v2768
        %v3268 = vunpack.c.h.b16 %v2768
        %v3269 = vunpack.c.l.b16 %v2769
        %v3270 = vunpack.c.h.b16 %v2769
        %v3271 = vunpack.c.l.b16 %v2770
        %v3272 = vunpack.c.h.b16 %v2770
        %v3273 = vunpack.c.l.b16 %v2771
        %v3274 = vunpack.c.h.b16 %v2771
        %v3275 = vunpack.c.l.b16 %v2772
        %v3276 = vunpack.c.h.b16 %v2772
        %v3277 = vunpack.c.l.b16 %v2773
        %v3278 = vunpack.c.h.b16 %v2773
        %v3279 = vunpack.c.l.b16 %v2774
        %v3280 = vunpack.c.h.b16 %v2774
        %v3281 = vunpack.c.l.b16 %v2775
        %v3282 = vunpack.c.h.b16 %v2775
        %v3283 = vunpack.c.l.b16 %v2776
        %v3284 = vunpack.c.h.b16 %v2776
        %v3285 = vunpack.c.l.b16 %v2777
        %v3286 = vunpack.c.h.b16 %v2777
        %v3287 = vunpack.c.l.b16 %v2778
        %v3288 = vunpack.c.h.b16 %v2778
        %v3289 = vunpack.c.l.b16 %v2779
        %v3290 = vunpack.c.h.b16 %v2779
        %v3291 = vunpack.c.l.b16 %v2780
        %v3292 = vunpack.c.h.b16 %v2780
        %v3293 = vunpack.c.l.b16 %v2781
        %v3294 = vunpack.c.h.b16 %v2781
        %v3295 = vunpack.c.l.b16 %v2782
        %v3296 = vunpack.c.h.b16 %v2782
        %v3297 = vunpack.c.l.b16 %v2783
        %v3298 = vunpack.c.h.b16 %v2783
        %v3299 = vunpack.c.l.b16 %v2784
        %v3300 = vunpack.c.h.b16 %v2784
        %v3301 = vunpack.c.l.b16 %v2785
        %v3302 = vunpack.c.h.b16 %v2785
        %v3303 = vunpack.c.l.b16 %v2786
        %v3304 = vunpack.c.h.b16 %v2786
        %v3305 = vunpack.c.l.b16 %v2787
        %v3306 = vunpack.c.h.b16 %v2787
        %v3307 = vunpack.c.l.b16 %v2788
        %v3308 = vunpack.c.h.b16 %v2788
        %v3309 = vunpack.c.l.b16 %v2789
        %v3310 = vunpack.c.h.b16 %v2789
        %v3311 = vunpack.c.l.b16 %v2790
        %v3312 = vunpack.c.h.b16 %v2790
        %v3313 = vunpack.c.l.b16 %v2791
        %v3314 = vunpack.c.h.b16 %v2791
        %v3315 = vunpack.c.l.b16 %v2792
        %v3316 = vunpack.c.h.b16 %v2792
        %v3317 = vunpack.c.l.b16 %v2793
        %v3318 = vunpack.c.h.b16 %v2793
        %v3319 = vunpack.c.l.b16 %v2794
        %v3320 = vunpack.c.h.b16 %v2794
        %v3321 = vunpack.c.l.b16 %v2795
        %v3322 = vunpack.c.h.b16 %v2795
        %v3323 = vunpack.c.l.b16 %v2796
        %v3324 = vunpack.c.h.b16 %v2796
        %v3325 = vunpack.c.l.b16 %v2797
        %v3326 = vunpack.c.h.b16 %v2797
        %v3327 = vunpack.c.l.b16 %v2798
        %v3328 = vunpack.c.h.b16 %v2798
        %v3329 = vunpack.c.l.b16 %v2799
        %v3330 = vunpack.c.h.b16 %v2799
        %v3331 = vunpack.c.l.b16 %v2800
        %v3332 = vunpack.c.h.b16 %v2800
        %v3333 = vunpack.c.l.b16 %v2801
        %v3334 = vunpack.c.h.b16 %v2801
        %v3335 = vunpack.c.l.b16 %v2802
        %v3336 = vunpack.c.h.b16 %v2802
        %v3337 = vunpack.c.l.b16 %v2803
        %v3338 = vunpack.c.h.b16 %v2803
        %v3339 = vunpack.c.l.b16 %v2804
        %v3340 = vunpack.c.h.b16 %v2804
        %v3341 = vunpack.c.l.b16 %v2805
        %v3342 = vunpack.c.h.b16 %v2805
        %v3343 = vunpack.c.l.b16 %v2806
        %v3344 = vunpack.c.h.b16 %v2806
        %v3345 = vunpack.c.l.b16 %v2807
        %v3346 = vunpack.c.h.b16 %v2807
        %v3347 = vunpack.c.l.b16 %v2808
        %v3348 = vunpack.c.h.b16 %v2808
        %v3349 = vunpack.c.l.b16 %v2809
        %v3350 = vunpack.c.h.b16 %v2809
        %v3351 = vunpack.c.l.b16 %v2810
        %v3352 = vunpack.c.h.b16 %v2810
        %v3353 = vunpack.c.l.b16 %v2811
        %v3354 = vunpack.c.h.b16 %v2811
        %v3355 = vunpack.c.l.b16 %v2812
        %v3356 = vunpack.c.h.b16 %v2812
        %v3357 = vunpack.c.l.b16 %v2813
        %v3358 = vunpack.c.h.b16 %v2813
        %v3359 = vunpack.c.l.b16 %v2814
        %v3360 = vunpack.c.h.b16 %v2814
        %v3361 = vunpack.c.l.b16 %v2815
        %v3362 = vunpack.c.h.b16 %v2815
        %v3363 = vunpack.c.l.b16 %v2816
        %v3364 = vunpack.c.h.b16 %v2816
        %v3365 = vunpack.c.l.b16 %v2817
        %v3366 = vunpack.c.h.b16 %v2817
        %v3367 = vunpack.c.l.b16 %v2818
        %v3368 = vunpack.c.h.b16 %v2818
        %v3369 = vunpack.c.l.b16 %v2819
        %v3370 = vunpack.c.h.b16 %v2819
        %v3371 = vunpack.c.l.b16 %v2820
        %v3372 = vunpack.c.h.b16 %v2820
        %v3373 = vunpack.c.l.b16 %v2821
        %v3374 = vunpack.c.h.b16 %v2821
        %v3375 = vunpack.c.l.b16 %v2822
        %v3376 = vunpack.c.h.b16 %v2822
        %v3377 = vunpack.c.l.b16 %v2823
        %v3378 = vunpack.c.h.b16 %v2823
        %v3379 = vunpack.c.l.b16 %v2824
        %v3380 = vunpack.c.h.b16 %v2824
        %v3381 = vunpack.c.l.b16 %v2825
        %v3382 = vunpack.c.h.b16 %v2825
        %v3383 = vunpack.c.l.b16 %v2826
        %v3384 = vunpack.c.h.b16 %v2826
        %v3385 = vunpack.c.l.b16 %v2827
        %v3386 = vunpack.c.h.b16 %v2827
        %v3387 = vunpack.c.l.b16 %v2828
        %v3388 = vunpack.c.h.b16 %v2828
        %v3389 = vunpack.c.l.b16 %v2829
        %v3390 = vunpack.c.h.b16 %v2829
        %v3391 = vunpack.c.l.b16 %v2830
        %v3392 = vunpack.c.h.b16 %v2830
        %v3393 = vunpack.c.l.b16 %v2831
        %v3394 = vunpack.c.h.b16 %v2831
        %v3395 = vunpack.c.l.b16 %v2832
        %v3396 = vunpack.c.h.b16 %v2832
        %v3397 = vunpack.c.l.b16 %v2833
        %v3398 = vunpack.c.h.b16 %v2833
        %v3399 = vunpack.c.l.b16 %v2834
        %v3400 = vunpack.c.h.b16 %v2834
        %v3401 = vunpack.c.l.b16 %v2835
        %v3402 = vunpack.c.h.b16 %v2835
        %v3403 = vunpack.c.l.b16 %v2836
        %v3404 = vunpack.c.h.b16 %v2836
        %v3405 = vunpack.c.l.b16 %v2837
        %v3406 = vunpack.c.h.b16 %v2837
        %v3407 = vunpack.c.l.b16 %v2838
        %v3408 = vunpack.c.h.b16 %v2838
        %v3409 = vunpack.c.l.b16 %v2839
        %v3410 = vunpack.c.h.b16 %v2839
        %v3411 = vunpack.c.l.b16 %v2840
        %v3412 = vunpack.c.h.b16 %v2840
        %v3413 = vunpack.c.l.b16 %v2841
        %v3414 = vunpack.c.h.b16 %v2841
        %v3415 = vunpack.c.l.b16 %v2842
        %v3416 = vunpack.c.h.b16 %v2842
        %v3417 = vunpack.c.l.b16 %v2843
        %v3418 = vunpack.c.h.b16 %v2843
        %v3419 = vunpack.c.l.b16 %v2844
        %v3420 = vunpack.c.h.b16 %v2844
        %v3421 = vunpack.c.l.b16 %v2845
        %v3422 = vunpack.c.h.b16 %v2845
        %v3423 = vunpack.c.l.b16 %v2846
        %v3424 = vunpack.c.h.b16 %v2846
        %v3425 = vunpack.c.l.b16 %v2847
        %v3426 = vunpack.c.h.b16 %v2847
        %v3427 = vunpack.c.l.b16 %v2848
        %v3428 = vunpack.c.h.b16 %v2848
        %v3429 = vunpack.c.l.b16 %v2849
        %v3430 = vunpack.c.h.b16 %v2849
        %v3431 = vunpack.c.l.b16 %v2850
        %v3432 = vunpack.c.h.b16 %v2850
        %v3433 = vunpack.c.l.b16 %v2851
        %v3434 = vunpack.c.h.b16 %v2851
        %v3435 = vunpack.c.l.b16 %v2852
        %v3436 = vunpack.c.h.b16 %v2852
        %v3437 = vunpack.c.l.b16 %v2853
        %v3438 = vunpack.c.h.b16 %v2853
        %v3439 = vunpack.c.l.b16 %v2854
        %v3440 = vunpack.c.h.b16 %v2854
        %v3441 = vunpack.c.l.b16 %v2855
        %v3442 = vunpack.c.h.b16 %v2855
        %v3443 = vunpack.c.l.b16 %v2856
        %v3444 = vunpack.c.h.b16 %v2856
        %v3445 = vunpack.c.l.b16 %v2857
        %v3446 = vunpack.c.h.b16 %v2857
        %v3447 = vunpack.c.l.b16 %v2858
        %v3448 = vunpack.c.h.b16 %v2858
        %v3449 = vunpack.c.l.b16 %v2859
        %v3450 = vunpack.c.h.b16 %v2859
        %v3451 = vunpack.c.l.b16 %v2860
        %v3452 = vunpack.c.h.b16 %v2860
        %v3453 = vunpack.c.l.b16 %v2861
        %v3454 = vunpack.c.h.b16 %v2861
        %v3455 = vunpack.c.l.b16 %v2862
        %v3456 = vunpack.c.h.b16 %v2862
        %v3457 = vunpack.c.l.b16 %v2863
        %v3458 = vunpack.c.h.b16 %v2863
        %v3459 = vunpack.c.l.b16 %v2864
        %v3460 = vunpack.c.h.b16 %v2864
        %v3461 = vunpack.c.l.b16 %v2865
        %v3462 = vunpack.c.h.b16 %v2865
        %v3463 = vunpack.c.l.b16 %v2866
        %v3464 = vunpack.c.h.b16 %v2866
        %v3465 = vunpack.c.l.b16 %v2867
        %v3466 = vunpack.c.h.b16 %v2867
        %v3467 = vunpack.c.l.b16 %v2868
        %v3468 = vunpack.c.h.b16 %v2868
        %v3469 = vunpack.c.l.b16 %v2869
        %v3470 = vunpack.c.h.b16 %v2869
        %v3471 = vunpack.c.l.b16 %v2870
        %v3472 = vunpack.c.h.b16 %v2870
        %v3473 = vunpack.c.l.b16 %v2871
        %v3474 = vunpack.c.h.b16 %v2871
        %v3475 = vunpack.c.l.b16 %v2872
        %v3476 = vunpack.c.h.b16 %v2872
        %v3477 = vunpack.c.l.b16 %v2873
        %v3478 = vunpack.c.h.b16 %v2873
        %v3479 = vunpack.c.l.b16 %v2874
        %v3480 = vunpack.c.h.b16 %v2874
        %v3481 = vunpack.c.l.b16 %v2875
        %v3482 = vunpack.c.h.b16 %v2875
        %v3483 = vunpack.c.l.b16 %v2876
        %v3484 = vunpack.c.h.b16 %v2876
        %v3485 = vpack.c.b16 %v3107, %v3101
        %v3486 = vpack.c.b16 %v3108, %v3102
        %v3487 = vpack.c.b16 %v3109, %v3103
        %v3488 = vpack.c.b16 %v3110, %v3104
        %v3489 = vpack.c.b16 %v3111, %v3105
        %v3490 = vpack.c.b16 %v3112, %v3106
        %v3491 = vpack.c.b16 %v3119, %v3113
        %v3492 = vpack.c.b16 %v3120, %v3114
        %v3493 = vpack.c.b16 %v3121, %v3115
        %v3494 = vpack.c.b16 %v3122, %v3116
        %v3495 = vpack.c.b16 %v3123, %v3117
        %v3496 = vpack.c.b16 %v3124, %v3118
        %v3497 = vpack.c.b16 %v3131, %v3125
        %v3498 = vpack.c.b16 %v3132, %v3126
        %v3499 = vpack.c.b16 %v3133, %v3127
        %v3500 = vpack.c.b16 %v3134, %v3128
        %v3501 = vpack.c.b16 %v3135, %v3129
        %v3502 = vpack.c.b16 %v3136, %v3130
        %v3503 = vpack.c.b16 %v3143, %v3137
        %v3504 = vpack.c.b16 %v3144, %v3138
        %v3505 = vpack.c.b16 %v3145, %v3139
        %v3506 = vpack.c.b16 %v3146, %v3140
        %v3507 = vpack.c.b16 %v3147, %v3141
        %v3508 = vpack.c.b16 %v3148, %v3142
        %v3509 = vpack.c.b16 %v3155, %v3149
        %v3510 = vpack.c.b16 %v3156, %v3150
        %v3511 = vpack.c.b16 %v3157, %v3151
        %v3512 = vpack.c.b16 %v3158, %v3152
        %v3513 = vpack.c.b16 %v3159, %v3153
        %v3514 = vpack.c.b16 %v3160, %v3154
        %v3515 = vpack.c.b16 %v3167, %v3161
        %v3516 = vpack.c.b16 %v3168, %v3162
        %v3517 = vpack.c.b16 %v3169, %v3163
        %v3518 = vpack.c.b16 %v3170, %v3164
        %v3519 = vpack.c.b16 %v3171, %v3165
        %v3520 = vpack.c.b16 %v3172, %v3166
        %v3521 = vpack.c.b16 %v3179, %v3173
        %v3522 = vpack.c.b16 %v3180, %v3174
        %v3523 = vpack.c.b16 %v3181, %v3175
        %v3524 = vpack.c.b16 %v3182, %v3176
        %v3525 = vpack.c.b16 %v3183, %v3177
        %v3526 = vpack.c.b16 %v3184, %v3178
        %v3527 = vpack.c.b16 %v3191, %v3185
        %v3528 = vpack.c.b16 %v3192, %v3186
        %v3529 = vpack.c.b16 %v3193, %v3187
        %v3530 = vpack.c.b16 %v3194, %v3188
        %v3531 = vpack.c.b16 %v3195, %v3189
        %v3532 = vpack.c.b16 %v3196, %v3190
        %v3533 = vpack.c.b16 %v3203, %v3197
        %v3534 = vpack.c.b16 %v3204, %v3198
        %v3535 = vpack.c.b16 %v3205, %v3199
        %v3536 = vpack.c.b16 %v3206, %v3200
        %v3537 = vpack.c.b16 %v3207, %v3201
        %v3538 = vpack.c.b16 %v3208, %v3202
        %v3539 = vpack.c.b16 %v3215, %v3209
        %v3540 = vpack.c.b16 %v3216, %v3210
        %v3541 = vpack.c.b16 %v3217, %v3211
        %v3542 = vpack.c.b16 %v3218, %v3212
        %v3543 = vpack.c.b16 %v3219, %v3213
        %v3544 = vpack.c.b16 %v3220, %v3214
        %v3545 = vpack.c.b16 %v3227, %v3221
        %v3546 = vpack.c.b16 %v3228, %v3222
        %v3547 = vpack.c.b16 %v3229, %v3223
        %v3548 = vpack.c.b16 %v3230, %v3224
        %v3549 = vpack.c.b16 %v3231, %v3225
        %v3550 = vpack.c.b16 %v3232, %v3226
        %v3551 = vpack.c.b16 %v3239, %v3233
        %v3552 = vpack.c.b16 %v3240, %v3234
        %v3553 = vpack.c.b16 %v3241, %v3235
        %v3554 = vpack.c.b16 %v3242, %v3236
        %v3555 = vpack.c.b16 %v3243, %v3237
        %v3556 = vpack.c.b16 %v3244, %v3238
        %v3557 = vpack.c.b16 %v3251, %v3245
        %v3558 = vpack.c.b16 %v3252, %v3246
        %v3559 = vpack.c.b16 %v3253, %v3247
        %v3560 = vpack.c.b16 %v3254, %v3248
        %v3561 = vpack.c.b16 %v3255, %v3249
        %v3562 = vpack.c.b16 %v3256, %v3250
        %v3563 = vpack.c.b16 %v3263, %v3257
        %v3564 = vpack.c.b16 %v3264, %v3258
        %v3565 = vpack.c.b16 %v3265, %v3259
        %v3566 = vpack.c.b16 %v3266, %v3260
        %v3567 = vpack.c.b16 %v3267, %v3261
        %v3568 = vpack.c.b16 %v3268, %v3262
        %v3569 = vpack.c.b16 %v3275, %v3269
        %v3570 = vpack.c.b16 %v3276, %v3270
        %v3571 = vpack.c.b16 %v3277, %v3271
        %v3572 = vpack.c.b16 %v3278, %v3272
        %v3573 = vpack.c.b16 %v3279, %v3273
        %v3574 = vpack.c.b16 %v3280, %v3274
        %v3575 = vpack.c.b16 %v3287, %v3281
        %v3576 = vpack.c.b16 %v3288, %v3282
        %v3577 = vpack.c.b16 %v3289, %v3283
        %v3578 = vpack.c.b16 %v3290, %v3284
        %v3579 = vpack.c.b16 %v3291, %v3285
        %v3580 = vpack.c.b16 %v3292, %v3286
        %v3581 = vpack.c.b16 %v3299, %v3293
        %v3582 = vpack.c.b16 %v3300, %v3294
        %v3583 = vpack.c.b16 %v3301, %v3295
        %v3584 = vpack.c.b16 %v3302, %v3296
        %v3585 = vpack.c.b16 %v3303, %v3297
        %v3586 = vpack.c.b16 %v3304, %v3298
        %v3587 = vpack.c.b16 %v3311, %v3305
        %v3588 = vpack.c.b16 %v3312, %v3306
        %v3589 = vpack.c.b16 %v3313, %v3307
        %v3590 = vpack.c.b16 %v3314, %v3308
        %v3591 = vpack.c.b16 %v3315, %v3309
        %v3592 = vpack.c.b16 %v3316, %v3310
        %v3593 = vpack.c.b16 %v3323, %v3317
        %v3594 = vpack.c.b16 %v3324, %v3318
        %v3595 = vpack.c.b16 %v3325, %v3319
        %v3596 = vpack.c.b16 %v3326, %v3320
        %v3597 = vpack.c.b16 %v3327, %v3321
        %v3598 = vpack.c.b16 %v3328, %v3322
        %v3599 = vpack.c.b16 %v3335, %v3329
        %v3600 = vpack.c.b16 %v3336, %v3330
        %v3601 = vpack.c.b16 %v3337, %v3331
        %v3602 = vpack.c.b16 %v3338, %v3332
        %v3603 = vpack.c.b16 %v3339, %v3333
        %v3604 = vpack.c.b16 %v3340, %v3334
        %v3605 = vpack.c.b16 %v3347, %v3341
        %v3606 = vpack.c.b16 %v3348, %v3342
        %v3607 = vpack.c.b16 %v3349, %v3343
        %v3608 = vpack.c.b16 %v3350, %v3344
        %v3609 = vpack.c.b16 %v3351, %v3345
        %v3610 = vpack.c.b16 %v3352, %v3346
        %v3611 = vpack.c.b16 %v3359, %v3353
        %v3612 = vpack.c.b16 %v3360, %v3354
        %v3613 = vpack.c.b16 %v3361, %v3355
        %v3614 = vpack.c.b16 %v3362, %v3356
        %v3615 = vpack.c.b16 %v3363, %v3357
        %v3616 = vpack.c.b16 %v3364, %v3358
        %v3617 = vpack.c.b16 %v3371, %v3365
        %v3618 = vpack.c.b16 %v3372, %v3366
        %v3619 = vpack.c.b16 %v3373, %v3367
        %v3620 = vpack.c.b16 %v3374, %v3368
        %v3621 = vpack.c.b16 %v3375, %v3369
        %v3622 = vpack.c.b16 %v3376, %v3370
        %v3623 = vpack.c.b16 %v3383, %v3377
        %v3624 = vpack.c.b16 %v3384, %v3378
        %v3625 = vpack.c.b16 %v3385, %v3379
        %v3626 = vpack.c.b16 %v3386, %v3380
        %v3627 = vpack.c.b16 %v3387, %v3381
        %v3628 = vpack.c.b16 %v3388, %v3382
        %v3629 = vpack.c.b16 %v3395, %v3389
        %v3630 = vpack.c.b16 %v3396, %v3390
        %v3631 = vpack.c.b16 %v3397, %v3391
        %v3632 = vpack.c.b16 %v3398, %v3392
        %v3633 = vpack.c.b16 %v3399, %v3393
        %v3634 = vpack.c.b16 %v3400, %v3394
        %v3635 = vpack.c.b16 %v3407, %v3401
        %v3636 = vpack.c.b16 %v3408, %v3402
        %v3637 = vpack.c.b16 %v3409, %v3403
        %v3638 = vpack.c.b16 %v3410, %v3404
        %v3639 = vpack.c.b16 %v3411, %v3405
        %v3640 = vpack.c.b16 %v3412, %v3406
        %v3641 = vpack.c.b16 %v3419, %v3413
        %v3642 = vpack.c.b16 %v3420, %v3414
        %v3643 = vpack.c.b16 %v3421, %v3415
        %v3644 = vpack.c.b16 %v3422, %v3416
        %v3645 = vpack.c.b16 %v3423, %v3417
        %v3646 = vpack.c.b16 %v3424, %v3418
        %v3647 = vpack.c.b16 %v3431, %v3425
        %v3648 = vpack.c.b16 %v3432, %v3426
        %v3649 = vpack.c.b16 %v3433, %v3427
        %v3650 = vpack.c.b16 %v3434, %v3428
        %v3651 = vpack.c.b16 %v3435, %v3429
        %v3652 = vpack.c.b16 %v3436, %v3430
        %v3653 = vpack.c.b16 %v3443, %v3437
        %v3654 = vpack.c.b16 %v3444, %v3438
        %v3655 = vpack.c.b16 %v3445, %v3439
        %v3656 = vpack.c.b16 %v3446, %v3440
        %v3657 = vpack.c.b16 %v3447, %v3441
        %v3658 = vpack.c.b16 %v3448, %v3442
        %v3659 = vpack.c.b16 %v3455, %v3449
        %v3660 = vpack.c.b16 %v3456, %v3450
        %v3661 = vpack.c.b16 %v3457, %v3451
        %v3662 = vpack.c.b16 %v3458, %v3452
        %v3663 = vpack.c.b16 %v3459, %v3453
        %v3664 = vpack.c.b16 %v3460, %v3454
        %v3665 = vpack.c.b16 %v3467, %v3461
        %v3666 = vpack.c.b16 %v3468, %v3462
        %v3667 = vpack.c.b16 %v3469, %v3463
        %v3668 = vpack.c.b16 %v3470, %v3464
        %v3669 = vpack.c.b16 %v3471, %v3465
        %v3670 = vpack.c.b16 %v3472, %v3466
        %v3671 = vpack.c.b16 %v3479, %v3473
        %v3672 = vpack.c.b16 %v3480, %v3474
        %v3673 = vpack.c.b16 %v3481, %v3475
        %v3674 = vpack.c.b16 %v3482, %v3476
        %v3675 = vpack.c.b16 %v3483, %v3477
        %v3676 = vpack.c.b16 %v3484, %v3478
        %3869 = vmatprep.subr.bf16.mxu0 %v3486
        %3870 = vmatpush1.bf16.msra.mxu0 %v3485
        %3871 = vmatprep.subr.bf16.mxu0 %v3492
        %3872 = vmatpush1.bf16.msra.mxu0 %v3491
        %3873 = vmatprep.subr.bf16.mxu0 %v3498
        %3874 = vmatpush1.bf16.msra.mxu0 %v3497
        %3875 = vmatprep.subr.bf16.mxu0 %v3504
        %3876 = vmatpush1.bf16.msra.mxu0 %v3503
        %3877 = vmatprep.subr.bf16.mxu0 %v3510
        %3878 = vmatpush1.bf16.msra.mxu0 %v3509
        %3879 = vmatprep.subr.bf16.mxu0 %v3516
        %3880 = vmatpush1.bf16.msra.mxu0 %v3515
        %3881 = vmatprep.subr.bf16.mxu0 %v3522
        %3882 = vmatpush1.bf16.msra.mxu0 %v3521
        %3883 = vmatprep.subr.bf16.mxu0 %v3528
        %3884 = vmatpush1.bf16.msra.mxu0 %v3527
        %3885 = vmatprep.subr.bf16.mxu0 %v3534
        %3886 = vmatpush1.bf16.msra.mxu0 %v3533
        %3887 = vmatprep.subr.bf16.mxu0 %v3540
        %3888 = vmatpush1.bf16.msra.mxu0 %v3539
        %3889 = vmatprep.subr.bf16.mxu0 %v3546
        %3890 = vmatpush1.bf16.msra.mxu0 %v3545
        %3891 = vmatprep.subr.bf16.mxu0 %v3552
        %3892 = vmatpush1.bf16.msra.mxu0 %v3551
        %3893 = vmatprep.subr.bf16.mxu0 %v3558
        %3894 = vmatpush1.bf16.msra.mxu0 %v3557
        %3895 = vmatprep.subr.bf16.mxu0 %v3564
        %3896 = vmatpush1.bf16.msra.mxu0 %v3563
        %3897 = vmatprep.subr.bf16.mxu0 %v3570
        %3898 = vmatpush1.bf16.msra.mxu0 %v3569
        %3899 = vmatprep.subr.bf16.mxu0 %v3576
        %3900 = vmatpush1.bf16.msra.mxu0 %v3575
        %3901 = vmatprep.mubr.bf16.mxu0 %v2678
        %3902 = vmatmul.mubr.bf16.gmra.mrb[0].mxu0 %v2677
        %v3903 = vpop.f32.mrb[0].mxu0
        %v3904 = vadd.f32 %v2882, %v3903
        %v3905 = vpop.f32.mrb[0].mxu0
        %v3906 = vadd.f32 %v2886, %v3905
        %v3907 = vpop.f32.mrb[0].mxu0
        %v3908 = vadd.f32 %v2882, %v3907
        %v3909 = vpop.f32.mrb[0].mxu0
        %v3910 = vadd.f32 %v2886, %v3909
        %3911 = vmatprep.mubr.bf16.mxu0 %v2682
        %3912 = vmatmul.mubr.bf16.gmra.mrb[0].mxu0 %v2681
        %v3913 = vpop.f32.mrb[0].mxu0
        %v3914 = vadd.f32 %v2882, %v3913
        %v3915 = vpop.f32.mrb[0].mxu0
        %v3916 = vadd.f32 %v2886, %v3915
        %v3917 = vpop.f32.mrb[0].mxu0
        %v3918 = vadd.f32 %v2882, %v3917
        %v3919 = vpop.f32.mrb[0].mxu0
        %v3920 = vadd.f32 %v2886, %v3919
        %3921 = vdwg.mxu0
        %3922 = vmatprep.subr.bf16.mxu0 %v3582
        %3923 = vmatpush1.bf16.msra.mxu0 %v3581
        %3924 = vmatprep.subr.bf16.mxu0 %v3588
        %3925 = vmatpush1.bf16.msra.mxu0 %v3587
        %3926 = vmatprep.subr.bf16.mxu0 %v3594
        %3927 = vmatpush1.bf16.msra.mxu0 %v3593
        %3928 = vmatprep.subr.bf16.mxu0 %v3600
        %3929 = vmatpush1.bf16.msra.mxu0 %v3599
        %3930 = vmatprep.subr.bf16.mxu0 %v3606
        %3931 = vmatpush1.bf16.msra.mxu0 %v3605
        %3932 = vmatprep.subr.bf16.mxu0 %v3612
        %3933 = vmatpush1.bf16.msra.mxu0 %v3611
        %3934 = vmatprep.subr.bf16.mxu0 %v3618
        %3935 = vmatpush1.bf16.msra.mxu0 %v3617
        %3936 = vmatprep.subr.bf16.mxu0 %v3624
        %3937 = vmatpush1.bf16.msra.mxu0 %v3623
        %3938 = vmatprep.subr.bf16.mxu0 %v3630
        %3939 = vmatpush1.bf16.msra.mxu0 %v3629
        %3940 = vmatprep.subr.bf16.mxu0 %v3636
        %3941 = vmatpush1.bf16.msra.mxu0 %v3635
        %3942 = vmatprep.subr.bf16.mxu0 %v3642
        %3943 = vmatpush1.bf16.msra.mxu0 %v3641
        %3944 = vmatprep.subr.bf16.mxu0 %v3648
        %3945 = vmatpush1.bf16.msra.mxu0 %v3647
        %3946 = vmatprep.subr.bf16.mxu0 %v3654
        %3947 = vmatpush1.bf16.msra.mxu0 %v3653
        %3948 = vmatprep.subr.bf16.mxu0 %v3660
        %3949 = vmatpush1.bf16.msra.mxu0 %v3659
        %3950 = vmatprep.subr.bf16.mxu0 %v3666
        %3951 = vmatpush1.bf16.msra.mxu0 %v3665
        %3952 = vmatprep.subr.bf16.mxu0 %v3672
        %3953 = vmatpush1.bf16.msra.mxu0 %v3671
        %3954 = vmatprep.mubr.bf16.mxu0 %v2680
        %3955 = vmatmul.mubr.bf16.gmra.mrb[0].mxu0 %v2679
        %v3956 = vpop.f32.mrb[0].mxu0
        %v3957 = vadd.f32 %v3904, %v3956
        %v3958 = vpop.f32.mrb[0].mxu0
        %v3959 = vadd.f32 %v3906, %v3958
        %v3960 = vpop.f32.mrb[0].mxu0
        %v3961 = vadd.f32 %v3908, %v3960
        %v3962 = vpop.f32.mrb[0].mxu0
        %v3963 = vadd.f32 %v3910, %v3962
        %3964 = vmatprep.mubr.bf16.mxu0 %v2684
        %3965 = vmatmul.mubr.bf16.gmra.mrb[0].mxu0 %v2683
        %v3966 = vpop.f32.mrb[0].mxu0
        %v3967 = vadd.f32 %v3914, %v3966
        %v3968 = vpop.f32.mrb[0].mxu0
        %v3969 = vadd.f32 %v3916, %v3968
        %v3970 = vpop.f32.mrb[0].mxu0
        %v3971 = vadd.f32 %v3918, %v3970
        %v3972 = vpop.f32.mrb[0].mxu0
        %v3973 = vadd.f32 %v3920, %v3972
        %3974 = vdwg.mxu0
        %3975 = vmatprep.subr.bf16.mxu0 %v3488
        %3976 = vmatpush1.bf16.msra.mxu0 %v3487
        %3977 = vmatprep.subr.bf16.mxu0 %v3494
        %3978 = vmatpush1.bf16.msra.mxu0 %v3493
        %3979 = vmatprep.subr.bf16.mxu0 %v3500
        %3980 = vmatpush1.bf16.msra.mxu0 %v3499
        %3981 = vmatprep.subr.bf16.mxu0 %v3506
        %3982 = vmatpush1.bf16.msra.mxu0 %v3505
        %3983 = vmatprep.subr.bf16.mxu0 %v3512
        %3984 = vmatpush1.bf16.msra.mxu0 %v3511
        %3985 = vmatprep.subr.bf16.mxu0 %v3518
        %3986 = vmatpush1.bf16.msra.mxu0 %v3517
        %3987 = vmatprep.subr.bf16.mxu0 %v3524
        %3988 = vmatpush1.bf16.msra.mxu0 %v3523
        %3989 = vmatprep.subr.bf16.mxu0 %v3530
        %3990 = vmatpush1.bf16.msra.mxu0 %v3529
        %3991 = vmatprep.subr.bf16.mxu0 %v3536
        %3992 = vmatpush1.bf16.msra.mxu0 %v3535
        %3993 = vmatprep.subr.bf16.mxu0 %v3542
        %3994 = vmatpush1.bf16.msra.mxu0 %v3541
        %3995 = vmatprep.subr.bf16.mxu0 %v3548
        %3996 = vmatpush1.bf16.msra.mxu0 %v3547
        %3997 = vmatprep.subr.bf16.mxu0 %v3554
        %3998 = vmatpush1.bf16.msra.mxu0 %v3553
        %3999 = vmatprep.subr.bf16.mxu0 %v3560
        %4000 = vmatpush1.bf16.msra.mxu0 %v3559
        %4001 = vmatprep.subr.bf16.mxu0 %v3566
        %4002 = vmatpush1.bf16.msra.mxu0 %v3565
        %4003 = vmatprep.subr.bf16.mxu0 %v3572
        %4004 = vmatpush1.bf16.msra.mxu0 %v3571
        %4005 = vmatprep.subr.bf16.mxu0 %v3578
        %4006 = vmatpush1.bf16.msra.mxu0 %v3577
        %4007 = vmatprep.mubr.bf16.mxu0 %v2678
        %4008 = vmatmul.mubr.bf16.gmra.mrb[0].mxu0 %v2677
        %v4009 = vpop.f32.mrb[0].mxu0
        %v4010 = vadd.f32 %v2890, %v4009
        %v4011 = vpop.f32.mrb[0].mxu0
        %v4012 = vadd.f32 %v2894, %v4011
        %v4013 = vpop.f32.mrb[0].mxu0
        %v4014 = vadd.f32 %v2890, %v4013
        %v4015 = vpop.f32.mrb[0].mxu0
        %v4016 = vadd.f32 %v2894, %v4015
        %4017 = vmatprep.mubr.bf16.mxu0 %v2682
        %4018 = vmatmul.mubr.bf16.gmra.mrb[0].mxu0 %v2681
        %v4019 = vpop.f32.mrb[0].mxu0
        %v4020 = vadd.f32 %v2890, %v4019
        %v4021 = vpop.f32.mrb[0].mxu0
        %v4022 = vadd.f32 %v2894, %v4021
        %v4023 = vpop.f32.mrb[0].mxu0
        %v4024 = vadd.f32 %v2890, %v4023
        %v4025 = vpop.f32.mrb[0].mxu0
        %v4026 = vadd.f32 %v2894, %v4025
        %4027 = vdwg.mxu0
        %4028 = vmatprep.subr.bf16.mxu0 %v3584
        %4029 = vmatpush1.bf16.msra.mxu0 %v3583
        %4030 = vmatprep.subr.bf16.mxu0 %v3590
        %4031 = vmatpush1.bf16.msra.mxu0 %v3589
        %4032 = vmatprep.subr.bf16.mxu0 %v3596
        %4033 = vmatpush1.bf16.msra.mxu0 %v3595
        %4034 = vmatprep.subr.bf16.mxu0 %v3602
        %4035 = vmatpush1.bf16.msra.mxu0 %v3601
        %4036 = vmatprep.subr.bf16.mxu0 %v3608
        %4037 = vmatpush1.bf16.msra.mxu0 %v3607
        %4038 = vmatprep.subr.bf16.mxu0 %v3614
        %4039 = vmatpush1.bf16.msra.mxu0 %v3613
        %4040 = vmatprep.subr.bf16.mxu0 %v3620
        %4041 = vmatpush1.bf16.msra.mxu0 %v3619
        %4042 = vmatprep.subr.bf16.mxu0 %v3626
        %4043 = vmatpush1.bf16.msra.mxu0 %v3625
        %4044 = vmatprep.subr.bf16.mxu0 %v3632
        %4045 = vmatpush1.bf16.msra.mxu0 %v3631
        %4046 = vmatprep.subr.bf16.mxu0 %v3638
        %4047 = vmatpush1.bf16.msra.mxu0 %v3637
        %4048 = vmatprep.subr.bf16.mxu0 %v3644
        %4049 = vmatpush1.bf16.msra.mxu0 %v3643
        %4050 = vmatprep.subr.bf16.mxu0 %v3650
        %4051 = vmatpush1.bf16.msra.mxu0 %v3649
        %4052 = vmatprep.subr.bf16.mxu0 %v3656
        %4053 = vmatpush1.bf16.msra.mxu0 %v3655
        %4054 = vmatprep.subr.bf16.mxu0 %v3662
        %4055 = vmatpush1.bf16.msra.mxu0 %v3661
        %4056 = vmatprep.subr.bf16.mxu0 %v3668
        %4057 = vmatpush1.bf16.msra.mxu0 %v3667
        %4058 = vmatprep.subr.bf16.mxu0 %v3674
        %4059 = vmatpush1.bf16.msra.mxu0 %v3673
        %4060 = vmatprep.mubr.bf16.mxu0 %v2680
        %4061 = vmatmul.mubr.bf16.gmra.mrb[0].mxu0 %v2679
        %v4062 = vpop.f32.mrb[0].mxu0
        %v4063 = vadd.f32 %v4010, %v4062
        %v4064 = vpop.f32.mrb[0].mxu0
        %v4065 = vadd.f32 %v4012, %v4064
        %v4066 = vpop.f32.mrb[0].mxu0
        %v4067 = vadd.f32 %v4014, %v4066
        %v4068 = vpop.f32.mrb[0].mxu0
        %v4069 = vadd.f32 %v4016, %v4068
        %4070 = vmatprep.mubr.bf16.mxu0 %v2684
        %4071 = vmatmul.mubr.bf16.gmra.mrb[0].mxu0 %v2683
        %v4072 = vpop.f32.mrb[0].mxu0
        %v4073 = vadd.f32 %v4020, %v4072
        %v4074 = vpop.f32.mrb[0].mxu0
        %v4075 = vadd.f32 %v4022, %v4074
        %v4076 = vpop.f32.mrb[0].mxu0
        %v4077 = vadd.f32 %v4024, %v4076
        %v4078 = vpop.f32.mrb[0].mxu0
        %v4079 = vadd.f32 %v4026, %v4078
        %4080 = vdwg.mxu0
        %4081 = vmatprep.subr.bf16.mxu0 %v3490
        %4082 = vmatpush1.bf16.msra.mxu0 %v3489
        %4083 = vmatprep.subr.bf16.mxu0 %v3496
        %4084 = vmatpush1.bf16.msra.mxu0 %v3495
        %4085 = vmatprep.subr.bf16.mxu0 %v3502
        %4086 = vmatpush1.bf16.msra.mxu0 %v3501
        %4087 = vmatprep.subr.bf16.mxu0 %v3508
        %4088 = vmatpush1.bf16.msra.mxu0 %v3507
        %4089 = vmatprep.subr.bf16.mxu0 %v3514
        %4090 = vmatpush1.bf16.msra.mxu0 %v3513
        %4091 = vmatprep.subr.bf16.mxu0 %v3520
        %4092 = vmatpush1.bf16.msra.mxu0 %v3519
        %4093 = vmatprep.subr.bf16.mxu0 %v3526
        %4094 = vmatpush1.bf16.msra.mxu0 %v3525
        %4095 = vmatprep.subr.bf16.mxu0 %v3532
        %4096 = vmatpush1.bf16.msra.mxu0 %v3531
        %4097 = vmatprep.subr.bf16.mxu0 %v3538
        %4098 = vmatpush1.bf16.msra.mxu0 %v3537
        %4099 = vmatprep.subr.bf16.mxu0 %v3544
        %4100 = vmatpush1.bf16.msra.mxu0 %v3543
        %4101 = vmatprep.subr.bf16.mxu0 %v3550
        %4102 = vmatpush1.bf16.msra.mxu0 %v3549
        %4103 = vmatprep.subr.bf16.mxu0 %v3556
        %4104 = vmatpush1.bf16.msra.mxu0 %v3555
        %4105 = vmatprep.subr.bf16.mxu0 %v3562
        %4106 = vmatpush1.bf16.msra.mxu0 %v3561
        %4107 = vmatprep.subr.bf16.mxu0 %v3568
        %4108 = vmatpush1.bf16.msra.mxu0 %v3567
        %4109 = vmatprep.subr.bf16.mxu0 %v3574
        %4110 = vmatpush1.bf16.msra.mxu0 %v3573
        %4111 = vmatprep.subr.bf16.mxu0 %v3580
        %4112 = vmatpush1.bf16.msra.mxu0 %v3579
        %4113 = vmatprep.mubr.bf16.mxu0 %v2678
        %4114 = vmatmul.mubr.bf16.gmra.mrb[0].mxu0 %v2677
        %v4115 = vpop.f32.mrb[0].mxu0
        %v4116 = vadd.f32 %v2898, %v4115
        %v4117 = vpop.f32.mrb[0].mxu0
        %v4118 = vadd.f32 %v2902, %v4117
        %v4119 = vpop.f32.mrb[0].mxu0
        %v4120 = vadd.f32 %v2898, %v4119
        %v4121 = vpop.f32.mrb[0].mxu0
        %v4122 = vadd.f32 %v2902, %v4121
        %4123 = vmatprep.mubr.bf16.mxu0 %v2682
        %4124 = vmatmul.mubr.bf16.gmra.mrb[0].mxu0 %v2681
        %v4125 = vpop.f32.mrb[0].mxu0
        %v4126 = vadd.f32 %v2898, %v4125
        %v4127 = vpop.f32.mrb[0].mxu0
        %v4128 = vadd.f32 %v2902, %v4127
        %v4129 = vpop.f32.mrb[0].mxu0
        %v4130 = vadd.f32 %v2898, %v4129
        %v4131 = vpop.f32.mrb[0].mxu0
        %v4132 = vadd.f32 %v2902, %v4131
        %4133 = vdwg.mxu0
        %4134 = vmatprep.subr.bf16.mxu0 %v3586
        %4135 = vmatpush1.bf16.msra.mxu0 %v3585
        %4136 = vmatprep.subr.bf16.mxu0 %v3592
        %4137 = vmatpush1.bf16.msra.mxu0 %v3591
        %4138 = vmatprep.subr.bf16.mxu0 %v3598
        %4139 = vmatpush1.bf16.msra.mxu0 %v3597
        %4140 = vmatprep.subr.bf16.mxu0 %v3604
        %4141 = vmatpush1.bf16.msra.mxu0 %v3603
        %4142 = vmatprep.subr.bf16.mxu0 %v3610
        %4143 = vmatpush1.bf16.msra.mxu0 %v3609
        %4144 = vmatprep.subr.bf16.mxu0 %v3616
        %4145 = vmatpush1.bf16.msra.mxu0 %v3615
        %4146 = vmatprep.subr.bf16.mxu0 %v3622
        %4147 = vmatpush1.bf16.msra.mxu0 %v3621
        %4148 = vmatprep.subr.bf16.mxu0 %v3628
        %4149 = vmatpush1.bf16.msra.mxu0 %v3627
        %4150 = vmatprep.subr.bf16.mxu0 %v3634
        %4151 = vmatpush1.bf16.msra.mxu0 %v3633
        %4152 = vmatprep.subr.bf16.mxu0 %v3640
        %4153 = vmatpush1.bf16.msra.mxu0 %v3639
        %4154 = vmatprep.subr.bf16.mxu0 %v3646
        %4155 = vmatpush1.bf16.msra.mxu0 %v3645
        %4156 = vmatprep.subr.bf16.mxu0 %v3652
        %4157 = vmatpush1.bf16.msra.mxu0 %v3651
        %4158 = vmatprep.subr.bf16.mxu0 %v3658
        %4159 = vmatpush1.bf16.msra.mxu0 %v3657
        %4160 = vmatprep.subr.bf16.mxu0 %v3664
        %4161 = vmatpush1.bf16.msra.mxu0 %v3663
        %4162 = vmatprep.subr.bf16.mxu0 %v3670
        %4163 = vmatpush1.bf16.msra.mxu0 %v3669
        %4164 = vmatprep.subr.bf16.mxu0 %v3676
        %4165 = vmatpush1.bf16.msra.mxu0 %v3675
        %4166 = vmatprep.mubr.bf16.mxu0 %v2680
        %4167 = vmatmul.mubr.bf16.gmra.mrb[0].mxu0 %v2679
        %v4168 = vpop.f32.mrb[0].mxu0
        %v4169 = vadd.f32 %v4116, %v4168
        %v4170 = vpop.f32.mrb[0].mxu0
        %v4171 = vadd.f32 %v4118, %v4170
        %v4172 = vpop.f32.mrb[0].mxu0
        %v4173 = vadd.f32 %v4120, %v4172
        %v4174 = vpop.f32.mrb[0].mxu0
        %v4175 = vadd.f32 %v4122, %v4174
        %4176 = vmatprep.mubr.bf16.mxu0 %v2684
        %4177 = vmatmul.mubr.bf16.gmra.mrb[0].mxu0 %v2683
        %v4178 = vpop.f32.mrb[0].mxu0
        %v4179 = vadd.f32 %v4126, %v4178
        %v4180 = vpop.f32.mrb[0].mxu0
        %v4181 = vadd.f32 %v4128, %v4180
        %v4182 = vpop.f32.mrb[0].mxu0
        %v4183 = vadd.f32 %v4130, %v4182
        %v4184 = vpop.f32.mrb[0].mxu0
        %v4185 = vadd.f32 %v4132, %v4184
        %4186 = vdwg.mxu0
        %4187 = vst [vmem:[%s422] sm:$0xff] %v3957
        %4188 = vst [vmem:[%s422 + $0x8] sm:$0xff] %v3959
        %4189 = vst [vmem:[%s422 + $0x10] sm:$0xff] %v4063
        %4190 = vst [vmem:[%s422 + $0x18] sm:$0xff] %v4065
        %4191 = vst [vmem:[%s422 + $0x20] sm:$0xff] %v4169
        %4192 = vst [vmem:[%s422 + $0x28] sm:$0xff] %v4171
        %4193 = vst [vmem:[%s422 + $0x30] sm:$0xff] %v3961
        %4194 = vst [vmem:[%s422 + $0x38] sm:$0xff] %v3963
        %4195 = vst [vmem:[%s422 + $0x40] sm:$0xff] %v4067
        %4196 = vst [vmem:[%s422 + $0x48] sm:$0xff] %v4069
        %4197 = vst [vmem:[%s422 + $0x50] sm:$0xff] %v4173
        %4198 = vst [vmem:[%s422 + $0x58] sm:$0xff] %v4175
        %4199 = vst [vmem:[%s422 + $0x60] sm:$0xff] %v3967
        %4200 = vst [vmem:[%s422 + $0x68] sm:$0xff] %v3969
        %4201 = vst [vmem:[%s422 + $0x70] sm:$0xff] %v4073
        %4202 = vst [vmem:[%s422 + $0x78] sm:$0xff] %v4075
        %4203 = vst [vmem:[%s422 + $0x80] sm:$0xff] %v4179
        %4204 = vst [vmem:[%s422 + $0x88] sm:$0xff] %v4181
        %4205 = vst [vmem:[%s422 + $0x90] sm:$0xff] %v3971
        %4206 = vst [vmem:[%s422 + $0x98] sm:$0xff] %v3973
        %4207 = vst [vmem:[%s422 + $0xa0] sm:$0xff] %v4077
        %4208 = vst [vmem:[%s422 + $0xa8] sm:$0xff] %v4079
        %4209 = vst [vmem:[%s422 + $0xb0] sm:$0xff] %v4183
        %4210 = vst [vmem:[%s422 + $0xb8] sm:$0xff] %v4185
        %s4211 = sand.u32 %s231, 1
        %s4212 = scalar_lea.sflag [#allocation4], %s4211
        %s4213 = sand.u32 %s231, 1
        %s4214 = smul.addr %s4213, 192
        %s4215 = scalar_lea.vmem [#allocation13], %s4214
        // Predicated region
        $region81: #{_forward_impl.1} parent=55 // pred_check
          %p4216 = pneg %p241
        $region82: #{_forward_impl.1} parent=55 // pred_check_branch
          %4218 = sbr.rel (%p4216) target = $region84
        $region83: #{_forward_impl.1} parent=55 // pred_region
          %s4219 = smul.u32 4, %s29
          %s4221 = ssub.s32 3072, 3072
          %4222 = vsyncadd %s4212, %s4221
          %s4223 = smul.addr %s4219, 6
          %s4224 = smul.addr %s4223, 128
          %s4225 = scalar_lea.hbm %s9, %s4224
          %s4226 = sshll.u32 %s4215, 4
          %s4227 = int_to_ptr.vmem [resolvable:$true] %s4226
          %4232 = dma.vmem_to_hbm [thread:$0]  %s4227, 3072, %s4225, %s4212, 768, 768, 48
        $region84: #{_forward_impl.1} parent=55 // pred_fallthru
          _
      $region56: #{_forward_impl.1} parent=5 // pred_fallthru
        _
      %p4233 = scmp.le.s32.totalorder 2, %s24
      // Predicated region
      $region85: #{_forward_impl.1} parent=5 // pred_check
        %p4234 = pneg %p4233
      $region86: #{_forward_impl.1} parent=5 // pred_check_branch
        %4236 = sbr.rel (%p4234) target = $region88
      $region87: #{_forward_impl.1} parent=5 // pred_region
        %s4237 = ssub.s32 %s24, 2
        // Predicated region
        $region89: #{_forward_impl.1} parent=87 // pred_check
          %p4238 = pneg %p247
        $region90: #{_forward_impl.1} parent=87 // pred_check_branch
          %4240 = sbr.rel (%p4238) target = $region92
        $region91: #{_forward_impl.1} parent=87 // pred_region
          %s4241 = sand.u32 %s232, 1
          %s4242 = scalar_lea.sflag [#allocation4], %s4241
          %s4243 = sand.u32 %s232, 1
          %s4244 = smul.addr %s4243, 192
          %s4245 = scalar_lea.vmem [#allocation13], %s4244
          %4246 = dma.done %s4242, 3072
        $region92: #{_forward_impl.1} parent=87 // pred_fallthru
          _
      $region88: #{_forward_impl.1} parent=5 // pred_fallthru
        _
    $region6: #{_forward_impl.1} parent=1 // loop_footer
      %s28 = sadd.s32 1, %s24
    $region7: #{_forward_impl.1} parent=1 // loop_footer_branch
      %23 = sbr.rel target = $region3
    $region8: #{_forward_impl.1} parent=1 // loop_exit
      _
    %4247 = vsyncpa [#allocation3], 1
    %s4248 = scalar_lea.sflag [#allocation3], 1
    %4249 = vsyncpa %s4248, 1
    %4250 = vsyncpa [#allocation6], 1
    %4251 = vsyncpa [#allocation9], 1
    %4252 = vsyncpa [#allocation12], 1
    %4253 = vsyncpa [#allocation4], 1
    %s4254 = scalar_lea.sflag [#allocation4], 1
    %4255 = vsyncpa %s4254, 1

</llo_original>
